<compile_context>
chip_gen: v6e
topology: v6e:2x2x1
jax: 0.10.0
libtpu: 0.0.40
codegen_flags: <defaults>
</compile_context>

<pallas_src>
import functools
import math

import jax
import jax.numpy as jnp
from jax import lax
from jax.experimental import pallas as pl
from jax.experimental.pallas import tpu as pltpu

# ---------------- small synthetic config (mirrors cfg dict in the module) ---
VOCAB = 128        # cfg['model']['quantizer_kwargs']['embedding_num']
EMBED = 32         # cfg['model']['stage2_model_kwargs']['stage2_embed_dim']
SEQ_LEN = 16       # cfg['model']['stage2_model_kwargs']['sequence_length']
N_LAYERS = 2       # fast_transformer_kwargs['n_layers']
N_HEADS = 4        # fast_transformer_kwargs['n_heads']
D_FF = 4 * EMBED   # fast_transformers default feed_forward_dimensions
LN_EPS = 1e-5
BATCH = 2

_MM_DTYPE = jnp.bfloat16   # matmul operand dtype (f32 accumulation everywhere)


def _layernorm(x, w, b):
    mu = jnp.mean(x, axis=-1, keepdims=True)
    xc = x - mu
    var = jnp.mean(xc * xc, axis=-1, keepdims=True)
    return xc * lax.rsqrt(var + LN_EPS) * w + b


def _mm(a, b):
    """a @ b, bf16 operands, f32 accumulate."""
    return jnp.dot(a.astype(_MM_DTYPE), b.astype(_MM_DTYPE),
                   preferred_element_type=jnp.float32)


def _mm_t(a, b):
    """a @ b.T (contract last dims of both), bf16 operands, f32 accumulate."""
    return lax.dot_general(a.astype(_MM_DTYPE), b.astype(_MM_DTYPE),
                           (((1,), (1,)), ((), ())),
                           preferred_element_type=jnp.float32)


# ---------------------------------------------------------------------------
# Fused forward kernel: embed -> N layers -> final LN -> tied decoder
# ---------------------------------------------------------------------------
def _fused_forward_kernel(idx_ref, zemb_ref, pos_ref, zstart_ref,
                          bias_ref, hmask_ref,
                          wq_ref, bq_ref, wk_ref, bk_ref, wv_ref, bv_ref,
                          wo_ref, bo_ref, ln1w_ref, ln1b_ref,
                          w1_ref, b1_ref, w2_ref, b2_ref, ln2w_ref, ln2b_ref,
                          lnfw_ref, lnfb_ref, zbias_ref,
                          o_ref, *, n_heads, n_layers):
    zemb = zemb_ref[...]                                 # (V, D) f32
    V, _ = zemb.shape
    R = idx_ref.shape[0]                                 # rows this grid step

    # ---- token embedding via one-hot matmul (start rows have idx == V) -----
    idx = idx_ref[...]                                   # (R, 1) int32
    onehot = (lax.broadcasted_iota(jnp.int32, (R, V), 1) == idx)
    emb = _mm(onehot, zemb)                              # (R, D); zero at starts
    start_mask = (idx == V).astype(jnp.float32)          # (R, 1)
    x = emb + start_mask * zstart_ref[...] + pos_ref[...]
    # self.drop: dropout is identity in eval mode
    # TODO(synk): training-mode dropout (embed_drop_p / attention dropout) not implemented.

    bias = bias_ref[...]                                 # (R, H*R) additive 0/-1e30
    hmask = hmask_ref[...]                               # (H*R, D) 0/1 head mask

    # ---- transformer layers (post-norm, full softmax attention, ReLU FFN) --
    for l in range(n_layers):
        # 1/sqrt(dh) softmax scale is pre-folded into wq/bq (wrapper side).
        q = _mm(x, wq_ref[l]) + bq_ref[l]
        k = _mm(x, wk_ref[l]) + bk_ref[l]
        v = _mm(x, wv_ref[l]) + bv_ref[l]

        # Heads folded into the lane axis: row h*R + j of k_rep / v_rep holds
        # key/value j restricted to head h's feature slice (block-diagonal).
        k_rep = jnp.concatenate([k] * n_heads, axis=0) * hmask     # (H*R, D)
        v_rep = jnp.concatenate([v] * n_heads, axis=0) * hmask     # (H*R, D)

        # All-head scores in one lane-dense matmul, then additive causal bias.
        s = _mm_t(q, k_rep) + bias                                 # (R, H*R)
        # Per-row max over ALL heads: softmax is shift-invariant per head, so
        # a shared per-row constant is exact (and numerically safe here).
        m = jnp.max(s, axis=-1, keepdims=True)
        p = jnp.exp(s - m)
        ctx_un = _mm(p, v_rep)                                     # (R, D)
        denom = _mm(p, hmask)                                      # (R, D) per-head sums
        ctx = ctx_un * pl.reciprocal(denom, approx=False)          # exact normalize
        attn = _mm(ctx, wo_ref[l]) + bo_ref[l]                     # single wo matmul

        xn = _layernorm(x + attn, ln1w_ref[l], ln1b_ref[l])
        h1 = jnp.maximum(_mm(xn, w1_ref[l]) + b1_ref[l], 0.0)
        y = _mm(h1, w2_ref[l]) + b2_ref[l]
        x = _layernorm(xn + y, ln2w_ref[l], ln2b_ref[l])

    # ---- final encoder LayerNorm + tied decoder (z_emb untransposed) -------
    xn = _layernorm(x, lnfw_ref[...], lnfb_ref[...])
    o_ref[...] = _mm_t(xn, zemb) + zbias_ref[...]        # (R, V) lane-dense (V=128)


# ---------------------------------------------------------------------------
# pallas_call wrapper
# ---------------------------------------------------------------------------
def _const_spec(shape):
    nd = len(shape)
    return pl.BlockSpec(tuple(shape), lambda i, _nd=nd: (0,) * _nd)


def fast_transformer_forward(z_idx, params):
    B, L_in = z_idx.shape
    L = L_in + 1
    assert L <= SEQ_LEN, "Cannot forward  Sequence Length Error"
    V, D = params["z_emb"].shape
    dh = D // N_HEADS
    scale = 1.0 / math.sqrt(dh)

    # Sequences per grid step.  BB=2 keeps the folded-head score tile exactly
    # lane-dense (N_HEADS * BB * L = 128); larger batches get more grid steps
    # on a "parallel" axis so v7x's second TensorCore is used.
    BB = 2 if B % 2 == 0 else B
    num_blocks = B // BB
    R = BB * L
    HR = N_HEADS * R

    # start positions encoded as token index == V (matches no one-hot lane)
    idx_full = jnp.concatenate(
        [jnp.full((B, 1), V, jnp.int32), z_idx.astype(jnp.int32)], axis=1
    ).reshape(B * L, 1)

    # positional embeddings pre-tiled for one batch block (wrapper-side)
    pos_block = jnp.tile(params["pos_emb"][:L], (BB, 1))               # (R, D)

    # additive block-diagonal causal mask bias, replicated across heads
    r = jnp.arange(R)
    same_seq = (r[:, None] // L) == (r[None, :] // L)
    causal = (r[None, :] % L) <= (r[:, None] % L)
    bias_block = jnp.where(same_seq & causal, 0.0, -1e30).astype(jnp.float32)
    attn_bias = jnp.tile(bias_block, (1, N_HEADS))                     # (R, HR)

    # head-membership mask: row h*R + j belongs to head h; column d to d // dh
    head_mask = ((jnp.arange(HR)[:, None] // R) ==
                 (jnp.arange(D)[None, :] // dh)).astype(jnp.float32)   # (HR, D)

    # fold the 1/sqrt(dh) attention scale into the query projection
    wq_s = params["wq"] * scale
    bq_s = params["bq"] * scale

    weights = [params["z_emb"], pos_block, params["z_start"], attn_bias,
               head_mask,
               wq_s, bq_s, params["wk"], params["bk"],
               params["wv"], params["bv"], params["wo"], params["bo"],
               params["ln1w"], params["ln1b"],
               params["w1"], params["b1"], params["w2"], params["b2"],
               params["ln2w"], params["ln2b"],
               params["ln_f_w"], params["ln_f_b"], params["z_bias"]]

    in_specs = ([pl.BlockSpec((R, 1), lambda i: (i, 0))]
                + [_const_spec(w.shape) for w in weights])

    logits = pl.pallas_call(
        functools.partial(_fused_forward_kernel,
                          n_heads=N_HEADS, n_layers=N_LAYERS),
        out_shape=jax.ShapeDtypeStruct((B * L, V), jnp.float32),
        grid=(num_blocks,),
        in_specs=in_specs,
        out_specs=pl.BlockSpec((R, V), lambda i: (i, 0)),
        compiler_params=pltpu.CompilerParams(
            dimension_semantics=("parallel",)),
    )(idx_full, *weights)
    return logits.reshape(B, L, V)


# ---------------------------------------------------------------------------
# parameters (deterministic synthetic init, matching _init_weights semantics)
# layer weights are stacked on a leading (N_LAYERS, ...) axis
# ---------------------------------------------------------------------------
def init_params(key):
    def normal(k, shape):
        return jax.random.normal(k, shape, jnp.float32) * 0.02

    keys = iter(jax.random.split(key, 32))
    return {
        "z_emb": normal(next(keys), (VOCAB, EMBED)),
        "pos_emb": normal(next(keys), (SEQ_LEN, EMBED)),
        "z_start": normal(next(keys), (1, EMBED)),
        "z_bias": jnp.zeros((1, VOCAB), jnp.float32),
        "ln_f_w": jnp.ones((1, EMBED), jnp.float32),
        "ln_f_b": jnp.zeros((1, EMBED), jnp.float32),
        "wq": normal(next(keys), (N_LAYERS, EMBED, EMBED)),
        "bq": jnp.zeros((N_LAYERS, 1, EMBED), jnp.float32),
        "wk": normal(next(keys), (N_LAYERS, EMBED, EMBED)),
        "bk": jnp.zeros((N_LAYERS, 1, EMBED), jnp.float32),
        "wv": normal(next(keys), (N_LAYERS, EMBED, EMBED)),
        "bv": jnp.zeros((N_LAYERS, 1, EMBED), jnp.float32),
        "wo": normal(next(keys), (N_LAYERS, EMBED, EMBED)),
        "bo": jnp.zeros((N_LAYERS, 1, EMBED), jnp.float32),
        "ln1w": jnp.ones((N_LAYERS, 1, EMBED), jnp.float32),
        "ln1b": jnp.zeros((N_LAYERS, 1, EMBED), jnp.float32),
        "w1": normal(next(keys), (N_LAYERS, EMBED, D_FF)),
        "b1": jnp.zeros((N_LAYERS, 1, D_FF), jnp.float32),
        "w2": normal(next(keys), (N_LAYERS, D_FF, EMBED)),
        "b2": jnp.zeros((N_LAYERS, 1, EMBED), jnp.float32),
        "ln2w": jnp.ones((N_LAYERS, 1, EMBED), jnp.float32),
        "ln2b": jnp.zeros((N_LAYERS, 1, EMBED), jnp.float32),
    }


if __name__ == "__main__":
    key = jax.random.PRNGKey(0)
    pkey, dkey = jax.random.split(key)
    params = init_params(pkey)

    # z_idx: (B, SEQ_LEN - 1) int tokens in [0, VOCAB)
    z_idx = jax.random.randint(dkey, (BATCH, SEQ_LEN - 1), 0, VOCAB,
                               dtype=jnp.int32)

    logits = jax.jit(fast_transformer_forward)(z_idx, params)
    jax.block_until_ready(logits)
    assert logits.shape == (BATCH, SEQ_LEN, VOCAB)
    assert logits.dtype == jnp.float32
    assert bool(jnp.all(jnp.isfinite(logits)))
    print("KERNEL_OK")
</pallas_src>

<mosaic_0001>
module attributes {stable_mosaic.version = 11 : i64} {
  func.func @_fused_forward_kernel(%arg0: i32, %arg1: memref<32x1xi32, #tpu.memory_space<vmem>>, %arg2: memref<128x32xf32, #tpu.memory_space<vmem>>, %arg3: memref<32x32xf32, #tpu.memory_space<vmem>>, %arg4: memref<1x32xf32, #tpu.memory_space<vmem>>, %arg5: memref<32x128xf32, #tpu.memory_space<vmem>>, %arg6: memref<128x32xf32, #tpu.memory_space<vmem>>, %arg7: memref<2x32x32xf32, #tpu.memory_space<vmem>>, %arg8: memref<2x1x32xf32, #tpu.memory_space<vmem>>, %arg9: memref<2x32x32xf32, #tpu.memory_space<vmem>>, %arg10: memref<2x1x32xf32, #tpu.memory_space<vmem>>, %arg11: memref<2x32x32xf32, #tpu.memory_space<vmem>>, %arg12: memref<2x1x32xf32, #tpu.memory_space<vmem>>, %arg13: memref<2x32x32xf32, #tpu.memory_space<vmem>>, %arg14: memref<2x1x32xf32, #tpu.memory_space<vmem>>, %arg15: memref<2x1x32xf32, #tpu.memory_space<vmem>>, %arg16: memref<2x1x32xf32, #tpu.memory_space<vmem>>, %arg17: memref<2x32x128xf32, #tpu.memory_space<vmem>>, %arg18: memref<2x1x128xf32, #tpu.memory_space<vmem>>, %arg19: memref<2x128x32xf32, #tpu.memory_space<vmem>>, %arg20: memref<2x1x32xf32, #tpu.memory_space<vmem>>, %arg21: memref<2x1x32xf32, #tpu.memory_space<vmem>>, %arg22: memref<2x1x32xf32, #tpu.memory_space<vmem>>, %arg23: memref<1x32xf32, #tpu.memory_space<vmem>>, %arg24: memref<1x32xf32, #tpu.memory_space<vmem>>, %arg25: memref<1x128xf32, #tpu.memory_space<vmem>>, %arg26: memref<32x128xf32, #tpu.memory_space<vmem>>) attributes {dimension_semantics = [#tpu.dimension_semantics<parallel>], iteration_bounds = array<i64: 1>, scalar_prefetch = 0 : i64, scratch_operands = 0 : i64, tpu.core_type = #tpu.core_type<tc>, window_params = [{transform_indices = @transform_0, window_bounds = array<i64: 32, 1>}, {pipeline_mode = #tpu.pipeline_mode<synchronous>, transform_indices = @transform_1, window_bounds = array<i64: 128, 32>}, {pipeline_mode = #tpu.pipeline_mode<synchronous>, transform_indices = @transform_2, window_bounds = array<i64: 32, 32>}, {pipeline_mode = #tpu.pipeline_mode<synchronous>, transform_indices = @transform_3, window_bounds = array<i64: 1, 32>}, {pipeline_mode = #tpu.pipeline_mode<synchronous>, transform_indices = @transform_4, window_bounds = array<i64: 32, 128>}, {pipeline_mode = #tpu.pipeline_mode<synchronous>, transform_indices = @transform_5, window_bounds = array<i64: 128, 32>}, {pipeline_mode = #tpu.pipeline_mode<synchronous>, transform_indices = @transform_6, window_bounds = array<i64: 2, 32, 32>}, {pipeline_mode = #tpu.pipeline_mode<synchronous>, transform_indices = @transform_7, window_bounds = array<i64: 2, 1, 32>}, {pipeline_mode = #tpu.pipeline_mode<synchronous>, transform_indices = @transform_8, window_bounds = array<i64: 2, 32, 32>}, {pipeline_mode = #tpu.pipeline_mode<synchronous>, transform_indices = @transform_9, window_bounds = array<i64: 2, 1, 32>}, {pipeline_mode = #tpu.pipeline_mode<synchronous>, transform_indices = @transform_10, window_bounds = array<i64: 2, 32, 32>}, {pipeline_mode = #tpu.pipeline_mode<synchronous>, transform_indices = @transform_11, window_bounds = array<i64: 2, 1, 32>}, {pipeline_mode = #tpu.pipeline_mode<synchronous>, transform_indices = @transform_12, window_bounds = array<i64: 2, 32, 32>}, {pipeline_mode = #tpu.pipeline_mode<synchronous>, transform_indices = @transform_13, window_bounds = array<i64: 2, 1, 32>}, {pipeline_mode = #tpu.pipeline_mode<synchronous>, transform_indices = @transform_14, window_bounds = array<i64: 2, 1, 32>}, {pipeline_mode = #tpu.pipeline_mode<synchronous>, transform_indices = @transform_15, window_bounds = array<i64: 2, 1, 32>}, {pipeline_mode = #tpu.pipeline_mode<synchronous>, transform_indices = @transform_16, window_bounds = array<i64: 2, 32, 128>}, {pipeline_mode = #tpu.pipeline_mode<synchronous>, transform_indices = @transform_17, window_bounds = array<i64: 2, 1, 128>}, {pipeline_mode = #tpu.pipeline_mode<synchronous>, transform_indices = @transform_18, window_bounds = array<i64: 2, 128, 32>}, {pipeline_mode = #tpu.pipeline_mode<synchronous>, transform_indices = @transform_19, window_bounds = array<i64: 2, 1, 32>}, {pipeline_mode = #tpu.pipeline_mode<synchronous>, transform_indices = @transform_20, window_bounds = array<i64: 2, 1, 32>}, {pipeline_mode = #tpu.pipeline_mode<synchronous>, transform_indices = @transform_21, window_bounds = array<i64: 2, 1, 32>}, {pipeline_mode = #tpu.pipeline_mode<synchronous>, transform_indices = @transform_22, window_bounds = array<i64: 1, 32>}, {pipeline_mode = #tpu.pipeline_mode<synchronous>, transform_indices = @transform_23, window_bounds = array<i64: 1, 32>}, {pipeline_mode = #tpu.pipeline_mode<synchronous>, transform_indices = @transform_24, window_bounds = array<i64: 1, 128>}, {transform_indices = @transform_25, window_bounds = array<i64: 32, 128>}]} {
    %c0 = arith.constant 0 : index
    %c0_0 = arith.constant 0 : index
    %0 = vector.load %arg2[%c0, %c0_0] : memref<128x32xf32, #tpu.memory_space<vmem>>, vector<128x32xf32>
    %c0_1 = arith.constant 0 : index
    %c0_2 = arith.constant 0 : index
    %1 = vector.load %arg1[%c0_1, %c0_2] : memref<32x1xi32, #tpu.memory_space<vmem>>, vector<32x1xi32>
    %2 = tpu.iota {dimensions = array<i32: 1>} : vector<32x128xi32>
    %3 = vector.broadcast %1 : vector<32x1xi32> to vector<32x128xi32>
    %4 = arith.cmpi eq, %2, %3 : vector<32x128xi32>
    %5 = arith.extui %4 : vector<32x128xi1> to vector<32x128xi32>
    %6 = arith.sitofp %5 : vector<32x128xi32> to vector<32x128xf32>
    %7 = arith.truncf %6 : vector<32x128xf32> to vector<32x128xbf16>
    %8 = arith.truncf %0 : vector<128x32xf32> to vector<128x32xbf16>
    %cst = arith.constant dense<0.000000e+00> : vector<32x32xf32>
    %9 = tpu.matmul %7, %8, %cst {dimension_numbers = #tpu.dot_dimension_numbers<[1], [0], [0], [1], [0, 0, 1, 1], [], []>} : vector<32x128xbf16>, vector<128x32xbf16>, vector<32x32xf32> -> vector<32x32xf32>
    %c128_i32 = arith.constant 128 : i32
    %10 = vector.broadcast %c128_i32 : i32 to vector<32x1xi32>
    %11 = arith.cmpi eq, %1, %10 : vector<32x1xi32>
    %12 = arith.extui %11 : vector<32x1xi1> to vector<32x1xi32>
    %13 = arith.sitofp %12 : vector<32x1xi32> to vector<32x1xf32>
    %c0_3 = arith.constant 0 : index
    %c0_4 = arith.constant 0 : index
    %14 = vector.load %arg4[%c0_3, %c0_4] : memref<1x32xf32, #tpu.memory_space<vmem>>, vector<1x32xf32>
    %15 = vector.broadcast %13 : vector<32x1xf32> to vector<32x32xf32>
    %16 = vector.broadcast %14 : vector<1x32xf32> to vector<32x32xf32>
    %17 = arith.mulf %15, %16 : vector<32x32xf32>
    %18 = arith.addf %9, %17 : vector<32x32xf32>
    %c0_5 = arith.constant 0 : index
    %c0_6 = arith.constant 0 : index
    %19 = vector.load %arg3[%c0_5, %c0_6] : memref<32x32xf32, #tpu.memory_space<vmem>>, vector<32x32xf32>
    %20 = arith.addf %18, %19 : vector<32x32xf32>
    %c0_7 = arith.constant 0 : index
    %c0_8 = arith.constant 0 : index
    %21 = vector.load %arg5[%c0_7, %c0_8] : memref<32x128xf32, #tpu.memory_space<vmem>>, vector<32x128xf32>
    %c0_9 = arith.constant 0 : index
    %c0_10 = arith.constant 0 : index
    %22 = vector.load %arg6[%c0_9, %c0_10] : memref<128x32xf32, #tpu.memory_space<vmem>>, vector<128x32xf32>
    %c0_11 = arith.constant 0 : index
    %c0_12 = arith.constant 0 : index
    %c0_13 = arith.constant 0 : index
    %23 = vector.load %arg7[%c0_11, %c0_12, %c0_13] : memref<2x32x32xf32, #tpu.memory_space<vmem>>, vector<1x32x32xf32>
    %24 = vector.shape_cast %23 : vector<1x32x32xf32> to vector<32x32xf32>
    %25 = arith.truncf %20 : vector<32x32xf32> to vector<32x32xbf16>
    %26 = arith.truncf %24 : vector<32x32xf32> to vector<32x32xbf16>
    %cst_14 = arith.constant dense<0.000000e+00> : vector<32x32xf32>
    %27 = tpu.matmul %25, %26, %cst_14 {dimension_numbers = #tpu.dot_dimension_numbers<[1], [0], [0], [1], [0, 0, 1, 1], [], []>} : vector<32x32xbf16>, vector<32x32xbf16>, vector<32x32xf32> -> vector<32x32xf32>
    %c0_15 = arith.constant 0 : index
    %c0_16 = arith.constant 0 : index
    %c0_17 = arith.constant 0 : index
    %28 = vector.load %arg8[%c0_15, %c0_16, %c0_17] : memref<2x1x32xf32, #tpu.memory_space<vmem>>, vector<1x1x32xf32>
    %29 = vector.shape_cast %28 : vector<1x1x32xf32> to vector<1x32xf32>
    %30 = vector.broadcast %29 : vector<1x32xf32> to vector<32x32xf32>
    %31 = arith.addf %27, %30 : vector<32x32xf32>
    %c0_18 = arith.constant 0 : index
    %c0_19 = arith.constant 0 : index
    %c0_20 = arith.constant 0 : index
    %32 = vector.load %arg9[%c0_18, %c0_19, %c0_20] : memref<2x32x32xf32, #tpu.memory_space<vmem>>, vector<1x32x32xf32>
    %33 = vector.shape_cast %32 : vector<1x32x32xf32> to vector<32x32xf32>
    %34 = arith.truncf %20 : vector<32x32xf32> to vector<32x32xbf16>
    %35 = arith.truncf %33 : vector<32x32xf32> to vector<32x32xbf16>
    %cst_21 = arith.constant dense<0.000000e+00> : vector<32x32xf32>
    %36 = tpu.matmul %34, %35, %cst_21 {dimension_numbers = #tpu.dot_dimension_numbers<[1], [0], [0], [1], [0, 0, 1, 1], [], []>} : vector<32x32xbf16>, vector<32x32xbf16>, vector<32x32xf32> -> vector<32x32xf32>
    %c0_22 = arith.constant 0 : index
    %c0_23 = arith.constant 0 : index
    %c0_24 = arith.constant 0 : index
    %37 = vector.load %arg10[%c0_22, %c0_23, %c0_24] : memref<2x1x32xf32, #tpu.memory_space<vmem>>, vector<1x1x32xf32>
    %38 = vector.shape_cast %37 : vector<1x1x32xf32> to vector<1x32xf32>
    %39 = vector.broadcast %38 : vector<1x32xf32> to vector<32x32xf32>
    %40 = arith.addf %36, %39 : vector<32x32xf32>
    %c0_25 = arith.constant 0 : index
    %c0_26 = arith.constant 0 : index
    %c0_27 = arith.constant 0 : index
    %41 = vector.load %arg11[%c0_25, %c0_26, %c0_27] : memref<2x32x32xf32, #tpu.memory_space<vmem>>, vector<1x32x32xf32>
    %42 = vector.shape_cast %41 : vector<1x32x32xf32> to vector<32x32xf32>
    %43 = arith.truncf %20 : vector<32x32xf32> to vector<32x32xbf16>
    %44 = arith.truncf %42 : vector<32x32xf32> to vector<32x32xbf16>
    %cst_28 = arith.constant dense<0.000000e+00> : vector<32x32xf32>
    %45 = tpu.matmul %43, %44, %cst_28 {dimension_numbers = #tpu.dot_dimension_numbers<[1], [0], [0], [1], [0, 0, 1, 1], [], []>} : vector<32x32xbf16>, vector<32x32xbf16>, vector<32x32xf32> -> vector<32x32xf32>
    %c0_29 = arith.constant 0 : index
    %c0_30 = arith.constant 0 : index
    %c0_31 = arith.constant 0 : index
    %46 = vector.load %arg12[%c0_29, %c0_30, %c0_31] : memref<2x1x32xf32, #tpu.memory_space<vmem>>, vector<1x1x32xf32>
    %47 = vector.shape_cast %46 : vector<1x1x32xf32> to vector<1x32xf32>
    %48 = vector.broadcast %47 : vector<1x32xf32> to vector<32x32xf32>
    %49 = arith.addf %45, %48 : vector<32x32xf32>
    %50 = tpu.concatenate %40, %40, %40, %40 in 0 : vector<32x32xf32>, vector<32x32xf32>, vector<32x32xf32>, vector<32x32xf32> -> vector<128x32xf32>
    %51 = arith.mulf %50, %22 : vector<128x32xf32>
    %52 = tpu.concatenate %49, %49, %49, %49 in 0 : vector<32x32xf32>, vector<32x32xf32>, vector<32x32xf32>, vector<32x32xf32> -> vector<128x32xf32>
    %53 = arith.mulf %52, %22 : vector<128x32xf32>
    %54 = arith.truncf %31 : vector<32x32xf32> to vector<32x32xbf16>
    %55 = arith.truncf %51 : vector<128x32xf32> to vector<128x32xbf16>
    %cst_32 = arith.constant dense<0.000000e+00> : vector<32x128xf32>
    %56 = tpu.matmul %54, %55, %cst_32 {dimension_numbers = #tpu.dot_dimension_numbers<[1], [1], [0], [0], [0, 0, 1, 0], [], []>} : vector<32x32xbf16>, vector<128x32xbf16>, vector<32x128xf32> -> vector<32x128xf32>
    %57 = arith.addf %56, %21 : vector<32x128xf32>
    %cst_33 = arith.constant dense<0xFF800000> : vector<32xf32>
    %58 = vector.multi_reduction <maximumf>, %57, %cst_33 [1] : vector<32x128xf32> to vector<32xf32>
    %59 = vector.shape_cast %58 : vector<32xf32> to vector<32x1xf32>
    %60 = vector.broadcast %59 : vector<32x1xf32> to vector<32x128xf32>
    %61 = arith.subf %57, %60 : vector<32x128xf32>
    %62 = math.exp %61 : vector<32x128xf32>
    %63 = arith.truncf %62 : vector<32x128xf32> to vector<32x128xbf16>
    %64 = arith.truncf %53 : vector<128x32xf32> to vector<128x32xbf16>
    %cst_34 = arith.constant dense<0.000000e+00> : vector<32x32xf32>
    %65 = tpu.matmul %63, %64, %cst_34 {dimension_numbers = #tpu.dot_dimension_numbers<[1], [0], [0], [1], [0, 0, 1, 1], [], []>} : vector<32x128xbf16>, vector<128x32xbf16>, vector<32x32xf32> -> vector<32x32xf32>
    %66 = arith.truncf %62 : vector<32x128xf32> to vector<32x128xbf16>
    %67 = arith.truncf %22 : vector<128x32xf32> to vector<128x32xbf16>
    %cst_35 = arith.constant dense<0.000000e+00> : vector<32x32xf32>
    %68 = tpu.matmul %66, %67, %cst_35 {dimension_numbers = #tpu.dot_dimension_numbers<[1], [0], [0], [1], [0, 0, 1, 1], [], []>} : vector<32x128xbf16>, vector<128x32xbf16>, vector<32x32xf32> -> vector<32x32xf32>
    %69 = tpu.reciprocal %68 : vector<32x32xf32> -> vector<32x32xf32>
    %70 = arith.mulf %65, %69 : vector<32x32xf32>
    %c0_36 = arith.constant 0 : index
    %c0_37 = arith.constant 0 : index
    %c0_38 = arith.constant 0 : index
    %71 = vector.load %arg13[%c0_36, %c0_37, %c0_38] : memref<2x32x32xf32, #tpu.memory_space<vmem>>, vector<1x32x32xf32>
    %72 = vector.shape_cast %71 : vector<1x32x32xf32> to vector<32x32xf32>
    %73 = arith.truncf %70 : vector<32x32xf32> to vector<32x32xbf16>
    %74 = arith.truncf %72 : vector<32x32xf32> to vector<32x32xbf16>
    %cst_39 = arith.constant dense<0.000000e+00> : vector<32x32xf32>
    %75 = tpu.matmul %73, %74, %cst_39 {dimension_numbers = #tpu.dot_dimension_numbers<[1], [0], [0], [1], [0, 0, 1, 1], [], []>} : vector<32x32xbf16>, vector<32x32xbf16>, vector<32x32xf32> -> vector<32x32xf32>
    %c0_40 = arith.constant 0 : index
    %c0_41 = arith.constant 0 : index
    %c0_42 = arith.constant 0 : index
    %76 = vector.load %arg14[%c0_40, %c0_41, %c0_42] : memref<2x1x32xf32, #tpu.memory_space<vmem>>, vector<1x1x32xf32>
    %77 = vector.shape_cast %76 : vector<1x1x32xf32> to vector<1x32xf32>
    %78 = vector.broadcast %77 : vector<1x32xf32> to vector<32x32xf32>
    %79 = arith.addf %75, %78 : vector<32x32xf32>
    %80 = arith.addf %20, %79 : vector<32x32xf32>
    %c0_43 = arith.constant 0 : index
    %c0_44 = arith.constant 0 : index
    %c0_45 = arith.constant 0 : index
    %81 = vector.load %arg15[%c0_43, %c0_44, %c0_45] : memref<2x1x32xf32, #tpu.memory_space<vmem>>, vector<1x1x32xf32>
    %82 = vector.shape_cast %81 : vector<1x1x32xf32> to vector<1x32xf32>
    %c0_46 = arith.constant 0 : index
    %c0_47 = arith.constant 0 : index
    %c0_48 = arith.constant 0 : index
    %83 = vector.load %arg16[%c0_46, %c0_47, %c0_48] : memref<2x1x32xf32, #tpu.memory_space<vmem>>, vector<1x1x32xf32>
    %84 = vector.shape_cast %83 : vector<1x1x32xf32> to vector<1x32xf32>
    %cst_49 = arith.constant dense<0.000000e+00> : vector<32xf32>
    %85 = vector.multi_reduction <add>, %80, %cst_49 [1] : vector<32x32xf32> to vector<32xf32>
    %86 = vector.shape_cast %85 : vector<32xf32> to vector<32x1xf32>
    %cst_50 = arith.constant 3.200000e+01 : f32
    %87 = vector.broadcast %cst_50 : f32 to vector<32x1xf32>
    %88 = arith.divf %86, %87 : vector<32x1xf32>
    %89 = vector.broadcast %88 : vector<32x1xf32> to vector<32x32xf32>
    %90 = arith.subf %80, %89 : vector<32x32xf32>
    %91 = arith.mulf %90, %90 : vector<32x32xf32>
    %cst_51 = arith.constant dense<0.000000e+00> : vector<32xf32>
    %92 = vector.multi_reduction <add>, %91, %cst_51 [1] : vector<32x32xf32> to vector<32xf32>
    %93 = vector.shape_cast %92 : vector<32xf32> to vector<32x1xf32>
    %cst_52 = arith.constant 3.200000e+01 : f32
    %94 = vector.broadcast %cst_52 : f32 to vector<32x1xf32>
    %95 = arith.divf %93, %94 : vector<32x1xf32>
    %cst_53 = arith.constant 9.99999974E-6 : f32
    %96 = vector.broadcast %cst_53 : f32 to vector<32x1xf32>
    %97 = arith.addf %95, %96 : vector<32x1xf32>
    %98 = math.rsqrt %97 : vector<32x1xf32>
    %99 = vector.broadcast %98 : vector<32x1xf32> to vector<32x32xf32>
    %100 = arith.mulf %90, %99 : vector<32x32xf32>
    %101 = vector.broadcast %82 : vector<1x32xf32> to vector<32x32xf32>
    %102 = arith.mulf %100, %101 : vector<32x32xf32>
    %103 = vector.broadcast %84 : vector<1x32xf32> to vector<32x32xf32>
    %104 = arith.addf %102, %103 : vector<32x32xf32>
    %c0_54 = arith.constant 0 : index
    %c0_55 = arith.constant 0 : index
    %c0_56 = arith.constant 0 : index
    %105 = vector.load %arg17[%c0_54, %c0_55, %c0_56] : memref<2x32x128xf32, #tpu.memory_space<vmem>>, vector<1x32x128xf32>
    %106 = vector.shape_cast %105 : vector<1x32x128xf32> to vector<32x128xf32>
    %107 = arith.truncf %104 : vector<32x32xf32> to vector<32x32xbf16>
    %108 = arith.truncf %106 : vector<32x128xf32> to vector<32x128xbf16>
    %cst_57 = arith.constant dense<0.000000e+00> : vector<32x128xf32>
    %109 = tpu.matmul %107, %108, %cst_57 {dimension_numbers = #tpu.dot_dimension_numbers<[1], [0], [0], [1], [0, 0, 1, 1], [], []>} : vector<32x32xbf16>, vector<32x128xbf16>, vector<32x128xf32> -> vector<32x128xf32>
    %c0_58 = arith.constant 0 : index
    %c0_59 = arith.constant 0 : index
    %c0_60 = arith.constant 0 : index
    %110 = vector.load %arg18[%c0_58, %c0_59, %c0_60] : memref<2x1x128xf32, #tpu.memory_space<vmem>>, vector<1x1x128xf32>
    %111 = vector.shape_cast %110 : vector<1x1x128xf32> to vector<1x128xf32>
    %112 = vector.broadcast %111 : vector<1x128xf32> to vector<32x128xf32>
    %113 = arith.addf %109, %112 : vector<32x128xf32>
    %cst_61 = arith.constant 0.000000e+00 : f32
    %114 = vector.broadcast %cst_61 : f32 to vector<32x128xf32>
    %115 = arith.maximumf %113, %114 : vector<32x128xf32>
    %c0_62 = arith.constant 0 : index
    %c0_63 = arith.constant 0 : index
    %c0_64 = arith.constant 0 : index
    %116 = vector.load %arg19[%c0_62, %c0_63, %c0_64] : memref<2x128x32xf32, #tpu.memory_space<vmem>>, vector<1x128x32xf32>
    %117 = vector.shape_cast %116 : vector<1x128x32xf32> to vector<128x32xf32>
    %118 = arith.truncf %115 : vector<32x128xf32> to vector<32x128xbf16>
    %119 = arith.truncf %117 : vector<128x32xf32> to vector<128x32xbf16>
    %cst_65 = arith.constant dense<0.000000e+00> : vector<32x32xf32>
    %120 = tpu.matmul %118, %119, %cst_65 {dimension_numbers = #tpu.dot_dimension_numbers<[1], [0], [0], [1], [0, 0, 1, 1], [], []>} : vector<32x128xbf16>, vector<128x32xbf16>, vector<32x32xf32> -> vector<32x32xf32>
    %c0_66 = arith.constant 0 : index
    %c0_67 = arith.constant 0 : index
    %c0_68 = arith.constant 0 : index
    %121 = vector.load %arg20[%c0_66, %c0_67, %c0_68] : memref<2x1x32xf32, #tpu.memory_space<vmem>>, vector<1x1x32xf32>
    %122 = vector.shape_cast %121 : vector<1x1x32xf32> to vector<1x32xf32>
    %123 = vector.broadcast %122 : vector<1x32xf32> to vector<32x32xf32>
    %124 = arith.addf %120, %123 : vector<32x32xf32>
    %125 = arith.addf %104, %124 : vector<32x32xf32>
    %c0_69 = arith.constant 0 : index
    %c0_70 = arith.constant 0 : index
    %c0_71 = arith.constant 0 : index
    %126 = vector.load %arg21[%c0_69, %c0_70, %c0_71] : memref<2x1x32xf32, #tpu.memory_space<vmem>>, vector<1x1x32xf32>
    %127 = vector.shape_cast %126 : vector<1x1x32xf32> to vector<1x32xf32>
    %c0_72 = arith.constant 0 : index
    %c0_73 = arith.constant 0 : index
    %c0_74 = arith.constant 0 : index
    %128 = vector.load %arg22[%c0_72, %c0_73, %c0_74] : memref<2x1x32xf32, #tpu.memory_space<vmem>>, vector<1x1x32xf32>
    %129 = vector.shape_cast %128 : vector<1x1x32xf32> to vector<1x32xf32>
    %cst_75 = arith.constant dense<0.000000e+00> : vector<32xf32>
    %130 = vector.multi_reduction <add>, %125, %cst_75 [1] : vector<32x32xf32> to vector<32xf32>
    %131 = vector.shape_cast %130 : vector<32xf32> to vector<32x1xf32>
    %cst_76 = arith.constant 3.200000e+01 : f32
    %132 = vector.broadcast %cst_76 : f32 to vector<32x1xf32>
    %133 = arith.divf %131, %132 : vector<32x1xf32>
    %134 = vector.broadcast %133 : vector<32x1xf32> to vector<32x32xf32>
    %135 = arith.subf %125, %134 : vector<32x32xf32>
    %136 = arith.mulf %135, %135 : vector<32x32xf32>
    %cst_77 = arith.constant dense<0.000000e+00> : vector<32xf32>
    %137 = vector.multi_reduction <add>, %136, %cst_77 [1] : vector<32x32xf32> to vector<32xf32>
    %138 = vector.shape_cast %137 : vector<32xf32> to vector<32x1xf32>
    %cst_78 = arith.constant 3.200000e+01 : f32
    %139 = vector.broadcast %cst_78 : f32 to vector<32x1xf32>
    %140 = arith.divf %138, %139 : vector<32x1xf32>
    %cst_79 = arith.constant 9.99999974E-6 : f32
    %141 = vector.broadcast %cst_79 : f32 to vector<32x1xf32>
    %142 = arith.addf %140, %141 : vector<32x1xf32>
    %143 = math.rsqrt %142 : vector<32x1xf32>
    %144 = vector.broadcast %143 : vector<32x1xf32> to vector<32x32xf32>
    %145 = arith.mulf %135, %144 : vector<32x32xf32>
    %146 = vector.broadcast %127 : vector<1x32xf32> to vector<32x32xf32>
    %147 = arith.mulf %145, %146 : vector<32x32xf32>
    %148 = vector.broadcast %129 : vector<1x32xf32> to vector<32x32xf32>
    %149 = arith.addf %147, %148 : vector<32x32xf32>
    %c1 = arith.constant 1 : index
    %c0_80 = arith.constant 0 : index
    %c0_81 = arith.constant 0 : index
    %150 = vector.load %arg7[%c1, %c0_80, %c0_81] : memref<2x32x32xf32, #tpu.memory_space<vmem>>, vector<1x32x32xf32>
    %151 = vector.shape_cast %150 : vector<1x32x32xf32> to vector<32x32xf32>
    %152 = arith.truncf %149 : vector<32x32xf32> to vector<32x32xbf16>
    %153 = arith.truncf %151 : vector<32x32xf32> to vector<32x32xbf16>
    %cst_82 = arith.constant dense<0.000000e+00> : vector<32x32xf32>
    %154 = tpu.matmul %152, %153, %cst_82 {dimension_numbers = #tpu.dot_dimension_numbers<[1], [0], [0], [1], [0, 0, 1, 1], [], []>} : vector<32x32xbf16>, vector<32x32xbf16>, vector<32x32xf32> -> vector<32x32xf32>
    %c1_83 = arith.constant 1 : index
    %c0_84 = arith.constant 0 : index
    %c0_85 = arith.constant 0 : index
    %155 = vector.load %arg8[%c1_83, %c0_84, %c0_85] : memref<2x1x32xf32, #tpu.memory_space<vmem>>, vector<1x1x32xf32>
    %156 = vector.shape_cast %155 : vector<1x1x32xf32> to vector<1x32xf32>
    %157 = vector.broadcast %156 : vector<1x32xf32> to vector<32x32xf32>
    %158 = arith.addf %154, %157 : vector<32x32xf32>
    %c1_86 = arith.constant 1 : index
    %c0_87 = arith.constant 0 : index
    %c0_88 = arith.constant 0 : index
    %159 = vector.load %arg9[%c1_86, %c0_87, %c0_88] : memref<2x32x32xf32, #tpu.memory_space<vmem>>, vector<1x32x32xf32>
    %160 = vector.shape_cast %159 : vector<1x32x32xf32> to vector<32x32xf32>
    %161 = arith.truncf %149 : vector<32x32xf32> to vector<32x32xbf16>
    %162 = arith.truncf %160 : vector<32x32xf32> to vector<32x32xbf16>
    %cst_89 = arith.constant dense<0.000000e+00> : vector<32x32xf32>
    %163 = tpu.matmul %161, %162, %cst_89 {dimension_numbers = #tpu.dot_dimension_numbers<[1], [0], [0], [1], [0, 0, 1, 1], [], []>} : vector<32x32xbf16>, vector<32x32xbf16>, vector<32x32xf32> -> vector<32x32xf32>
    %c1_90 = arith.constant 1 : index
    %c0_91 = arith.constant 0 : index
    %c0_92 = arith.constant 0 : index
    %164 = vector.load %arg10[%c1_90, %c0_91, %c0_92] : memref<2x1x32xf32, #tpu.memory_space<vmem>>, vector<1x1x32xf32>
    %165 = vector.shape_cast %164 : vector<1x1x32xf32> to vector<1x32xf32>
    %166 = vector.broadcast %165 : vector<1x32xf32> to vector<32x32xf32>
    %167 = arith.addf %163, %166 : vector<32x32xf32>
    %c1_93 = arith.constant 1 : index
    %c0_94 = arith.constant 0 : index
    %c0_95 = arith.constant 0 : index
    %168 = vector.load %arg11[%c1_93, %c0_94, %c0_95] : memref<2x32x32xf32, #tpu.memory_space<vmem>>, vector<1x32x32xf32>
    %169 = vector.shape_cast %168 : vector<1x32x32xf32> to vector<32x32xf32>
    %170 = arith.truncf %149 : vector<32x32xf32> to vector<32x32xbf16>
    %171 = arith.truncf %169 : vector<32x32xf32> to vector<32x32xbf16>
    %cst_96 = arith.constant dense<0.000000e+00> : vector<32x32xf32>
    %172 = tpu.matmul %170, %171, %cst_96 {dimension_numbers = #tpu.dot_dimension_numbers<[1], [0], [0], [1], [0, 0, 1, 1], [], []>} : vector<32x32xbf16>, vector<32x32xbf16>, vector<32x32xf32> -> vector<32x32xf32>
    %c1_97 = arith.constant 1 : index
    %c0_98 = arith.constant 0 : index
    %c0_99 = arith.constant 0 : index
    %173 = vector.load %arg12[%c1_97, %c0_98, %c0_99] : memref<2x1x32xf32, #tpu.memory_space<vmem>>, vector<1x1x32xf32>
    %174 = vector.shape_cast %173 : vector<1x1x32xf32> to vector<1x32xf32>
    %175 = vector.broadcast %174 : vector<1x32xf32> to vector<32x32xf32>
    %176 = arith.addf %172, %175 : vector<32x32xf32>
    %177 = tpu.concatenate %167, %167, %167, %167 in 0 : vector<32x32xf32>, vector<32x32xf32>, vector<32x32xf32>, vector<32x32xf32> -> vector<128x32xf32>
    %178 = arith.mulf %177, %22 : vector<128x32xf32>
    %179 = tpu.concatenate %176, %176, %176, %176 in 0 : vector<32x32xf32>, vector<32x32xf32>, vector<32x32xf32>, vector<32x32xf32> -> vector<128x32xf32>
    %180 = arith.mulf %179, %22 : vector<128x32xf32>
    %181 = arith.truncf %158 : vector<32x32xf32> to vector<32x32xbf16>
    %182 = arith.truncf %178 : vector<128x32xf32> to vector<128x32xbf16>
    %cst_100 = arith.constant dense<0.000000e+00> : vector<32x128xf32>
    %183 = tpu.matmul %181, %182, %cst_100 {dimension_numbers = #tpu.dot_dimension_numbers<[1], [1], [0], [0], [0, 0, 1, 0], [], []>} : vector<32x32xbf16>, vector<128x32xbf16>, vector<32x128xf32> -> vector<32x128xf32>
    %184 = arith.addf %183, %21 : vector<32x128xf32>
    %cst_101 = arith.constant dense<0xFF800000> : vector<32xf32>
    %185 = vector.multi_reduction <maximumf>, %184, %cst_101 [1] : vector<32x128xf32> to vector<32xf32>
    %186 = vector.shape_cast %185 : vector<32xf32> to vector<32x1xf32>
    %187 = vector.broadcast %186 : vector<32x1xf32> to vector<32x128xf32>
    %188 = arith.subf %184, %187 : vector<32x128xf32>
    %189 = math.exp %188 : vector<32x128xf32>
    %190 = arith.truncf %189 : vector<32x128xf32> to vector<32x128xbf16>
    %191 = arith.truncf %180 : vector<128x32xf32> to vector<128x32xbf16>
    %cst_102 = arith.constant dense<0.000000e+00> : vector<32x32xf32>
    %192 = tpu.matmul %190, %191, %cst_102 {dimension_numbers = #tpu.dot_dimension_numbers<[1], [0], [0], [1], [0, 0, 1, 1], [], []>} : vector<32x128xbf16>, vector<128x32xbf16>, vector<32x32xf32> -> vector<32x32xf32>
    %193 = arith.truncf %189 : vector<32x128xf32> to vector<32x128xbf16>
    %194 = arith.truncf %22 : vector<128x32xf32> to vector<128x32xbf16>
    %cst_103 = arith.constant dense<0.000000e+00> : vector<32x32xf32>
    %195 = tpu.matmul %193, %194, %cst_103 {dimension_numbers = #tpu.dot_dimension_numbers<[1], [0], [0], [1], [0, 0, 1, 1], [], []>} : vector<32x128xbf16>, vector<128x32xbf16>, vector<32x32xf32> -> vector<32x32xf32>
    %196 = tpu.reciprocal %195 : vector<32x32xf32> -> vector<32x32xf32>
    %197 = arith.mulf %192, %196 : vector<32x32xf32>
    %c1_104 = arith.constant 1 : index
    %c0_105 = arith.constant 0 : index
    %c0_106 = arith.constant 0 : index
    %198 = vector.load %arg13[%c1_104, %c0_105, %c0_106] : memref<2x32x32xf32, #tpu.memory_space<vmem>>, vector<1x32x32xf32>
    %199 = vector.shape_cast %198 : vector<1x32x32xf32> to vector<32x32xf32>
    %200 = arith.truncf %197 : vector<32x32xf32> to vector<32x32xbf16>
    %201 = arith.truncf %199 : vector<32x32xf32> to vector<32x32xbf16>
    %cst_107 = arith.constant dense<0.000000e+00> : vector<32x32xf32>
    %202 = tpu.matmul %200, %201, %cst_107 {dimension_numbers = #tpu.dot_dimension_numbers<[1], [0], [0], [1], [0, 0, 1, 1], [], []>} : vector<32x32xbf16>, vector<32x32xbf16>, vector<32x32xf32> -> vector<32x32xf32>
    %c1_108 = arith.constant 1 : index
    %c0_109 = arith.constant 0 : index
    %c0_110 = arith.constant 0 : index
    %203 = vector.load %arg14[%c1_108, %c0_109, %c0_110] : memref<2x1x32xf32, #tpu.memory_space<vmem>>, vector<1x1x32xf32>
    %204 = vector.shape_cast %203 : vector<1x1x32xf32> to vector<1x32xf32>
    %205 = vector.broadcast %204 : vector<1x32xf32> to vector<32x32xf32>
    %206 = arith.addf %202, %205 : vector<32x32xf32>
    %207 = arith.addf %149, %206 : vector<32x32xf32>
    %c1_111 = arith.constant 1 : index
    %c0_112 = arith.constant 0 : index
    %c0_113 = arith.constant 0 : index
    %208 = vector.load %arg15[%c1_111, %c0_112, %c0_113] : memref<2x1x32xf32, #tpu.memory_space<vmem>>, vector<1x1x32xf32>
    %209 = vector.shape_cast %208 : vector<1x1x32xf32> to vector<1x32xf32>
    %c1_114 = arith.constant 1 : index
    %c0_115 = arith.constant 0 : index
    %c0_116 = arith.constant 0 : index
    %210 = vector.load %arg16[%c1_114, %c0_115, %c0_116] : memref<2x1x32xf32, #tpu.memory_space<vmem>>, vector<1x1x32xf32>
    %211 = vector.shape_cast %210 : vector<1x1x32xf32> to vector<1x32xf32>
    %cst_117 = arith.constant dense<0.000000e+00> : vector<32xf32>
    %212 = vector.multi_reduction <add>, %207, %cst_117 [1] : vector<32x32xf32> to vector<32xf32>
    %213 = vector.shape_cast %212 : vector<32xf32> to vector<32x1xf32>
    %cst_118 = arith.constant 3.200000e+01 : f32
    %214 = vector.broadcast %cst_118 : f32 to vector<32x1xf32>
    %215 = arith.divf %213, %214 : vector<32x1xf32>
    %216 = vector.broadcast %215 : vector<32x1xf32> to vector<32x32xf32>
    %217 = arith.subf %207, %216 : vector<32x32xf32>
    %218 = arith.mulf %217, %217 : vector<32x32xf32>
    %cst_119 = arith.constant dense<0.000000e+00> : vector<32xf32>
    %219 = vector.multi_reduction <add>, %218, %cst_119 [1] : vector<32x32xf32> to vector<32xf32>
    %220 = vector.shape_cast %219 : vector<32xf32> to vector<32x1xf32>
    %cst_120 = arith.constant 3.200000e+01 : f32
    %221 = vector.broadcast %cst_120 : f32 to vector<32x1xf32>
    %222 = arith.divf %220, %221 : vector<32x1xf32>
    %cst_121 = arith.constant 9.99999974E-6 : f32
    %223 = vector.broadcast %cst_121 : f32 to vector<32x1xf32>
    %224 = arith.addf %222, %223 : vector<32x1xf32>
    %225 = math.rsqrt %224 : vector<32x1xf32>
    %226 = vector.broadcast %225 : vector<32x1xf32> to vector<32x32xf32>
    %227 = arith.mulf %217, %226 : vector<32x32xf32>
    %228 = vector.broadcast %209 : vector<1x32xf32> to vector<32x32xf32>
    %229 = arith.mulf %227, %228 : vector<32x32xf32>
    %230 = vector.broadcast %211 : vector<1x32xf32> to vector<32x32xf32>
    %231 = arith.addf %229, %230 : vector<32x32xf32>
    %c1_122 = arith.constant 1 : index
    %c0_123 = arith.constant 0 : index
    %c0_124 = arith.constant 0 : index
    %232 = vector.load %arg17[%c1_122, %c0_123, %c0_124] : memref<2x32x128xf32, #tpu.memory_space<vmem>>, vector<1x32x128xf32>
    %233 = vector.shape_cast %232 : vector<1x32x128xf32> to vector<32x128xf32>
    %234 = arith.truncf %231 : vector<32x32xf32> to vector<32x32xbf16>
    %235 = arith.truncf %233 : vector<32x128xf32> to vector<32x128xbf16>
    %cst_125 = arith.constant dense<0.000000e+00> : vector<32x128xf32>
    %236 = tpu.matmul %234, %235, %cst_125 {dimension_numbers = #tpu.dot_dimension_numbers<[1], [0], [0], [1], [0, 0, 1, 1], [], []>} : vector<32x32xbf16>, vector<32x128xbf16>, vector<32x128xf32> -> vector<32x128xf32>
    %c1_126 = arith.constant 1 : index
    %c0_127 = arith.constant 0 : index
    %c0_128 = arith.constant 0 : index
    %237 = vector.load %arg18[%c1_126, %c0_127, %c0_128] : memref<2x1x128xf32, #tpu.memory_space<vmem>>, vector<1x1x128xf32>
    %238 = vector.shape_cast %237 : vector<1x1x128xf32> to vector<1x128xf32>
    %239 = vector.broadcast %238 : vector<1x128xf32> to vector<32x128xf32>
    %240 = arith.addf %236, %239 : vector<32x128xf32>
    %cst_129 = arith.constant 0.000000e+00 : f32
    %241 = vector.broadcast %cst_129 : f32 to vector<32x128xf32>
    %242 = arith.maximumf %240, %241 : vector<32x128xf32>
    %c1_130 = arith.constant 1 : index
    %c0_131 = arith.constant 0 : index
    %c0_132 = arith.constant 0 : index
    %243 = vector.load %arg19[%c1_130, %c0_131, %c0_132] : memref<2x128x32xf32, #tpu.memory_space<vmem>>, vector<1x128x32xf32>
    %244 = vector.shape_cast %243 : vector<1x128x32xf32> to vector<128x32xf32>
    %245 = arith.truncf %242 : vector<32x128xf32> to vector<32x128xbf16>
    %246 = arith.truncf %244 : vector<128x32xf32> to vector<128x32xbf16>
    %cst_133 = arith.constant dense<0.000000e+00> : vector<32x32xf32>
    %247 = tpu.matmul %245, %246, %cst_133 {dimension_numbers = #tpu.dot_dimension_numbers<[1], [0], [0], [1], [0, 0, 1, 1], [], []>} : vector<32x128xbf16>, vector<128x32xbf16>, vector<32x32xf32> -> vector<32x32xf32>
    %c1_134 = arith.constant 1 : index
    %c0_135 = arith.constant 0 : index
    %c0_136 = arith.constant 0 : index
    %248 = vector.load %arg20[%c1_134, %c0_135, %c0_136] : memref<2x1x32xf32, #tpu.memory_space<vmem>>, vector<1x1x32xf32>
    %249 = vector.shape_cast %248 : vector<1x1x32xf32> to vector<1x32xf32>
    %250 = vector.broadcast %249 : vector<1x32xf32> to vector<32x32xf32>
    %251 = arith.addf %247, %250 : vector<32x32xf32>
    %252 = arith.addf %231, %251 : vector<32x32xf32>
    %c1_137 = arith.constant 1 : index
    %c0_138 = arith.constant 0 : index
    %c0_139 = arith.constant 0 : index
    %253 = vector.load %arg21[%c1_137, %c0_138, %c0_139] : memref<2x1x32xf32, #tpu.memory_space<vmem>>, vector<1x1x32xf32>
    %254 = vector.shape_cast %253 : vector<1x1x32xf32> to vector<1x32xf32>
    %c1_140 = arith.constant 1 : index
    %c0_141 = arith.constant 0 : index
    %c0_142 = arith.constant 0 : index
    %255 = vector.load %arg22[%c1_140, %c0_141, %c0_142] : memref<2x1x32xf32, #tpu.memory_space<vmem>>, vector<1x1x32xf32>
    %256 = vector.shape_cast %255 : vector<1x1x32xf32> to vector<1x32xf32>
    %cst_143 = arith.constant dense<0.000000e+00> : vector<32xf32>
    %257 = vector.multi_reduction <add>, %252, %cst_143 [1] : vector<32x32xf32> to vector<32xf32>
    %258 = vector.shape_cast %257 : vector<32xf32> to vector<32x1xf32>
    %cst_144 = arith.constant 3.200000e+01 : f32
    %259 = vector.broadcast %cst_144 : f32 to vector<32x1xf32>
    %260 = arith.divf %258, %259 : vector<32x1xf32>
    %261 = vector.broadcast %260 : vector<32x1xf32> to vector<32x32xf32>
    %262 = arith.subf %252, %261 : vector<32x32xf32>
    %263 = arith.mulf %262, %262 : vector<32x32xf32>
    %cst_145 = arith.constant dense<0.000000e+00> : vector<32xf32>
    %264 = vector.multi_reduction <add>, %263, %cst_145 [1] : vector<32x32xf32> to vector<32xf32>
    %265 = vector.shape_cast %264 : vector<32xf32> to vector<32x1xf32>
    %cst_146 = arith.constant 3.200000e+01 : f32
    %266 = vector.broadcast %cst_146 : f32 to vector<32x1xf32>
    %267 = arith.divf %265, %266 : vector<32x1xf32>
    %cst_147 = arith.constant 9.99999974E-6 : f32
    %268 = vector.broadcast %cst_147 : f32 to vector<32x1xf32>
    %269 = arith.addf %267, %268 : vector<32x1xf32>
    %270 = math.rsqrt %269 : vector<32x1xf32>
    %271 = vector.broadcast %270 : vector<32x1xf32> to vector<32x32xf32>
    %272 = arith.mulf %262, %271 : vector<32x32xf32>
    %273 = vector.broadcast %254 : vector<1x32xf32> to vector<32x32xf32>
    %274 = arith.mulf %272, %273 : vector<32x32xf32>
    %275 = vector.broadcast %256 : vector<1x32xf32> to vector<32x32xf32>
    %276 = arith.addf %274, %275 : vector<32x32xf32>
    %c0_148 = arith.constant 0 : index
    %c0_149 = arith.constant 0 : index
    %277 = vector.load %arg23[%c0_148, %c0_149] : memref<1x32xf32, #tpu.memory_space<vmem>>, vector<1x32xf32>
    %c0_150 = arith.constant 0 : index
    %c0_151 = arith.constant 0 : index
    %278 = vector.load %arg24[%c0_150, %c0_151] : memref<1x32xf32, #tpu.memory_space<vmem>>, vector<1x32xf32>
    %cst_152 = arith.constant dense<0.000000e+00> : vector<32xf32>
    %279 = vector.multi_reduction <add>, %276, %cst_152 [1] : vector<32x32xf32> to vector<32xf32>
    %280 = vector.shape_cast %279 : vector<32xf32> to vector<32x1xf32>
    %cst_153 = arith.constant 3.200000e+01 : f32
    %281 = vector.broadcast %cst_153 : f32 to vector<32x1xf32>
    %282 = arith.divf %280, %281 : vector<32x1xf32>
    %283 = vector.broadcast %282 : vector<32x1xf32> to vector<32x32xf32>
    %284 = arith.subf %276, %283 : vector<32x32xf32>
    %285 = arith.mulf %284, %284 : vector<32x32xf32>
    %cst_154 = arith.constant dense<0.000000e+00> : vector<32xf32>
    %286 = vector.multi_reduction <add>, %285, %cst_154 [1] : vector<32x32xf32> to vector<32xf32>
    %287 = vector.shape_cast %286 : vector<32xf32> to vector<32x1xf32>
    %cst_155 = arith.constant 3.200000e+01 : f32
    %288 = vector.broadcast %cst_155 : f32 to vector<32x1xf32>
    %289 = arith.divf %287, %288 : vector<32x1xf32>
    %cst_156 = arith.constant 9.99999974E-6 : f32
    %290 = vector.broadcast %cst_156 : f32 to vector<32x1xf32>
    %291 = arith.addf %289, %290 : vector<32x1xf32>
    %292 = math.rsqrt %291 : vector<32x1xf32>
    %293 = vector.broadcast %292 : vector<32x1xf32> to vector<32x32xf32>
    %294 = arith.mulf %284, %293 : vector<32x32xf32>
    %295 = vector.broadcast %277 : vector<1x32xf32> to vector<32x32xf32>
    %296 = arith.mulf %294, %295 : vector<32x32xf32>
    %297 = vector.broadcast %278 : vector<1x32xf32> to vector<32x32xf32>
    %298 = arith.addf %296, %297 : vector<32x32xf32>
    %299 = arith.truncf %298 : vector<32x32xf32> to vector<32x32xbf16>
    %300 = arith.truncf %0 : vector<128x32xf32> to vector<128x32xbf16>
    %cst_157 = arith.constant dense<0.000000e+00> : vector<32x128xf32>
    %301 = tpu.matmul %299, %300, %cst_157 {dimension_numbers = #tpu.dot_dimension_numbers<[1], [1], [0], [0], [0, 0, 1, 0], [], []>} : vector<32x32xbf16>, vector<128x32xbf16>, vector<32x128xf32> -> vector<32x128xf32>
    %c0_158 = arith.constant 0 : index
    %c0_159 = arith.constant 0 : index
    %302 = vector.load %arg25[%c0_158, %c0_159] : memref<1x128xf32, #tpu.memory_space<vmem>>, vector<1x128xf32>
    %303 = vector.broadcast %302 : vector<1x128xf32> to vector<32x128xf32>
    %304 = arith.addf %301, %303 : vector<32x128xf32>
    %c0_160 = arith.constant 0 : index
    %c0_161 = arith.constant 0 : index
    %305 = vector.load %arg26[%c0_160, %c0_161] : memref<32x128xf32, #tpu.memory_space<vmem>>, vector<32x128xf32>
    tpu.vector_store %arg26[%c0_160, %c0_161], %304 {strides = array<i32>} : memref<32x128xf32, #tpu.memory_space<vmem>>, vector<32x128xf32>,
    return
  }
  func.func @transform_0(%arg0: i32) -> (i32, i32) {
    %c0_i32 = arith.constant 0 : i32
    %c0_i32_0 = arith.constant 0 : i32
    return %arg0, %c0_i32 : i32, i32
  }
  func.func @transform_1(%arg0: i32) -> (i32, i32) {
    %c0_i32 = arith.constant 0 : i32
    %c0_i32_0 = arith.constant 0 : i32
    %c0_i32_1 = arith.constant 0 : i32
    return %c0_i32, %c0_i32_0 : i32, i32
  }
  func.func @transform_2(%arg0: i32) -> (i32, i32) {
    %c0_i32 = arith.constant 0 : i32
    %c0_i32_0 = arith.constant 0 : i32
    %c0_i32_1 = arith.constant 0 : i32
    return %c0_i32, %c0_i32_0 : i32, i32
  }
  func.func @transform_3(%arg0: i32) -> (i32, i32) {
    %c0_i32 = arith.constant 0 : i32
    %c0_i32_0 = arith.constant 0 : i32
    %c0_i32_1 = arith.constant 0 : i32
    return %c0_i32, %c0_i32_0 : i32, i32
  }
  func.func @transform_4(%arg0: i32) -> (i32, i32) {
    %c0_i32 = arith.constant 0 : i32
    %c0_i32_0 = arith.constant 0 : i32
    %c0_i32_1 = arith.constant 0 : i32
    return %c0_i32, %c0_i32_0 : i32, i32
  }
  func.func @transform_5(%arg0: i32) -> (i32, i32) {
    %c0_i32 = arith.constant 0 : i32
    %c0_i32_0 = arith.constant 0 : i32
    %c0_i32_1 = arith.constant 0 : i32
    return %c0_i32, %c0_i32_0 : i32, i32
  }
  func.func @transform_6(%arg0: i32) -> (i32, i32, i32) {
    %c0_i32 = arith.constant 0 : i32
    %c0_i32_0 = arith.constant 0 : i32
    %c0_i32_1 = arith.constant 0 : i32
    %c0_i32_2 = arith.constant 0 : i32
    return %c0_i32, %c0_i32_0, %c0_i32_1 : i32, i32, i32
  }
  func.func @transform_7(%arg0: i32) -> (i32, i32, i32) {
    %c0_i32 = arith.constant 0 : i32
    %c0_i32_0 = arith.constant 0 : i32
    %c0_i32_1 = arith.constant 0 : i32
    %c0_i32_2 = arith.constant 0 : i32
    return %c0_i32, %c0_i32_0, %c0_i32_1 : i32, i32, i32
  }
  func.func @transform_8(%arg0: i32) -> (i32, i32, i32) {
    %c0_i32 = arith.constant 0 : i32
    %c0_i32_0 = arith.constant 0 : i32
    %c0_i32_1 = arith.constant 0 : i32
    %c0_i32_2 = arith.constant 0 : i32
    return %c0_i32, %c0_i32_0, %c0_i32_1 : i32, i32, i32
  }
  func.func @transform_9(%arg0: i32) -> (i32, i32, i32) {
    %c0_i32 = arith.constant 0 : i32
    %c0_i32_0 = arith.constant 0 : i32
    %c0_i32_1 = arith.constant 0 : i32
    %c0_i32_2 = arith.constant 0 : i32
    return %c0_i32, %c0_i32_0, %c0_i32_1 : i32, i32, i32
  }
  func.func @transform_10(%arg0: i32) -> (i32, i32, i32) {
    %c0_i32 = arith.constant 0 : i32
    %c0_i32_0 = arith.constant 0 : i32
    %c0_i32_1 = arith.constant 0 : i32
    %c0_i32_2 = arith.constant 0 : i32
    return %c0_i32, %c0_i32_0, %c0_i32_1 : i32, i32, i32
  }
  func.func @transform_11(%arg0: i32) -> (i32, i32, i32) {
    %c0_i32 = arith.constant 0 : i32
    %c0_i32_0 = arith.constant 0 : i32
    %c0_i32_1 = arith.constant 0 : i32
    %c0_i32_2 = arith.constant 0 : i32
    return %c0_i32, %c0_i32_0, %c0_i32_1 : i32, i32, i32
  }
  func.func @transform_12(%arg0: i32) -> (i32, i32, i32) {
    %c0_i32 = arith.constant 0 : i32
    %c0_i32_0 = arith.constant 0 : i32
    %c0_i32_1 = arith.constant 0 : i32
    %c0_i32_2 = arith.constant 0 : i32
    return %c0_i32, %c0_i32_0, %c0_i32_1 : i32, i32, i32
  }
  func.func @transform_13(%arg0: i32) -> (i32, i32, i32) {
    %c0_i32 = arith.constant 0 : i32
    %c0_i32_0 = arith.constant 0 : i32
    %c0_i32_1 = arith.constant 0 : i32
    %c0_i32_2 = arith.constant 0 : i32
    return %c0_i32, %c0_i32_0, %c0_i32_1 : i32, i32, i32
  }
  func.func @transform_14(%arg0: i32) -> (i32, i32, i32) {
    %c0_i32 = arith.constant 0 : i32
    %c0_i32_0 = arith.constant 0 : i32
    %c0_i32_1 = arith.constant 0 : i32
    %c0_i32_2 = arith.constant 0 : i32
    return %c0_i32, %c0_i32_0, %c0_i32_1 : i32, i32, i32
  }
  func.func @transform_15(%arg0: i32) -> (i32, i32, i32) {
    %c0_i32 = arith.constant 0 : i32
    %c0_i32_0 = arith.constant 0 : i32
    %c0_i32_1 = arith.constant 0 : i32
    %c0_i32_2 = arith.constant 0 : i32
    return %c0_i32, %c0_i32_0, %c0_i32_1 : i32, i32, i32
  }
  func.func @transform_16(%arg0: i32) -> (i32, i32, i32) {
    %c0_i32 = arith.constant 0 : i32
    %c0_i32_0 = arith.constant 0 : i32
    %c0_i32_1 = arith.constant 0 : i32
    %c0_i32_2 = arith.constant 0 : i32
    return %c0_i32, %c0_i32_0, %c0_i32_1 : i32, i32, i32
  }
  func.func @transform_17(%arg0: i32) -> (i32, i32, i32) {
    %c0_i32 = arith.constant 0 : i32
    %c0_i32_0 = arith.constant 0 : i32
    %c0_i32_1 = arith.constant 0 : i32
    %c0_i32_2 = arith.constant 0 : i32
    return %c0_i32, %c0_i32_0, %c0_i32_1 : i32, i32, i32
  }
  func.func @transform_18(%arg0: i32) -> (i32, i32, i32) {
    %c0_i32 = arith.constant 0 : i32
    %c0_i32_0 = arith.constant 0 : i32
    %c0_i32_1 = arith.constant 0 : i32
    %c0_i32_2 = arith.constant 0 : i32
    return %c0_i32, %c0_i32_0, %c0_i32_1 : i32, i32, i32
  }
  func.func @transform_19(%arg0: i32) -> (i32, i32, i32) {
    %c0_i32 = arith.constant 0 : i32
    %c0_i32_0 = arith.constant 0 : i32
    %c0_i32_1 = arith.constant 0 : i32
    %c0_i32_2 = arith.constant 0 : i32
    return %c0_i32, %c0_i32_0, %c0_i32_1 : i32, i32, i32
  }
  func.func @transform_20(%arg0: i32) -> (i32, i32, i32) {
    %c0_i32 = arith.constant 0 : i32
    %c0_i32_0 = arith.constant 0 : i32
    %c0_i32_1 = arith.constant 0 : i32
    %c0_i32_2 = arith.constant 0 : i32
    return %c0_i32, %c0_i32_0, %c0_i32_1 : i32, i32, i32
  }
  func.func @transform_21(%arg0: i32) -> (i32, i32, i32) {
    %c0_i32 = arith.constant 0 : i32
    %c0_i32_0 = arith.constant 0 : i32
    %c0_i32_1 = arith.constant 0 : i32
    %c0_i32_2 = arith.constant 0 : i32
    return %c0_i32, %c0_i32_0, %c0_i32_1 : i32, i32, i32
  }
  func.func @transform_22(%arg0: i32) -> (i32, i32) {
    %c0_i32 = arith.constant 0 : i32
    %c0_i32_0 = arith.constant 0 : i32
    %c0_i32_1 = arith.constant 0 : i32
    return %c0_i32, %c0_i32_0 : i32, i32
  }
  func.func @transform_23(%arg0: i32) -> (i32, i32) {
    %c0_i32 = arith.constant 0 : i32
    %c0_i32_0 = arith.constant 0 : i32
    %c0_i32_1 = arith.constant 0 : i32
    return %c0_i32, %c0_i32_0 : i32, i32
  }
  func.func @transform_24(%arg0: i32) -> (i32, i32) {
    %c0_i32 = arith.constant 0 : i32
    %c0_i32_0 = arith.constant 0 : i32
    %c0_i32_1 = arith.constant 0 : i32
    return %c0_i32, %c0_i32_0 : i32, i32
  }
  func.func @transform_25(%arg0: i32) -> (i32, i32) {
    %c0_i32 = arith.constant 0 : i32
    %c0_i32_0 = arith.constant 0 : i32
    return %arg0, %c0_i32 : i32, i32
  }
}

</mosaic_0001>

<llo_original>
// kernel: tile.19
$region0: #{tile.19}
  %s0 = inlined_call_operand.vmem [shape: f32[32,4,32], index: 0, kind: input, shape index: {}]
  %s1 = inlined_call_operand.vmem [shape: f32[32,128], index: 1, kind: output, shape index: {}]
  $region1: #{tile.19} parent=0
    #allocation0 [shape = 'u8[131072]{0}', space=vmem, size = 0x20000, scoped, tag = 'scoped mem for input reshape']
    %s3 = sshll.u32 1, 4
    %s4 = ssub.s32 %s3, 1
    %s5 = smul.addr 4, 31
    %s6 = scalar_lea.vmem %s0, %s5
    %v7 = vld [vmem:[%s6] sm:%s4]
    %s8 = scalar_lea.vmem [#allocation0], 248
    %9 = vst [vmem:[%s8] sm:%s4] %v7
    %s10 = smul.addr 4, 30
    %s11 = scalar_lea.vmem %s0, %s10
    %v12 = vld [vmem:[%s11] sm:%s4]
    %s13 = scalar_lea.vmem [#allocation0], 240
    %14 = vst [vmem:[%s13] sm:%s4] %v12
    %s15 = smul.addr 4, 29
    %s16 = scalar_lea.vmem %s0, %s15
    %v17 = vld [vmem:[%s16] sm:%s4]
    %s18 = scalar_lea.vmem [#allocation0], 232
    %19 = vst [vmem:[%s18] sm:%s4] %v17
    %s20 = smul.addr 4, 28
    %s21 = scalar_lea.vmem %s0, %s20
    %v22 = vld [vmem:[%s21] sm:%s4]
    %s23 = scalar_lea.vmem [#allocation0], 224
    %24 = vst [vmem:[%s23] sm:%s4] %v22
    %s25 = smul.addr 4, 27
    %s26 = scalar_lea.vmem %s0, %s25
    %v27 = vld [vmem:[%s26] sm:%s4]
    %s28 = scalar_lea.vmem [#allocation0], 216
    %29 = vst [vmem:[%s28] sm:%s4] %v27
    %s30 = smul.addr 4, 26
    %s31 = scalar_lea.vmem %s0, %s30
    %v32 = vld [vmem:[%s31] sm:%s4]
    %s33 = scalar_lea.vmem [#allocation0], 208
    %34 = vst [vmem:[%s33] sm:%s4] %v32
    %s35 = smul.addr 4, 25
    %s36 = scalar_lea.vmem %s0, %s35
    %v37 = vld [vmem:[%s36] sm:%s4]
    %s38 = scalar_lea.vmem [#allocation0], 200
    %39 = vst [vmem:[%s38] sm:%s4] %v37
    %s40 = smul.addr 4, 24
    %s41 = scalar_lea.vmem %s0, %s40
    %v42 = vld [vmem:[%s41] sm:%s4]
    %s43 = scalar_lea.vmem [#allocation0], 192
    %44 = vst [vmem:[%s43] sm:%s4] %v42
    %s45 = smul.addr 4, 23
    %s46 = scalar_lea.vmem %s0, %s45
    %v47 = vld [vmem:[%s46] sm:%s4]
    %s48 = scalar_lea.vmem [#allocation0], 184
    %49 = vst [vmem:[%s48] sm:%s4] %v47
    %s50 = smul.addr 4, 22
    %s51 = scalar_lea.vmem %s0, %s50
    %v52 = vld [vmem:[%s51] sm:%s4]
    %s53 = scalar_lea.vmem [#allocation0], 176
    %54 = vst [vmem:[%s53] sm:%s4] %v52
    %s55 = smul.addr 4, 21
    %s56 = scalar_lea.vmem %s0, %s55
    %v57 = vld [vmem:[%s56] sm:%s4]
    %s58 = scalar_lea.vmem [#allocation0], 168
    %59 = vst [vmem:[%s58] sm:%s4] %v57
    %s60 = smul.addr 4, 20
    %s61 = scalar_lea.vmem %s0, %s60
    %v62 = vld [vmem:[%s61] sm:%s4]
    %s63 = scalar_lea.vmem [#allocation0], 160
    %64 = vst [vmem:[%s63] sm:%s4] %v62
    %s65 = smul.addr 4, 19
    %s66 = scalar_lea.vmem %s0, %s65
    %v67 = vld [vmem:[%s66] sm:%s4]
    %s68 = scalar_lea.vmem [#allocation0], 152
    %69 = vst [vmem:[%s68] sm:%s4] %v67
    %s70 = smul.addr 4, 18
    %s71 = scalar_lea.vmem %s0, %s70
    %v72 = vld [vmem:[%s71] sm:%s4]
    %s73 = scalar_lea.vmem [#allocation0], 144
    %74 = vst [vmem:[%s73] sm:%s4] %v72
    %s75 = smul.addr 4, 17
    %s76 = scalar_lea.vmem %s0, %s75
    %v77 = vld [vmem:[%s76] sm:%s4]
    %s78 = scalar_lea.vmem [#allocation0], 136
    %79 = vst [vmem:[%s78] sm:%s4] %v77
    %s80 = smul.addr 4, 16
    %s81 = scalar_lea.vmem %s0, %s80
    %v82 = vld [vmem:[%s81] sm:%s4]
    %s83 = scalar_lea.vmem [#allocation0], 128
    %84 = vst [vmem:[%s83] sm:%s4] %v82
    %s85 = smul.addr 4, 15
    %s86 = scalar_lea.vmem %s0, %s85
    %v87 = vld [vmem:[%s86] sm:%s4]
    %s88 = scalar_lea.vmem [#allocation0], 120
    %89 = vst [vmem:[%s88] sm:%s4] %v87
    %s90 = smul.addr 4, 14
    %s91 = scalar_lea.vmem %s0, %s90
    %v92 = vld [vmem:[%s91] sm:%s4]
    %s93 = scalar_lea.vmem [#allocation0], 112
    %94 = vst [vmem:[%s93] sm:%s4] %v92
    %s95 = smul.addr 4, 13
    %s96 = scalar_lea.vmem %s0, %s95
    %v97 = vld [vmem:[%s96] sm:%s4]
    %s98 = scalar_lea.vmem [#allocation0], 104
    %99 = vst [vmem:[%s98] sm:%s4] %v97
    %s100 = smul.addr 4, 12
    %s101 = scalar_lea.vmem %s0, %s100
    %v102 = vld [vmem:[%s101] sm:%s4]
    %s103 = scalar_lea.vmem [#allocation0], 96
    %104 = vst [vmem:[%s103] sm:%s4] %v102
    %s105 = smul.addr 4, 11
    %s106 = scalar_lea.vmem %s0, %s105
    %v107 = vld [vmem:[%s106] sm:%s4]
    %s108 = scalar_lea.vmem [#allocation0], 88
    %109 = vst [vmem:[%s108] sm:%s4] %v107
    %s110 = smul.addr 4, 10
    %s111 = scalar_lea.vmem %s0, %s110
    %v112 = vld [vmem:[%s111] sm:%s4]
    %s113 = scalar_lea.vmem [#allocation0], 80
    %114 = vst [vmem:[%s113] sm:%s4] %v112
    %s115 = smul.addr 4, 9
    %s116 = scalar_lea.vmem %s0, %s115
    %v117 = vld [vmem:[%s116] sm:%s4]
    %s118 = scalar_lea.vmem [#allocation0], 72
    %119 = vst [vmem:[%s118] sm:%s4] %v117
    %s120 = smul.addr 4, 8
    %s121 = scalar_lea.vmem %s0, %s120
    %v122 = vld [vmem:[%s121] sm:%s4]
    %s123 = scalar_lea.vmem [#allocation0], 64
    %124 = vst [vmem:[%s123] sm:%s4] %v122
    %s125 = smul.addr 4, 7
    %s126 = scalar_lea.vmem %s0, %s125
    %v127 = vld [vmem:[%s126] sm:%s4]
    %s128 = scalar_lea.vmem [#allocation0], 56
    %129 = vst [vmem:[%s128] sm:%s4] %v127
    %s130 = smul.addr 4, 6
    %s131 = scalar_lea.vmem %s0, %s130
    %v132 = vld [vmem:[%s131] sm:%s4]
    %s133 = scalar_lea.vmem [#allocation0], 48
    %134 = vst [vmem:[%s133] sm:%s4] %v132
    %s135 = smul.addr 4, 5
    %s136 = scalar_lea.vmem %s0, %s135
    %v137 = vld [vmem:[%s136] sm:%s4]
    %s138 = scalar_lea.vmem [#allocation0], 40
    %139 = vst [vmem:[%s138] sm:%s4] %v137
    %s140 = smul.addr 4, 4
    %s141 = scalar_lea.vmem %s0, %s140
    %v142 = vld [vmem:[%s141] sm:%s4]
    %s143 = scalar_lea.vmem [#allocation0], 32
    %144 = vst [vmem:[%s143] sm:%s4] %v142
    %s145 = smul.addr 4, 3
    %s146 = scalar_lea.vmem %s0, %s145
    %v147 = vld [vmem:[%s146] sm:%s4]
    %s148 = scalar_lea.vmem [#allocation0], 24
    %149 = vst [vmem:[%s148] sm:%s4] %v147
    %s150 = smul.addr 4, 2
    %s151 = scalar_lea.vmem %s0, %s150
    %v152 = vld [vmem:[%s151] sm:%s4]
    %s153 = scalar_lea.vmem [#allocation0], 16
    %154 = vst [vmem:[%s153] sm:%s4] %v152
    %s155 = scalar_lea.vmem %s0, 4
    %v156 = vld [vmem:[%s155] sm:%s4]
    %s157 = scalar_lea.vmem [#allocation0], 8
    %158 = vst [vmem:[%s157] sm:%s4] %v156
    %v159 = vld [vmem:[%s0] sm:%s4]
    %160 = vst [vmem:[#allocation0] sm:%s4] %v159
    %v161 = vld [vmem:[#allocation0] ss:$8 sm:$0xf]
    %v162 = vld [vmem:[#allocation0] ss:$8 sm:$0xf0]
    %vm163 = vcmask 1047556
    %v164 = vsel %vm163, %v162, %v161
    %vm165 = vcmask 261120
    %166 = vst.msk [vmem:[%s1] sm:$0xff] %vm165, %v164
    %s167 = scalar_lea.vmem [#allocation0], 64
    %v168 = vld [vmem:[%s167] ss:$8 sm:$0xf]
    %s169 = scalar_lea.vmem [#allocation0], 64
    %v170 = vld [vmem:[%s169] ss:$8 sm:$0xf0]
    %vm171 = vcmask 1047556
    %v172 = vsel %vm171, %v170, %v168
    %vm173 = vcmask 261120
    %s174 = scalar_lea.vmem %s1, 8
    %175 = vst.msk [vmem:[%s174] sm:$0xff] %vm173, %v172
    %s176 = scalar_lea.vmem [#allocation0], 128
    %v177 = vld [vmem:[%s176] ss:$8 sm:$0xf]
    %s178 = scalar_lea.vmem [#allocation0], 128
    %v179 = vld [vmem:[%s178] ss:$8 sm:$0xf0]
    %vm180 = vcmask 1047556
    %v181 = vsel %vm180, %v179, %v177
    %vm182 = vcmask 261120
    %s183 = scalar_lea.vmem %s1, 16
    %184 = vst.msk [vmem:[%s183] sm:$0xff] %vm182, %v181
    %s185 = scalar_lea.vmem [#allocation0], 192
    %v186 = vld [vmem:[%s185] ss:$8 sm:$0xf]
    %s187 = scalar_lea.vmem [#allocation0], 192
    %v188 = vld [vmem:[%s187] ss:$8 sm:$0xf0]
    %vm189 = vcmask 1047556
    %v190 = vsel %vm189, %v188, %v186
    %vm191 = vcmask 261120
    %s192 = scalar_lea.vmem %s1, 24
    %193 = vst.msk [vmem:[%s192] sm:$0xff] %vm191, %v190
    %s194 = scalar_lea.vmem [#allocation0], 3
    %v195 = vld [vmem:[%s194] ss:$8 sm:$0xf]
    %s196 = scalar_lea.vmem [#allocation0], 3
    %v197 = vld [vmem:[%s196] ss:$8 sm:$0xf0]
    %vm198 = vcmask 1047556
    %v199 = vsel %vm198, %v197, %v195
    %200 = vrot.lane.b32.xlu0 %v199, 96
    %v201 = vpop.permute.xlu0 %200
    %vm202 = vcmask 1048320
    %203 = vst.msk [vmem:[%s1] sm:$0xff] %vm202, %v201
    %s204 = scalar_lea.vmem [#allocation0], 67
    %v205 = vld [vmem:[%s204] ss:$8 sm:$0xf]
    %s206 = scalar_lea.vmem [#allocation0], 67
    %v207 = vld [vmem:[%s206] ss:$8 sm:$0xf0]
    %vm208 = vcmask 1047556
    %v209 = vsel %vm208, %v207, %v205
    %210 = vrot.lane.b32.xlu0 %v209, 96
    %v211 = vpop.permute.xlu0 %210
    %vm212 = vcmask 1048320
    %s213 = scalar_lea.vmem %s1, 8
    %214 = vst.msk [vmem:[%s213] sm:$0xff] %vm212, %v211
    %s215 = scalar_lea.vmem [#allocation0], 131
    %v216 = vld [vmem:[%s215] ss:$8 sm:$0xf]
    %s217 = scalar_lea.vmem [#allocation0], 131
    %v218 = vld [vmem:[%s217] ss:$8 sm:$0xf0]
    %vm219 = vcmask 1047556
    %v220 = vsel %vm219, %v218, %v216
    %221 = vrot.lane.b32.xlu0 %v220, 96
    %v222 = vpop.permute.xlu0 %221
    %vm223 = vcmask 1048320
    %s224 = scalar_lea.vmem %s1, 16
    %225 = vst.msk [vmem:[%s224] sm:$0xff] %vm223, %v222
    %s226 = scalar_lea.vmem [#allocation0], 195
    %v227 = vld [vmem:[%s226] ss:$8 sm:$0xf]
    %s228 = scalar_lea.vmem [#allocation0], 195
    %v229 = vld [vmem:[%s228] ss:$8 sm:$0xf0]
    %vm230 = vcmask 1047556
    %v231 = vsel %vm230, %v229, %v227
    %232 = vrot.lane.b32.xlu0 %v231, 96
    %v233 = vpop.permute.xlu0 %232
    %vm234 = vcmask 1048320
    %s235 = scalar_lea.vmem %s1, 24
    %236 = vst.msk [vmem:[%s235] sm:$0xff] %vm234, %v233
    %s237 = scalar_lea.vmem [#allocation0], 2
    %v238 = vld [vmem:[%s237] ss:$8 sm:$0xf]
    %s239 = scalar_lea.vmem [#allocation0], 2
    %v240 = vld [vmem:[%s239] ss:$8 sm:$0xf0]
    %vm241 = vcmask 1047556
    %v242 = vsel %vm241, %v240, %v238
    %243 = vrot.lane.b32.xlu0 %v242, 64
    %v244 = vpop.permute.xlu0 %243
    %vm245 = vcmask 785920
    %246 = vst.msk [vmem:[%s1] sm:$0xff] %vm245, %v244
    %s247 = scalar_lea.vmem [#allocation0], 66
    %v248 = vld [vmem:[%s247] ss:$8 sm:$0xf]
    %s249 = scalar_lea.vmem [#allocation0], 66
    %v250 = vld [vmem:[%s249] ss:$8 sm:$0xf0]
    %vm251 = vcmask 1047556
    %v252 = vsel %vm251, %v250, %v248
    %253 = vrot.lane.b32.xlu0 %v252, 64
    %v254 = vpop.permute.xlu0 %253
    %vm255 = vcmask 785920
    %s256 = scalar_lea.vmem %s1, 8
    %257 = vst.msk [vmem:[%s256] sm:$0xff] %vm255, %v254
    %s258 = scalar_lea.vmem [#allocation0], 130
    %v259 = vld [vmem:[%s258] ss:$8 sm:$0xf]
    %s260 = scalar_lea.vmem [#allocation0], 130
    %v261 = vld [vmem:[%s260] ss:$8 sm:$0xf0]
    %vm262 = vcmask 1047556
    %v263 = vsel %vm262, %v261, %v259
    %264 = vrot.lane.b32.xlu0 %v263, 64
    %v265 = vpop.permute.xlu0 %264
    %vm266 = vcmask 785920
    %s267 = scalar_lea.vmem %s1, 16
    %268 = vst.msk [vmem:[%s267] sm:$0xff] %vm266, %v265
    %s269 = scalar_lea.vmem [#allocation0], 194
    %v270 = vld [vmem:[%s269] ss:$8 sm:$0xf]
    %s271 = scalar_lea.vmem [#allocation0], 194
    %v272 = vld [vmem:[%s271] ss:$8 sm:$0xf0]
    %vm273 = vcmask 1047556
    %v274 = vsel %vm273, %v272, %v270
    %275 = vrot.lane.b32.xlu0 %v274, 64
    %v276 = vpop.permute.xlu0 %275
    %vm277 = vcmask 785920
    %s278 = scalar_lea.vmem %s1, 24
    %279 = vst.msk [vmem:[%s278] sm:$0xff] %vm277, %v276
    %s280 = scalar_lea.vmem [#allocation0], 1
    %v281 = vld [vmem:[%s280] ss:$8 sm:$0xf]
    %s282 = scalar_lea.vmem [#allocation0], 1
    %v283 = vld [vmem:[%s282] ss:$8 sm:$0xf0]
    %vm284 = vcmask 1047556
    %v285 = vsel %vm284, %v283, %v281
    %286 = vrot.lane.b32.xlu0 %v285, 32
    %v287 = vpop.permute.xlu0 %286
    %vm288 = vcmask 523520
    %289 = vst.msk [vmem:[%s1] sm:$0xff] %vm288, %v287
    %s290 = scalar_lea.vmem [#allocation0], 65
    %v291 = vld [vmem:[%s290] ss:$8 sm:$0xf]
    %s292 = scalar_lea.vmem [#allocation0], 65
    %v293 = vld [vmem:[%s292] ss:$8 sm:$0xf0]
    %vm294 = vcmask 1047556
    %v295 = vsel %vm294, %v293, %v291
    %296 = vrot.lane.b32.xlu0 %v295, 32
    %v297 = vpop.permute.xlu0 %296
    %vm298 = vcmask 523520
    %s299 = scalar_lea.vmem %s1, 8
    %300 = vst.msk [vmem:[%s299] sm:$0xff] %vm298, %v297
    %s301 = scalar_lea.vmem [#allocation0], 129
    %v302 = vld [vmem:[%s301] ss:$8 sm:$0xf]
    %s303 = scalar_lea.vmem [#allocation0], 129
    %v304 = vld [vmem:[%s303] ss:$8 sm:$0xf0]
    %vm305 = vcmask 1047556
    %v306 = vsel %vm305, %v304, %v302
    %307 = vrot.lane.b32.xlu0 %v306, 32
    %v308 = vpop.permute.xlu0 %307
    %vm309 = vcmask 523520
    %s310 = scalar_lea.vmem %s1, 16
    %311 = vst.msk [vmem:[%s310] sm:$0xff] %vm309, %v308
    %s312 = scalar_lea.vmem [#allocation0], 193
    %v313 = vld [vmem:[%s312] ss:$8 sm:$0xf]
    %s314 = scalar_lea.vmem [#allocation0], 193
    %v315 = vld [vmem:[%s314] ss:$8 sm:$0xf0]
    %vm316 = vcmask 1047556
    %v317 = vsel %vm316, %v315, %v313
    %318 = vrot.lane.b32.xlu0 %v317, 32
    %v319 = vpop.permute.xlu0 %318
    %vm320 = vcmask 523520
    %s321 = scalar_lea.vmem %s1, 24
    %322 = vst.msk [vmem:[%s321] sm:$0xff] %vm320, %v319

// kernel: fast_transformer_forward.1
$region0: #{fast_transformer_forward.1}
  #allocation0 [shape = 'u32[]', space=smem, size = 0x4, offset = 0x4, fixed_abs, tag = 'smem constant byte address 0x4 - core index']
  #allocation1 [shape = 'u32[144,128]{1,0:T(1,128)}', space=vmem, size = 0x12000, scoped, tag = 'internal scratch']
  %s0 = inlined_call_operand.vmem [shape: s32[32,1], index: 0, kind: input, shape index: {}]
  %s1 = inlined_call_operand.vmem [shape: f32[128,32], index: 1, kind: input, shape index: {}]
  %s2 = inlined_call_operand.vmem [shape: f32[32,32], index: 2, kind: input, shape index: {}]
  %s3 = inlined_call_operand.vmem [shape: f32[1,32], index: 3, kind: input, shape index: {}]
  %s4 = inlined_call_operand.vmem [shape: f32[32,128], index: 4, kind: input, shape index: {}]
  %s5 = inlined_call_operand.vmem [shape: f32[128,32], index: 5, kind: input, shape index: {}]
  %s6 = inlined_call_operand.vmem [shape: f32[2,32,32], index: 6, kind: input, shape index: {}]
  %s7 = inlined_call_operand.vmem [shape: f32[2,1,32], index: 7, kind: input, shape index: {}]
  %s8 = inlined_call_operand.vmem [shape: f32[2,32,32], index: 8, kind: input, shape index: {}]
  %s9 = inlined_call_operand.vmem [shape: f32[2,1,32], index: 9, kind: input, shape index: {}]
  %s10 = inlined_call_operand.vmem [shape: f32[2,32,32], index: 10, kind: input, shape index: {}]
  %s11 = inlined_call_operand.vmem [shape: f32[2,1,32], index: 11, kind: input, shape index: {}]
  %s12 = inlined_call_operand.vmem [shape: f32[2,32,32], index: 12, kind: input, shape index: {}]
  %s13 = inlined_call_operand.vmem [shape: f32[2,1,32], index: 13, kind: input, shape index: {}]
  %s14 = inlined_call_operand.vmem [shape: f32[2,1,32], index: 14, kind: input, shape index: {}]
  %s15 = inlined_call_operand.vmem [shape: f32[2,1,32], index: 15, kind: input, shape index: {}]
  %s16 = inlined_call_operand.vmem [shape: f32[2,32,128], index: 16, kind: input, shape index: {}]
  %s17 = inlined_call_operand.vmem [shape: f32[2,1,128], index: 17, kind: input, shape index: {}]
  %s18 = inlined_call_operand.vmem [shape: f32[2,128,32], index: 18, kind: input, shape index: {}]
  %s19 = inlined_call_operand.vmem [shape: f32[2,1,32], index: 19, kind: input, shape index: {}]
  %s20 = inlined_call_operand.vmem [shape: f32[2,1,32], index: 20, kind: input, shape index: {}]
  %s21 = inlined_call_operand.vmem [shape: f32[2,1,32], index: 21, kind: input, shape index: {}]
  %s22 = inlined_call_operand.vmem [shape: f32[1,32], index: 22, kind: input, shape index: {}]
  %s23 = inlined_call_operand.vmem [shape: f32[1,32], index: 23, kind: input, shape index: {}]
  %s24 = inlined_call_operand.vmem [shape: f32[1,128], index: 24, kind: input, shape index: {}]
  %s25 = inlined_call_operand.hbm [shape: f32[32,128], index: 25, kind: output, shape index: {}]
  %s26 = sld [smem:[#allocation0]]
  $region110: #{fast_transformer_forward.1} parent=0
    _
  %s28 = ssub.s32 1, %s26
  %s29 = scalar_select 0, %s28, %s26
  $region1: #{fast_transformer_forward.1} parent=0
    #allocation2 [shape = 'u8[16384]{0}', space=vmem, size = 0x4000, scoped, tag = 'output window, operand 0, single buffered']
    #allocation3 [shape = 's32[1]{0}', space=sflag, size = 0x4, scoped, tag = 'scoped memory for fast_transformer_forward.1']
    %30 = vsyncpa [#allocation3], 0
    // Predicated region
    $region2: #{fast_transformer_forward.1} parent=1 // pred_check
      _
    $region3: #{fast_transformer_forward.1} parent=1 // pred_check_branch
      %32 = sbr.rel (0) target = $region5
    $region4: #{fast_transformer_forward.1} parent=1 // pred_region
      _
    $region5: #{fast_transformer_forward.1} parent=1 // pred_fallthru
      _
    // Predicated region
    $region6: #{fast_transformer_forward.1} parent=1 // pred_check
      _
    $region7: #{fast_transformer_forward.1} parent=1 // pred_check_branch
      %34 = sbr.rel (0) target = $region9
    $region8: #{fast_transformer_forward.1} parent=1 // pred_region
      _
    $region9: #{fast_transformer_forward.1} parent=1 // pred_fallthru
      _
    // Predicated region
    $region10: #{fast_transformer_forward.1} parent=1 // pred_check
      _
    $region11: #{fast_transformer_forward.1} parent=1 // pred_check_branch
      %36 = sbr.rel (0) target = $region13
    $region12: #{fast_transformer_forward.1} parent=1 // pred_region
      _
    $region13: #{fast_transformer_forward.1} parent=1 // pred_fallthru
      _
    // Predicated region
    $region14: #{fast_transformer_forward.1} parent=1 // pred_check
      _
    $region15: #{fast_transformer_forward.1} parent=1 // pred_check_branch
      %38 = sbr.rel (0) target = $region17
    $region16: #{fast_transformer_forward.1} parent=1 // pred_region
      _
    $region17: #{fast_transformer_forward.1} parent=1 // pred_fallthru
      _
    // Predicated region
    $region18: #{fast_transformer_forward.1} parent=1 // pred_check
      _
    $region19: #{fast_transformer_forward.1} parent=1 // pred_check_branch
      %40 = sbr.rel (0) target = $region21
    $region20: #{fast_transformer_forward.1} parent=1 // pred_region
      _
    $region21: #{fast_transformer_forward.1} parent=1 // pred_fallthru
      _
    // Predicated region
    $region22: #{fast_transformer_forward.1} parent=1 // pred_check
      _
    $region23: #{fast_transformer_forward.1} parent=1 // pred_check_branch
      %42 = sbr.rel (0) target = $region25
    $region24: #{fast_transformer_forward.1} parent=1 // pred_region
      _
    $region25: #{fast_transformer_forward.1} parent=1 // pred_fallthru
      _
    // Predicated region
    $region26: #{fast_transformer_forward.1} parent=1 // pred_check
      _
    $region27: #{fast_transformer_forward.1} parent=1 // pred_check_branch
      %44 = sbr.rel (0) target = $region29
    $region28: #{fast_transformer_forward.1} parent=1 // pred_region
      _
    $region29: #{fast_transformer_forward.1} parent=1 // pred_fallthru
      _
    // Predicated region
    $region30: #{fast_transformer_forward.1} parent=1 // pred_check
      _
    $region31: #{fast_transformer_forward.1} parent=1 // pred_check_branch
      %46 = sbr.rel (0) target = $region33
    $region32: #{fast_transformer_forward.1} parent=1 // pred_region
      _
    $region33: #{fast_transformer_forward.1} parent=1 // pred_fallthru
      _
    // Predicated region
    $region34: #{fast_transformer_forward.1} parent=1 // pred_check
      _
    $region35: #{fast_transformer_forward.1} parent=1 // pred_check_branch
      %48 = sbr.rel (0) target = $region37
    $region36: #{fast_transformer_forward.1} parent=1 // pred_region
      _
    $region37: #{fast_transformer_forward.1} parent=1 // pred_fallthru
      _
    // Predicated region
    $region38: #{fast_transformer_forward.1} parent=1 // pred_check
      _
    $region39: #{fast_transformer_forward.1} parent=1 // pred_check_branch
      %50 = sbr.rel (0) target = $region41
    $region40: #{fast_transformer_forward.1} parent=1 // pred_region
      _
    $region41: #{fast_transformer_forward.1} parent=1 // pred_fallthru
      _
    // Predicated region
    $region42: #{fast_transformer_forward.1} parent=1 // pred_check
      _
    $region43: #{fast_transformer_forward.1} parent=1 // pred_check_branch
      %52 = sbr.rel (0) target = $region45
    $region44: #{fast_transformer_forward.1} parent=1 // pred_region
      _
    $region45: #{fast_transformer_forward.1} parent=1 // pred_fallthru
      _
    // Predicated region
    $region46: #{fast_transformer_forward.1} parent=1 // pred_check
      _
    $region47: #{fast_transformer_forward.1} parent=1 // pred_check_branch
      %54 = sbr.rel (0) target = $region49
    $region48: #{fast_transformer_forward.1} parent=1 // pred_region
      _
    $region49: #{fast_transformer_forward.1} parent=1 // pred_fallthru
      _
    // Predicated region
    $region50: #{fast_transformer_forward.1} parent=1 // pred_check
      _
    $region51: #{fast_transformer_forward.1} parent=1 // pred_check_branch
      %56 = sbr.rel (0) target = $region53
    $region52: #{fast_transformer_forward.1} parent=1 // pred_region
      _
    $region53: #{fast_transformer_forward.1} parent=1 // pred_fallthru
      _
    // Predicated region
    $region54: #{fast_transformer_forward.1} parent=1 // pred_check
      _
    $region55: #{fast_transformer_forward.1} parent=1 // pred_check_branch
      %58 = sbr.rel (0) target = $region57
    $region56: #{fast_transformer_forward.1} parent=1 // pred_region
      _
    $region57: #{fast_transformer_forward.1} parent=1 // pred_fallthru
      _
    // Predicated region
    $region58: #{fast_transformer_forward.1} parent=1 // pred_check
      _
    $region59: #{fast_transformer_forward.1} parent=1 // pred_check_branch
      %60 = sbr.rel (0) target = $region61
    $region60: #{fast_transformer_forward.1} parent=1 // pred_region
      _
    $region61: #{fast_transformer_forward.1} parent=1 // pred_fallthru
      _
    // Predicated region
    $region62: #{fast_transformer_forward.1} parent=1 // pred_check
      _
    $region63: #{fast_transformer_forward.1} parent=1 // pred_check_branch
      %62 = sbr.rel (0) target = $region65
    $region64: #{fast_transformer_forward.1} parent=1 // pred_region
      _
    $region65: #{fast_transformer_forward.1} parent=1 // pred_fallthru
      _
    // Predicated region
    $region66: #{fast_transformer_forward.1} parent=1 // pred_check
      _
    $region67: #{fast_transformer_forward.1} parent=1 // pred_check_branch
      %64 = sbr.rel (0) target = $region69
    $region68: #{fast_transformer_forward.1} parent=1 // pred_region
      _
    $region69: #{fast_transformer_forward.1} parent=1 // pred_fallthru
      _
    // Predicated region
    $region70: #{fast_transformer_forward.1} parent=1 // pred_check
      _
    $region71: #{fast_transformer_forward.1} parent=1 // pred_check_branch
      %66 = sbr.rel (0) target = $region73
    $region72: #{fast_transformer_forward.1} parent=1 // pred_region
      _
    $region73: #{fast_transformer_forward.1} parent=1 // pred_fallthru
      _
    // Predicated region
    $region74: #{fast_transformer_forward.1} parent=1 // pred_check
      _
    $region75: #{fast_transformer_forward.1} parent=1 // pred_check_branch
      %68 = sbr.rel (0) target = $region77
    $region76: #{fast_transformer_forward.1} parent=1 // pred_region
      _
    $region77: #{fast_transformer_forward.1} parent=1 // pred_fallthru
      _
    // Predicated region
    $region78: #{fast_transformer_forward.1} parent=1 // pred_check
      _
    $region79: #{fast_transformer_forward.1} parent=1 // pred_check_branch
      %70 = sbr.rel (0) target = $region81
    $region80: #{fast_transformer_forward.1} parent=1 // pred_region
      _
    $region81: #{fast_transformer_forward.1} parent=1 // pred_fallthru
      _
    // Predicated region
    $region82: #{fast_transformer_forward.1} parent=1 // pred_check
      _
    $region83: #{fast_transformer_forward.1} parent=1 // pred_check_branch
      %72 = sbr.rel (0) target = $region85
    $region84: #{fast_transformer_forward.1} parent=1 // pred_region
      _
    $region85: #{fast_transformer_forward.1} parent=1 // pred_fallthru
      _
    // Predicated region
    $region86: #{fast_transformer_forward.1} parent=1 // pred_check
      _
    $region87: #{fast_transformer_forward.1} parent=1 // pred_check_branch
      %74 = sbr.rel (0) target = $region89
    $region88: #{fast_transformer_forward.1} parent=1 // pred_region
      _
    $region89: #{fast_transformer_forward.1} parent=1 // pred_fallthru
      _
    // Predicated region
    $region90: #{fast_transformer_forward.1} parent=1 // pred_check
      _
    $region91: #{fast_transformer_forward.1} parent=1 // pred_check_branch
      %76 = sbr.rel (0) target = $region93
    $region92: #{fast_transformer_forward.1} parent=1 // pred_region
      _
    $region93: #{fast_transformer_forward.1} parent=1 // pred_fallthru
      _
    // Predicated region
    $region94: #{fast_transformer_forward.1} parent=1 // pred_check
      _
    $region95: #{fast_transformer_forward.1} parent=1 // pred_check_branch
      %78 = sbr.rel (0) target = $region97
    $region96: #{fast_transformer_forward.1} parent=1 // pred_region
      _
    $region97: #{fast_transformer_forward.1} parent=1 // pred_fallthru
      _
    // Predicated region
    $region98: #{fast_transformer_forward.1} parent=1 // pred_check
      _
    $region99: #{fast_transformer_forward.1} parent=1 // pred_check_branch
      %80 = sbr.rel (0) target = $region101
    $region100: #{fast_transformer_forward.1} parent=1 // pred_region
      _
    $region101: #{fast_transformer_forward.1} parent=1 // pred_fallthru
      _
    %v82 = vld [vmem:[%s1] sm:$0xff]
    %v83 = vld [vmem:[%s1 + $0x8] sm:$0xff]
    %v84 = vld [vmem:[%s1 + $0x10] sm:$0xff]
    %v85 = vld [vmem:[%s1 + $0x18] sm:$0xff]
    %v86 = vld [vmem:[%s1 + $0x20] sm:$0xff]
    %v87 = vld [vmem:[%s1 + $0x28] sm:$0xff]
    %v88 = vld [vmem:[%s1 + $0x30] sm:$0xff]
    %v89 = vld [vmem:[%s1 + $0x38] sm:$0xff]
    %v90 = vld [vmem:[%s1 + $0x40] sm:$0xff]
    %v91 = vld [vmem:[%s1 + $0x48] sm:$0xff]
    %v92 = vld [vmem:[%s1 + $0x50] sm:$0xff]
    %v93 = vld [vmem:[%s1 + $0x58] sm:$0xff]
    %v94 = vld [vmem:[%s1 + $0x60] sm:$0xff]
    %v95 = vld [vmem:[%s1 + $0x68] sm:$0xff]
    %v96 = vld [vmem:[%s1 + $0x70] sm:$0xff]
    %v97 = vld [vmem:[%s1 + $0x78] sm:$0xff]
    %v98 = vld [vmem:[%s0] sm:$0xff]
    %v99 = vld [vmem:[%s0 + $0x8] sm:$0xff]
    %v100 = vld [vmem:[%s0 + $0x10] sm:$0xff]
    %v101 = vld [vmem:[%s0 + $0x18] sm:$0xff]
    %v102 = vlaneseq
    %v103 = vand.u32 %v102, 127
    %104 = vset.pattern.permute.xlu0 0
    %105 = vperm.xlu0 %104, %v98
    %v106 = vpop.permute.xlu0 %105
    %107 = vset.pattern.permute.xlu0 0
    %108 = vperm.xlu0 %107, %v99
    %v109 = vpop.permute.xlu0 %108
    %110 = vset.pattern.permute.xlu0 0
    %111 = vperm.xlu0 %110, %v100
    %v112 = vpop.permute.xlu0 %111
    %113 = vset.pattern.permute.xlu0 0
    %114 = vperm.xlu0 %113, %v101
    %v115 = vpop.permute.xlu0 %114
    %vm116 = vcmp.eq.s32.totalorder %v103, %v106
    %vm117 = vcmp.eq.s32.totalorder %v103, %v109
    %vm118 = vcmp.eq.s32.totalorder %v103, %v112
    %vm119 = vcmp.eq.s32.totalorder %v103, %v115
    %v120 = vsel %vm116, 1, 0
    %v121 = vsel %vm117, 1, 0
    %v122 = vsel %vm118, 1, 0
    %v123 = vsel %vm119, 1, 0
    %v124 = vcvt.s32.f32 %v120
    %v125 = vcvt.s32.f32 %v121
    %v126 = vcvt.s32.f32 %v122
    %v127 = vcvt.s32.f32 %v123
    %v128 = vpack.c.bf16 %v125, %v124
    %v129 = vpack.c.bf16 %v127, %v126
    %v130 = vpack.c.bf16 %v83, %v82
    %v131 = vpack.c.bf16 %v85, %v84
    %v132 = vpack.c.bf16 %v87, %v86
    %v133 = vpack.c.bf16 %v89, %v88
    %v134 = vpack.c.bf16 %v91, %v90
    %v135 = vpack.c.bf16 %v93, %v92
    %v136 = vpack.c.bf16 %v95, %v94
    %v137 = vpack.c.bf16 %v97, %v96
    %vm138 = vcmp.eq.s32.totalorder %v98, 128
    %vm139 = vcmp.eq.s32.totalorder %v99, 128
    %vm140 = vcmp.eq.s32.totalorder %v100, 128
    %vm141 = vcmp.eq.s32.totalorder %v101, 128
    %v142 = vsel %vm138, 1, 0
    %v143 = vsel %vm139, 1, 0
    %v144 = vsel %vm140, 1, 0
    %v145 = vsel %vm141, 1, 0
    %v146 = vcvt.s32.f32 %v142
    %v147 = vcvt.s32.f32 %v143
    %v148 = vcvt.s32.f32 %v144
    %v149 = vcvt.s32.f32 %v145
    %v150 = vld [vmem:[%s3] sm:$0x1]
    %152 = vset.pattern.permute.xlu0 0
    %153 = vperm.xlu0 %152, %v146
    %v154 = vpop.permute.xlu0 %153
    %157 = vset.pattern.permute.xlu0 0
    %158 = vperm.xlu0 %157, %v147
    %v159 = vpop.permute.xlu0 %158
    %162 = vset.pattern.permute.xlu0 0
    %163 = vperm.xlu0 %162, %v148
    %v164 = vpop.permute.xlu0 %163
    %167 = vset.pattern.permute.xlu0 0
    %168 = vperm.xlu0 %167, %v149
    %v169 = vpop.permute.xlu0 %168
    %v172 = vlaneseq
    %v173 = vshrl.u32 %v172, 7
    %v174 = vsub.s32 0, %v173
    %v175 = vrot.slane %v150, %v174
    %v177 = vmul.f32 %v154, %v175
    %v178 = vmul.f32 %v159, %v175
    %v179 = vmul.f32 %v164, %v175
    %v180 = vmul.f32 %v169, %v175
    %181 = vmatprep.subr.bf16.mxu0 0
    %182 = vmatpush1.bf16.msra.mxu0 %v137
    %183 = vmatprep.subr.bf16.mxu0 0
    %184 = vmatpush1.bf16.msra.mxu0 %v136
    %185 = vmatprep.subr.bf16.mxu0 0
    %186 = vmatpush1.bf16.msra.mxu0 %v135
    %187 = vmatprep.subr.bf16.mxu0 0
    %188 = vmatpush1.bf16.msra.mxu0 %v134
    %189 = vmatprep.subr.bf16.mxu0 0
    %190 = vmatpush1.bf16.msra.mxu0 %v133
    %191 = vmatprep.subr.bf16.mxu0 0
    %192 = vmatpush1.bf16.msra.mxu0 %v132
    %193 = vmatprep.subr.bf16.mxu0 0
    %194 = vmatpush1.bf16.msra.mxu0 %v131
    %195 = vmatprep.subr.bf16.mxu0 0
    %196 = vmatpush1.bf16.msra.mxu0 %v130
    %197 = vmatprep.subr.bf16.mxu0 0
    %198 = vmatpush2.bf16.msra.mxu0 0
    %199 = vmatprep.subr.bf16.mxu0 0
    %200 = vmatpush2.bf16.msra.mxu0 0
    %201 = vmatprep.subr.bf16.mxu0 0
    %202 = vmatpush2.bf16.msra.mxu0 0
    %203 = vmatprep.subr.bf16.mxu0 0
    %204 = vmatpush2.bf16.msra.mxu0 0
    %205 = vmatprep.subr.bf16.mxu0 0
    %206 = vmatpush2.bf16.msra.mxu0 0
    %207 = vmatprep.subr.bf16.mxu0 0
    %208 = vmatpush2.bf16.msra.mxu0 0
    %209 = vmatprep.subr.bf16.mxu0 0
    %210 = vmatpush2.bf16.msra.mxu0 0
    %211 = vmatprep.subr.bf16.mxu0 0
    %212 = vmatpush2.bf16.msra.mxu0 0
    %213 = vmatprep.mubr.bf16.mxu0 0
    %214 = vmatmul.mubr.bf16.gmra.mxu0 %v128
    %v215 = vpop.f32.mrf.mxu0
    %v216 = vadd.f32 %v177, %v215
    %v217 = vpop.f32.mrf.mxu0
    %v218 = vpop.f32.mrf.mxu0
    %v219 = vadd.f32 %v178, %v218
    %v220 = vpop.f32.mrf.mxu0
    %221 = vmatprep.mubr.bf16.mxu0 0
    %222 = vmatmul.mubr.bf16.gmra.mxu0 %v129
    %v223 = vpop.f32.mrf.mxu0
    %v224 = vadd.f32 %v179, %v223
    %v225 = vpop.f32.mrf.mxu0
    %v226 = vpop.f32.mrf.mxu0
    %v227 = vadd.f32 %v180, %v226
    %v228 = vpop.f32.mrf.mxu0
    %229 = vdwg.mxu0
    %v230 = vld [vmem:[%s2] sm:$0xff]
    %v231 = vld [vmem:[%s2 + $0x8] sm:$0xff]
    %v232 = vld [vmem:[%s2 + $0x10] sm:$0xff]
    %v233 = vld [vmem:[%s2 + $0x18] sm:$0xff]
    %v234 = vadd.f32 %v216, %v230
    %v235 = vadd.f32 %v219, %v231
    %v236 = vadd.f32 %v224, %v232
    %v237 = vadd.f32 %v227, %v233
    %v238 = vld [vmem:[%s4] sm:$0xff]
    %v239 = vld [vmem:[%s4 + $0x8] sm:$0xff]
    %v240 = vld [vmem:[%s4 + $0x10] sm:$0xff]
    %v241 = vld [vmem:[%s4 + $0x18] sm:$0xff]
    %v242 = vld [vmem:[%s5] sm:$0xff]
    %v243 = vld [vmem:[%s5 + $0x8] sm:$0xff]
    %v244 = vld [vmem:[%s5 + $0x10] sm:$0xff]
    %v245 = vld [vmem:[%s5 + $0x18] sm:$0xff]
    %v246 = vld [vmem:[%s5 + $0x20] sm:$0xff]
    %v247 = vld [vmem:[%s5 + $0x28] sm:$0xff]
    %v248 = vld [vmem:[%s5 + $0x30] sm:$0xff]
    %v249 = vld [vmem:[%s5 + $0x38] sm:$0xff]
    %v250 = vld [vmem:[%s5 + $0x40] sm:$0xff]
    %v251 = vld [vmem:[%s5 + $0x48] sm:$0xff]
    %v252 = vld [vmem:[%s5 + $0x50] sm:$0xff]
    %v253 = vld [vmem:[%s5 + $0x58] sm:$0xff]
    %v254 = vld [vmem:[%s5 + $0x60] sm:$0xff]
    %v255 = vld [vmem:[%s5 + $0x68] sm:$0xff]
    %v256 = vld [vmem:[%s5 + $0x70] sm:$0xff]
    %v257 = vld [vmem:[%s5 + $0x78] sm:$0xff]
    %v258 = vld [vmem:[%s6] sm:$0xff]
    %v259 = vld [vmem:[%s6 + $0x8] sm:$0xff]
    %v260 = vld [vmem:[%s6 + $0x10] sm:$0xff]
    %v261 = vld [vmem:[%s6 + $0x18] sm:$0xff]
    %v262 = vpack.c.bf16 %v235, %v234
    %v263 = vpack.c.bf16 %v237, %v236
    %v264 = vpack.c.bf16 %v259, %v258
    %v265 = vpack.c.bf16 %v261, %v260
    %v266 = vld [vmem:[%s7] sm:$0x1]
    %v268 = vlaneseq
    %v269 = vshrl.u32 %v268, 7
    %v270 = vsub.s32 0, %v269
    %v271 = vrot.slane %v266, %v270
    %vm273 = vcmask 261120
    %v275 = vsel %vm273, %v262, 0
    %v278 = vsel %vm273, %v263, 0
    %280 = vmatprep.subr.bf16.mxu0 0
    %281 = vmatpush1.bf16.msra.mxu0 0
    %282 = vmatprep.subr.bf16.mxu0 0
    %283 = vmatpush1.bf16.msra.mxu0 0
    %284 = vmatprep.subr.bf16.mxu0 0
    %285 = vmatpush1.bf16.msra.mxu0 0
    %286 = vmatprep.subr.bf16.mxu0 0
    %287 = vmatpush1.bf16.msra.mxu0 0
    %288 = vmatprep.subr.bf16.mxu0 0
    %289 = vmatpush1.bf16.msra.mxu0 0
    %290 = vmatprep.subr.bf16.mxu0 0
    %291 = vmatpush1.bf16.msra.mxu0 0
    %292 = vmatprep.subr.bf16.mxu0 0
    %293 = vmatpush1.bf16.msra.mxu0 %v265
    %294 = vmatprep.subr.bf16.mxu0 0
    %295 = vmatpush1.bf16.msra.mxu0 %v264
    %296 = vmatprep.subr.bf16.mxu0 0
    %297 = vmatpush2.bf16.msra.mxu0 0
    %298 = vmatprep.subr.bf16.mxu0 0
    %299 = vmatpush2.bf16.msra.mxu0 0
    %300 = vmatprep.subr.bf16.mxu0 0
    %301 = vmatpush2.bf16.msra.mxu0 0
    %302 = vmatprep.subr.bf16.mxu0 0
    %303 = vmatpush2.bf16.msra.mxu0 0
    %304 = vmatprep.subr.bf16.mxu0 0
    %305 = vmatpush2.bf16.msra.mxu0 0
    %306 = vmatprep.subr.bf16.mxu0 0
    %307 = vmatpush2.bf16.msra.mxu0 0
    %308 = vmatprep.subr.bf16.mxu0 0
    %309 = vmatpush2.bf16.msra.mxu0 0
    %310 = vmatprep.subr.bf16.mxu0 0
    %311 = vmatpush2.bf16.msra.mxu0 0
    %312 = vmatprep.mubr.bf16.mxu0 0
    %313 = vmatmul.mubr.bf16.gmra.mxu0 %v275
    %v314 = vpop.f32.mrf.mxu0
    %v315 = vadd.f32 %v271, %v314
    %v316 = vpop.f32.mrf.mxu0
    %v317 = vpop.f32.mrf.mxu0
    %v318 = vadd.f32 %v271, %v317
    %v319 = vpop.f32.mrf.mxu0
    %320 = vmatprep.mubr.bf16.mxu0 0
    %321 = vmatmul.mubr.bf16.gmra.mxu0 %v278
    %v322 = vpop.f32.mrf.mxu0
    %v323 = vadd.f32 %v271, %v322
    %v324 = vpop.f32.mrf.mxu0
    %v325 = vpop.f32.mrf.mxu0
    %v326 = vadd.f32 %v271, %v325
    %v327 = vpop.f32.mrf.mxu0
    %328 = vdwg.mxu0
    %v329 = vld [vmem:[%s8] sm:$0xff]
    %v330 = vld [vmem:[%s8 + $0x8] sm:$0xff]
    %v331 = vld [vmem:[%s8 + $0x10] sm:$0xff]
    %v332 = vld [vmem:[%s8 + $0x18] sm:$0xff]
    %v333 = vpack.c.bf16 %v330, %v329
    %v334 = vpack.c.bf16 %v332, %v331
    %v335 = vld [vmem:[%s9] sm:$0x1]
    %v337 = vlaneseq
    %v338 = vshrl.u32 %v337, 7
    %v339 = vsub.s32 0, %v338
    %v340 = vrot.slane %v335, %v339
    %342 = vmatprep.subr.bf16.mxu0 0
    %343 = vmatpush1.bf16.msra.mxu0 0
    %344 = vmatprep.subr.bf16.mxu0 0
    %345 = vmatpush1.bf16.msra.mxu0 0
    %346 = vmatprep.subr.bf16.mxu0 0
    %347 = vmatpush1.bf16.msra.mxu0 0
    %348 = vmatprep.subr.bf16.mxu0 0
    %349 = vmatpush1.bf16.msra.mxu0 0
    %350 = vmatprep.subr.bf16.mxu0 0
    %351 = vmatpush1.bf16.msra.mxu0 0
    %352 = vmatprep.subr.bf16.mxu0 0
    %353 = vmatpush1.bf16.msra.mxu0 0
    %354 = vmatprep.subr.bf16.mxu0 0
    %355 = vmatpush1.bf16.msra.mxu0 %v334
    %356 = vmatprep.subr.bf16.mxu0 0
    %357 = vmatpush1.bf16.msra.mxu0 %v333
    %358 = vmatprep.subr.bf16.mxu0 0
    %359 = vmatpush2.bf16.msra.mxu0 0
    %360 = vmatprep.subr.bf16.mxu0 0
    %361 = vmatpush2.bf16.msra.mxu0 0
    %362 = vmatprep.subr.bf16.mxu0 0
    %363 = vmatpush2.bf16.msra.mxu0 0
    %364 = vmatprep.subr.bf16.mxu0 0
    %365 = vmatpush2.bf16.msra.mxu0 0
    %366 = vmatprep.subr.bf16.mxu0 0
    %367 = vmatpush2.bf16.msra.mxu0 0
    %368 = vmatprep.subr.bf16.mxu0 0
    %369 = vmatpush2.bf16.msra.mxu0 0
    %370 = vmatprep.subr.bf16.mxu0 0
    %371 = vmatpush2.bf16.msra.mxu0 0
    %372 = vmatprep.subr.bf16.mxu0 0
    %373 = vmatpush2.bf16.msra.mxu0 0
    %374 = vmatprep.mubr.bf16.mxu0 0
    %375 = vmatmul.mubr.bf16.gmra.mxu0 %v275
    %v376 = vpop.f32.mrf.mxu0
    %v377 = vadd.f32 %v340, %v376
    %v378 = vpop.f32.mrf.mxu0
    %v379 = vpop.f32.mrf.mxu0
    %v380 = vadd.f32 %v340, %v379
    %v381 = vpop.f32.mrf.mxu0
    %382 = vmatprep.mubr.bf16.mxu0 0
    %383 = vmatmul.mubr.bf16.gmra.mxu0 %v278
    %v384 = vpop.f32.mrf.mxu0
    %v385 = vadd.f32 %v340, %v384
    %v386 = vpop.f32.mrf.mxu0
    %v387 = vpop.f32.mrf.mxu0
    %v388 = vadd.f32 %v340, %v387
    %v389 = vpop.f32.mrf.mxu0
    %390 = vdwg.mxu0
    %v391 = vld [vmem:[%s10] sm:$0xff]
    %v392 = vld [vmem:[%s10 + $0x8] sm:$0xff]
    %v393 = vld [vmem:[%s10 + $0x10] sm:$0xff]
    %v394 = vld [vmem:[%s10 + $0x18] sm:$0xff]
    %v395 = vpack.c.bf16 %v392, %v391
    %v396 = vpack.c.bf16 %v394, %v393
    %v397 = vld [vmem:[%s11] sm:$0x1]
    %v399 = vlaneseq
    %v400 = vshrl.u32 %v399, 7
    %v401 = vsub.s32 0, %v400
    %v402 = vrot.slane %v397, %v401
    %404 = vmatprep.subr.bf16.mxu0 0
    %405 = vmatpush1.bf16.msra.mxu0 0
    %406 = vmatprep.subr.bf16.mxu0 0
    %407 = vmatpush1.bf16.msra.mxu0 0
    %408 = vmatprep.subr.bf16.mxu0 0
    %409 = vmatpush1.bf16.msra.mxu0 0
    %410 = vmatprep.subr.bf16.mxu0 0
    %411 = vmatpush1.bf16.msra.mxu0 0
    %412 = vmatprep.subr.bf16.mxu0 0
    %413 = vmatpush1.bf16.msra.mxu0 0
    %414 = vmatprep.subr.bf16.mxu0 0
    %415 = vmatpush1.bf16.msra.mxu0 0
    %416 = vmatprep.subr.bf16.mxu0 0
    %417 = vmatpush1.bf16.msra.mxu0 %v396
    %418 = vmatprep.subr.bf16.mxu0 0
    %419 = vmatpush1.bf16.msra.mxu0 %v395
    %420 = vmatprep.subr.bf16.mxu0 0
    %421 = vmatpush2.bf16.msra.mxu0 0
    %422 = vmatprep.subr.bf16.mxu0 0
    %423 = vmatpush2.bf16.msra.mxu0 0
    %424 = vmatprep.subr.bf16.mxu0 0
    %425 = vmatpush2.bf16.msra.mxu0 0
    %426 = vmatprep.subr.bf16.mxu0 0
    %427 = vmatpush2.bf16.msra.mxu0 0
    %428 = vmatprep.subr.bf16.mxu0 0
    %429 = vmatpush2.bf16.msra.mxu0 0
    %430 = vmatprep.subr.bf16.mxu0 0
    %431 = vmatpush2.bf16.msra.mxu0 0
    %432 = vmatprep.subr.bf16.mxu0 0
    %433 = vmatpush2.bf16.msra.mxu0 0
    %434 = vmatprep.subr.bf16.mxu0 0
    %435 = vmatpush2.bf16.msra.mxu0 0
    %436 = vmatprep.mubr.bf16.mxu0 0
    %437 = vmatmul.mubr.bf16.gmra.mxu0 %v275
    %v438 = vpop.f32.mrf.mxu0
    %v439 = vadd.f32 %v402, %v438
    %v440 = vpop.f32.mrf.mxu0
    %v441 = vpop.f32.mrf.mxu0
    %v442 = vadd.f32 %v402, %v441
    %v443 = vpop.f32.mrf.mxu0
    %444 = vmatprep.mubr.bf16.mxu0 0
    %445 = vmatmul.mubr.bf16.gmra.mxu0 %v278
    %v446 = vpop.f32.mrf.mxu0
    %v447 = vadd.f32 %v402, %v446
    %v448 = vpop.f32.mrf.mxu0
    %v449 = vpop.f32.mrf.mxu0
    %v450 = vadd.f32 %v402, %v449
    %v451 = vpop.f32.mrf.mxu0
    %452 = vdwg.mxu0
    %v453 = vmul.f32 %v377, %v242
    %v454 = vmul.f32 %v380, %v243
    %v455 = vmul.f32 %v385, %v244
    %v456 = vmul.f32 %v388, %v245
    %v457 = vmul.f32 %v377, %v246
    %v458 = vmul.f32 %v380, %v247
    %v459 = vmul.f32 %v385, %v248
    %v460 = vmul.f32 %v388, %v249
    %v461 = vmul.f32 %v377, %v250
    %v462 = vmul.f32 %v380, %v251
    %v463 = vmul.f32 %v385, %v252
    %v464 = vmul.f32 %v388, %v253
    %v465 = vmul.f32 %v377, %v254
    %v466 = vmul.f32 %v380, %v255
    %v467 = vmul.f32 %v385, %v256
    %v468 = vmul.f32 %v388, %v257
    %v469 = vmul.f32 %v439, %v242
    %v470 = vmul.f32 %v442, %v243
    %v471 = vmul.f32 %v447, %v244
    %v472 = vmul.f32 %v450, %v245
    %v473 = vmul.f32 %v439, %v246
    %v474 = vmul.f32 %v442, %v247
    %v475 = vmul.f32 %v447, %v248
    %v476 = vmul.f32 %v450, %v249
    %v477 = vmul.f32 %v439, %v250
    %v478 = vmul.f32 %v442, %v251
    %v479 = vmul.f32 %v447, %v252
    %v480 = vmul.f32 %v450, %v253
    %v481 = vmul.f32 %v439, %v254
    %v482 = vmul.f32 %v442, %v255
    %v483 = vmul.f32 %v447, %v256
    %v484 = vmul.f32 %v450, %v257
    %v485 = vpack.c.bf16 %v318, %v315
    %v486 = vpack.c.bf16 %v326, %v323
    %v487 = vpack.c.bf16 %v454, %v453
    %v488 = vpack.c.bf16 %v456, %v455
    %v489 = vpack.c.bf16 %v458, %v457
    %v490 = vpack.c.bf16 %v460, %v459
    %v491 = vpack.c.bf16 %v462, %v461
    %v492 = vpack.c.bf16 %v464, %v463
    %v493 = vpack.c.bf16 %v466, %v465
    %v494 = vpack.c.bf16 %v468, %v467
    %v496 = vsel %vm273, %v485, 0
    %v499 = vsel %vm273, %v486, 0
    %v502 = vsel %vm273, %v487, 0
    %v505 = vsel %vm273, %v488, 0
    %v508 = vsel %vm273, %v489, 0
    %v511 = vsel %vm273, %v490, 0
    %v514 = vsel %vm273, %v491, 0
    %v517 = vsel %vm273, %v492, 0
    %v520 = vsel %vm273, %v493, 0
    %v523 = vsel %vm273, %v494, 0
    %525 = vmatprep.subr.bf16.mxu0 0
    %526 = vmatpush1.bf16.xpose.msra.mxu0 %v523
    %527 = vmatprep.subr.bf16.mxu0 0
    %528 = vmatpush1.bf16.xpose.msra.mxu0 %v520
    %529 = vmatprep.subr.bf16.mxu0 0
    %530 = vmatpush1.bf16.xpose.msra.mxu0 %v517
    %531 = vmatprep.subr.bf16.mxu0 0
    %532 = vmatpush1.bf16.xpose.msra.mxu0 %v514
    %533 = vmatprep.subr.bf16.mxu0 0
    %534 = vmatpush1.bf16.xpose.msra.mxu0 %v511
    %535 = vmatprep.subr.bf16.mxu0 0
    %536 = vmatpush1.bf16.xpose.msra.mxu0 %v508
    %537 = vmatprep.subr.bf16.mxu0 0
    %538 = vmatpush1.bf16.xpose.msra.mxu0 %v505
    %539 = vmatprep.subr.bf16.mxu0 0
    %540 = vmatpush1.bf16.xpose.msra.mxu0 %v502
    %541 = vmatprep.subr.bf16.mxu0 0
    %542 = vmatpush2.bf16.xpose.msra.mxu0 0
    %543 = vmatprep.subr.bf16.mxu0 0
    %544 = vmatpush2.bf16.xpose.msra.mxu0 0
    %545 = vmatprep.subr.bf16.mxu0 0
    %546 = vmatpush2.bf16.xpose.msra.mxu0 0
    %547 = vmatprep.subr.bf16.mxu0 0
    %548 = vmatpush2.bf16.xpose.msra.mxu0 0
    %549 = vmatprep.subr.bf16.mxu0 0
    %550 = vmatpush2.bf16.xpose.msra.mxu0 0
    %551 = vmatprep.subr.bf16.mxu0 0
    %552 = vmatpush2.bf16.xpose.msra.mxu0 0
    %553 = vmatprep.subr.bf16.mxu0 0
    %554 = vmatpush2.bf16.xpose.msra.mxu0 0
    %555 = vmatprep.subr.bf16.mxu0 0
    %556 = vmatpush2.bf16.xpose.msra.mxu0 0
    %557 = vmatprep.mubr.bf16.mxu0 0
    %558 = vmatmul.mubr.bf16.gmra.mxu0 %v496
    %v559 = vpop.f32.mrf.mxu0
    %v560 = vadd.f32 %v238, %v559
    %v561 = vpop.f32.mrf.mxu0
    %v562 = vpop.f32.mrf.mxu0
    %v563 = vadd.f32 %v239, %v562
    %v564 = vpop.f32.mrf.mxu0
    %565 = vmatprep.mubr.bf16.mxu0 0
    %566 = vmatmul.mubr.bf16.gmra.mxu0 %v499
    %v567 = vpop.f32.mrf.mxu0
    %v568 = vadd.f32 %v240, %v567
    %v569 = vpop.f32.mrf.mxu0
    %v570 = vpop.f32.mrf.mxu0
    %v571 = vadd.f32 %v241, %v570
    %v572 = vpop.f32.mrf.mxu0
    %573 = vdwg.mxu0
    %574 = vmax.xlane.f32.xlu0 %v560
    %v575 = vpop.xlane.xlu0 %574
    %576 = vmax.xlane.f32.xlu0 %v563
    %v577 = vpop.xlane.xlu0 %576
    %578 = vmax.xlane.f32.xlu0 %v568
    %v579 = vpop.xlane.xlu0 %578
    %580 = vmax.xlane.f32.xlu0 %v571
    %v581 = vpop.xlane.xlu0 %580
    %v582 = vsub.f32 %v560, %v575
    %v583 = vsub.f32 %v563, %v577
    %v584 = vsub.f32 %v568, %v579
    %v585 = vsub.f32 %v571, %v581
    %v586 = vmul.f32 %v582, 1.442695
    %v587 = vpow.pop %v586
    %v588 = vmul.f32 %v583, 1.442695
    %v589 = vpow.pop %v588
    %v590 = vmul.f32 %v584, 1.442695
    %v591 = vpow.pop %v590
    %v592 = vmul.f32 %v585, 1.442695
    %v593 = vpow.pop %v592
    %v594 = vpack.c.bf16 %v589, %v587
    %v595 = vpack.c.bf16 %v593, %v591
    %v596 = vpack.c.bf16 %v470, %v469
    %v597 = vpack.c.bf16 %v472, %v471
    %v598 = vpack.c.bf16 %v474, %v473
    %v599 = vpack.c.bf16 %v476, %v475
    %v600 = vpack.c.bf16 %v478, %v477
    %v601 = vpack.c.bf16 %v480, %v479
    %v602 = vpack.c.bf16 %v482, %v481
    %v603 = vpack.c.bf16 %v484, %v483
    %604 = vmatprep.subr.bf16.mxu0 0
    %605 = vmatpush1.bf16.msra.mxu0 %v603
    %606 = vmatprep.subr.bf16.mxu0 0
    %607 = vmatpush1.bf16.msra.mxu0 %v602
    %608 = vmatprep.subr.bf16.mxu0 0
    %609 = vmatpush1.bf16.msra.mxu0 %v601
    %610 = vmatprep.subr.bf16.mxu0 0
    %611 = vmatpush1.bf16.msra.mxu0 %v600
    %612 = vmatprep.subr.bf16.mxu0 0
    %613 = vmatpush1.bf16.msra.mxu0 %v599
    %614 = vmatprep.subr.bf16.mxu0 0
    %615 = vmatpush1.bf16.msra.mxu0 %v598
    %616 = vmatprep.subr.bf16.mxu0 0
    %617 = vmatpush1.bf16.msra.mxu0 %v597
    %618 = vmatprep.subr.bf16.mxu0 0
    %619 = vmatpush1.bf16.msra.mxu0 %v596
    %620 = vmatprep.subr.bf16.mxu0 0
    %621 = vmatpush2.bf16.msra.mxu0 0
    %622 = vmatprep.subr.bf16.mxu0 0
    %623 = vmatpush2.bf16.msra.mxu0 0
    %624 = vmatprep.subr.bf16.mxu0 0
    %625 = vmatpush2.bf16.msra.mxu0 0
    %626 = vmatprep.subr.bf16.mxu0 0
    %627 = vmatpush2.bf16.msra.mxu0 0
    %628 = vmatprep.subr.bf16.mxu0 0
    %629 = vmatpush2.bf16.msra.mxu0 0
    %630 = vmatprep.subr.bf16.mxu0 0
    %631 = vmatpush2.bf16.msra.mxu0 0
    %632 = vmatprep.subr.bf16.mxu0 0
    %633 = vmatpush2.bf16.msra.mxu0 0
    %634 = vmatprep.subr.bf16.mxu0 0
    %635 = vmatpush2.bf16.msra.mxu0 0
    %636 = vmatprep.mubr.bf16.mxu0 0
    %637 = vmatmul.mubr.bf16.gmra.mxu0 %v594
    %v638 = vpop.f32.mrf.mxu0
    %v639 = vadd.f32 0.0, %v638
    %v640 = vpop.f32.mrf.mxu0
    %v641 = vpop.f32.mrf.mxu0
    %v642 = vadd.f32 0.0, %v641
    %v643 = vpop.f32.mrf.mxu0
    %644 = vmatprep.mubr.bf16.mxu0 0
    %645 = vmatmul.mubr.bf16.gmra.mxu0 %v595
    %v646 = vpop.f32.mrf.mxu0
    %v647 = vadd.f32 0.0, %v646
    %v648 = vpop.f32.mrf.mxu0
    %v649 = vpop.f32.mrf.mxu0
    %v650 = vadd.f32 0.0, %v649
    %v651 = vpop.f32.mrf.mxu0
    %652 = vdwg.mxu0
    %v653 = vpack.c.bf16 %v243, %v242
    %v654 = vpack.c.bf16 %v245, %v244
    %v655 = vpack.c.bf16 %v247, %v246
    %v656 = vpack.c.bf16 %v249, %v248
    %v657 = vpack.c.bf16 %v251, %v250
    %v658 = vpack.c.bf16 %v253, %v252
    %v659 = vpack.c.bf16 %v255, %v254
    %v660 = vpack.c.bf16 %v257, %v256
    %661 = vmatprep.subr.bf16.mxu0 0
    %662 = vmatpush1.bf16.msra.mxu0 %v660
    %663 = vmatprep.subr.bf16.mxu0 0
    %664 = vmatpush1.bf16.msra.mxu0 %v659
    %665 = vmatprep.subr.bf16.mxu0 0
    %666 = vmatpush1.bf16.msra.mxu0 %v658
    %667 = vmatprep.subr.bf16.mxu0 0
    %668 = vmatpush1.bf16.msra.mxu0 %v657
    %669 = vmatprep.subr.bf16.mxu0 0
    %670 = vmatpush1.bf16.msra.mxu0 %v656
    %671 = vmatprep.subr.bf16.mxu0 0
    %672 = vmatpush1.bf16.msra.mxu0 %v655
    %673 = vmatprep.subr.bf16.mxu0 0
    %674 = vmatpush1.bf16.msra.mxu0 %v654
    %675 = vmatprep.subr.bf16.mxu0 0
    %676 = vmatpush1.bf16.msra.mxu0 %v653
    %677 = vmatprep.subr.bf16.mxu0 0
    %678 = vmatpush2.bf16.msra.mxu0 0
    %679 = vmatprep.subr.bf16.mxu0 0
    %680 = vmatpush2.bf16.msra.mxu0 0
    %681 = vmatprep.subr.bf16.mxu0 0
    %682 = vmatpush2.bf16.msra.mxu0 0
    %683 = vmatprep.subr.bf16.mxu0 0
    %684 = vmatpush2.bf16.msra.mxu0 0
    %685 = vmatprep.subr.bf16.mxu0 0
    %686 = vmatpush2.bf16.msra.mxu0 0
    %687 = vmatprep.subr.bf16.mxu0 0
    %688 = vmatpush2.bf16.msra.mxu0 0
    %689 = vmatprep.subr.bf16.mxu0 0
    %690 = vmatpush2.bf16.msra.mxu0 0
    %691 = vmatprep.subr.bf16.mxu0 0
    %692 = vmatpush2.bf16.msra.mxu0 0
    %693 = vmatprep.mubr.bf16.mxu0 0
    %694 = vmatmul.mubr.bf16.gmra.mxu0 %v594
    %v695 = vpop.f32.mrf.mxu0
    %v696 = vadd.f32 0.0, %v695
    %v697 = vpop.f32.mrf.mxu0
    %v698 = vpop.f32.mrf.mxu0
    %v699 = vadd.f32 0.0, %v698
    %v700 = vpop.f32.mrf.mxu0
    %701 = vmatprep.mubr.bf16.mxu0 0
    %702 = vmatmul.mubr.bf16.gmra.mxu0 %v595
    %v703 = vpop.f32.mrf.mxu0
    %v704 = vadd.f32 0.0, %v703
    %v705 = vpop.f32.mrf.mxu0
    %v706 = vpop.f32.mrf.mxu0
    %v707 = vadd.f32 0.0, %v706
    %v708 = vpop.f32.mrf.mxu0
    %709 = vdwg.mxu0
    %v710 = vrcp.pop %v696
    %v711 = vrcp.pop %v699
    %v712 = vrcp.pop %v704
    %v713 = vrcp.pop %v707
    %v714 = vmul.f32 %v639, %v710
    %v715 = vmul.f32 %v642, %v711
    %v716 = vmul.f32 %v647, %v712
    %v717 = vmul.f32 %v650, %v713
    %v718 = vld [vmem:[%s12] sm:$0xff]
    %v719 = vld [vmem:[%s12 + $0x8] sm:$0xff]
    %v720 = vld [vmem:[%s12 + $0x10] sm:$0xff]
    %v721 = vld [vmem:[%s12 + $0x18] sm:$0xff]
    %v722 = vpack.c.bf16 %v715, %v714
    %v723 = vpack.c.bf16 %v717, %v716
    %v724 = vpack.c.bf16 %v719, %v718
    %v725 = vpack.c.bf16 %v721, %v720
    %v726 = vld [vmem:[%s13] sm:$0x1]
    %v728 = vlaneseq
    %v729 = vshrl.u32 %v728, 7
    %v730 = vsub.s32 0, %v729
    %v731 = vrot.slane %v726, %v730
    %v734 = vsel %vm273, %v722, 0
    %v737 = vsel %vm273, %v723, 0
    %739 = vmatprep.subr.bf16.mxu0 0
    %740 = vmatpush1.bf16.msra.mxu0 0
    %741 = vmatprep.subr.bf16.mxu0 0
    %742 = vmatpush1.bf16.msra.mxu0 0
    %743 = vmatprep.subr.bf16.mxu0 0
    %744 = vmatpush1.bf16.msra.mxu0 0
    %745 = vmatprep.subr.bf16.mxu0 0
    %746 = vmatpush1.bf16.msra.mxu0 0
    %747 = vmatprep.subr.bf16.mxu0 0
    %748 = vmatpush1.bf16.msra.mxu0 0
    %749 = vmatprep.subr.bf16.mxu0 0
    %750 = vmatpush1.bf16.msra.mxu0 0
    %751 = vmatprep.subr.bf16.mxu0 0
    %752 = vmatpush1.bf16.msra.mxu0 %v725
    %753 = vmatprep.subr.bf16.mxu0 0
    %754 = vmatpush1.bf16.msra.mxu0 %v724
    %755 = vmatprep.subr.bf16.mxu0 0
    %756 = vmatpush2.bf16.msra.mxu0 0
    %757 = vmatprep.subr.bf16.mxu0 0
    %758 = vmatpush2.bf16.msra.mxu0 0
    %759 = vmatprep.subr.bf16.mxu0 0
    %760 = vmatpush2.bf16.msra.mxu0 0
    %761 = vmatprep.subr.bf16.mxu0 0
    %762 = vmatpush2.bf16.msra.mxu0 0
    %763 = vmatprep.subr.bf16.mxu0 0
    %764 = vmatpush2.bf16.msra.mxu0 0
    %765 = vmatprep.subr.bf16.mxu0 0
    %766 = vmatpush2.bf16.msra.mxu0 0
    %767 = vmatprep.subr.bf16.mxu0 0
    %768 = vmatpush2.bf16.msra.mxu0 0
    %769 = vmatprep.subr.bf16.mxu0 0
    %770 = vmatpush2.bf16.msra.mxu0 0
    %771 = vmatprep.mubr.bf16.mxu0 0
    %772 = vmatmul.mubr.bf16.gmra.mxu0 %v734
    %v773 = vpop.f32.mrf.mxu0
    %v774 = vadd.f32 %v731, %v773
    %v775 = vpop.f32.mrf.mxu0
    %v776 = vpop.f32.mrf.mxu0
    %v777 = vadd.f32 %v731, %v776
    %v778 = vpop.f32.mrf.mxu0
    %779 = vmatprep.mubr.bf16.mxu0 0
    %780 = vmatmul.mubr.bf16.gmra.mxu0 %v737
    %v781 = vpop.f32.mrf.mxu0
    %v782 = vadd.f32 %v731, %v781
    %v783 = vpop.f32.mrf.mxu0
    %v784 = vpop.f32.mrf.mxu0
    %v785 = vadd.f32 %v731, %v784
    %v786 = vpop.f32.mrf.mxu0
    %787 = vdwg.mxu0
    %v788 = vadd.f32 %v234, %v774
    %v789 = vadd.f32 %v235, %v777
    %v790 = vadd.f32 %v236, %v782
    %v791 = vadd.f32 %v237, %v785
    %v792 = vld [vmem:[%s14] sm:$0x1]
    %v793 = vld [vmem:[%s15] sm:$0x1]
    %v794 = vsel %vm273, %v788, 0.0
    %795 = vadd.xlane.f32.xlu0 %v794
    %v796 = vpop.xlane.xlu0 %795
    %v797 = vsel %vm273, %v789, 0.0
    %798 = vadd.xlane.f32.xlu0 %v797
    %v799 = vpop.xlane.xlu0 %798
    %v800 = vsel %vm273, %v790, 0.0
    %801 = vadd.xlane.f32.xlu0 %v800
    %v802 = vpop.xlane.xlu0 %801
    %v803 = vsel %vm273, %v791, 0.0
    %804 = vadd.xlane.f32.xlu0 %v803
    %v805 = vpop.xlane.xlu0 %804
    %v806 = vrcp.pop 32.0
    %v807 = vmul.f32 %v796, %v806
    %v808 = vmul.f32 %v799, %v806
    %v809 = vmul.f32 %v802, %v806
    %v810 = vmul.f32 %v805, %v806
    %v811 = vsub.f32 %v788, %v807
    %v812 = vsub.f32 %v789, %v808
    %v813 = vsub.f32 %v790, %v809
    %v814 = vsub.f32 %v791, %v810
    %v815 = vmul.f32 %v811, %v811
    %v816 = vmul.f32 %v812, %v812
    %v817 = vmul.f32 %v813, %v813
    %v818 = vmul.f32 %v814, %v814
    %v819 = vsel %vm273, %v815, 0.0
    %820 = vadd.xlane.f32.xlu0 %v819
    %v821 = vpop.xlane.xlu0 %820
    %v822 = vsel %vm273, %v816, 0.0
    %823 = vadd.xlane.f32.xlu0 %v822
    %v824 = vpop.xlane.xlu0 %823
    %v825 = vsel %vm273, %v817, 0.0
    %826 = vadd.xlane.f32.xlu0 %v825
    %v827 = vpop.xlane.xlu0 %826
    %v828 = vsel %vm273, %v818, 0.0
    %829 = vadd.xlane.f32.xlu0 %v828
    %v830 = vpop.xlane.xlu0 %829
    %v831 = vmul.f32 %v821, %v806
    %v832 = vmul.f32 %v824, %v806
    %v833 = vmul.f32 %v827, %v806
    %v834 = vmul.f32 %v830, %v806
    %v835 = vadd.f32 %v831, 1e-05
    %v836 = vadd.f32 %v832, 1e-05
    %v837 = vadd.f32 %v833, 1e-05
    %v838 = vadd.f32 %v834, 1e-05
    %v839 = vrsqrt.pop %v835
    %v840 = vrsqrt.pop %v836
    %v841 = vrsqrt.pop %v837
    %v842 = vrsqrt.pop %v838
    %v843 = vmul.f32 %v811, %v839
    %v844 = vmul.f32 %v812, %v840
    %v845 = vmul.f32 %v813, %v841
    %v846 = vmul.f32 %v814, %v842
    %v848 = vlaneseq
    %v849 = vshrl.u32 %v848, 7
    %v850 = vsub.s32 0, %v849
    %v851 = vrot.slane %v792, %v850
    %v853 = vmul.f32 %v843, %v851
    %v854 = vmul.f32 %v844, %v851
    %v855 = vmul.f32 %v845, %v851
    %v856 = vmul.f32 %v846, %v851
    %v858 = vlaneseq
    %v859 = vshrl.u32 %v858, 7
    %v860 = vsub.s32 0, %v859
    %v861 = vrot.slane %v793, %v860
    %v863 = vadd.f32 %v853, %v861
    %v864 = vadd.f32 %v854, %v861
    %v865 = vadd.f32 %v855, %v861
    %v866 = vadd.f32 %v856, %v861
    %v867 = vld [vmem:[%s16] sm:$0xff]
    %v868 = vld [vmem:[%s16 + $0x8] sm:$0xff]
    %v869 = vld [vmem:[%s16 + $0x10] sm:$0xff]
    %v870 = vld [vmem:[%s16 + $0x18] sm:$0xff]
    %v871 = vpack.c.bf16 %v864, %v863
    %v872 = vpack.c.bf16 %v866, %v865
    %v873 = vpack.c.bf16 %v868, %v867
    %v874 = vpack.c.bf16 %v870, %v869
    %v875 = vld [vmem:[%s17] sm:$0x1]
    %v877 = vlaneseq
    %v878 = vshrl.u32 %v877, 7
    %v879 = vsub.s32 0, %v878
    %v880 = vrot.slane %v875, %v879
    %v883 = vsel %vm273, %v871, 0
    %v886 = vsel %vm273, %v872, 0
    %888 = vmatprep.subr.bf16.mxu0 0
    %889 = vmatpush1.bf16.msra.mxu0 0
    %890 = vmatprep.subr.bf16.mxu0 0
    %891 = vmatpush1.bf16.msra.mxu0 0
    %892 = vmatprep.subr.bf16.mxu0 0
    %893 = vmatpush1.bf16.msra.mxu0 0
    %894 = vmatprep.subr.bf16.mxu0 0
    %895 = vmatpush1.bf16.msra.mxu0 0
    %896 = vmatprep.subr.bf16.mxu0 0
    %897 = vmatpush1.bf16.msra.mxu0 0
    %898 = vmatprep.subr.bf16.mxu0 0
    %899 = vmatpush1.bf16.msra.mxu0 0
    %900 = vmatprep.subr.bf16.mxu0 0
    %901 = vmatpush1.bf16.msra.mxu0 %v874
    %902 = vmatprep.subr.bf16.mxu0 0
    %903 = vmatpush1.bf16.msra.mxu0 %v873
    %904 = vmatprep.subr.bf16.mxu0 0
    %905 = vmatpush2.bf16.msra.mxu0 0
    %906 = vmatprep.subr.bf16.mxu0 0
    %907 = vmatpush2.bf16.msra.mxu0 0
    %908 = vmatprep.subr.bf16.mxu0 0
    %909 = vmatpush2.bf16.msra.mxu0 0
    %910 = vmatprep.subr.bf16.mxu0 0
    %911 = vmatpush2.bf16.msra.mxu0 0
    %912 = vmatprep.subr.bf16.mxu0 0
    %913 = vmatpush2.bf16.msra.mxu0 0
    %914 = vmatprep.subr.bf16.mxu0 0
    %915 = vmatpush2.bf16.msra.mxu0 0
    %916 = vmatprep.subr.bf16.mxu0 0
    %917 = vmatpush2.bf16.msra.mxu0 0
    %918 = vmatprep.subr.bf16.mxu0 0
    %919 = vmatpush2.bf16.msra.mxu0 0
    %920 = vmatprep.mubr.bf16.mxu0 0
    %921 = vmatmul.mubr.bf16.gmra.mxu0 %v883
    %v922 = vpop.f32.mrf.mxu0
    %v923 = vadd.f32 %v880, %v922
    %v924 = vpop.f32.mrf.mxu0
    %v925 = vpop.f32.mrf.mxu0
    %v926 = vadd.f32 %v880, %v925
    %v927 = vpop.f32.mrf.mxu0
    %928 = vmatprep.mubr.bf16.mxu0 0
    %929 = vmatmul.mubr.bf16.gmra.mxu0 %v886
    %v930 = vpop.f32.mrf.mxu0
    %v931 = vadd.f32 %v880, %v930
    %v932 = vpop.f32.mrf.mxu0
    %v933 = vpop.f32.mrf.mxu0
    %v934 = vadd.f32 %v880, %v933
    %v935 = vpop.f32.mrf.mxu0
    %936 = vdwg.mxu0
    %v937 = vmax.f32 %v923, 0.0
    %v938 = vmax.f32 %v926, 0.0
    %v939 = vmax.f32 %v931, 0.0
    %v940 = vmax.f32 %v934, 0.0
    %v941 = vld [vmem:[%s18] sm:$0xff]
    %v942 = vld [vmem:[%s18 + $0x8] sm:$0xff]
    %v943 = vld [vmem:[%s18 + $0x10] sm:$0xff]
    %v944 = vld [vmem:[%s18 + $0x18] sm:$0xff]
    %v945 = vld [vmem:[%s18 + $0x20] sm:$0xff]
    %v946 = vld [vmem:[%s18 + $0x28] sm:$0xff]
    %v947 = vld [vmem:[%s18 + $0x30] sm:$0xff]
    %v948 = vld [vmem:[%s18 + $0x38] sm:$0xff]
    %v949 = vld [vmem:[%s18 + $0x40] sm:$0xff]
    %v950 = vld [vmem:[%s18 + $0x48] sm:$0xff]
    %v951 = vld [vmem:[%s18 + $0x50] sm:$0xff]
    %v952 = vld [vmem:[%s18 + $0x58] sm:$0xff]
    %v953 = vld [vmem:[%s18 + $0x60] sm:$0xff]
    %v954 = vld [vmem:[%s18 + $0x68] sm:$0xff]
    %v955 = vld [vmem:[%s18 + $0x70] sm:$0xff]
    %v956 = vld [vmem:[%s18 + $0x78] sm:$0xff]
    %v957 = vpack.c.bf16 %v938, %v937
    %v958 = vpack.c.bf16 %v940, %v939
    %v959 = vpack.c.bf16 %v942, %v941
    %v960 = vpack.c.bf16 %v944, %v943
    %v961 = vpack.c.bf16 %v946, %v945
    %v962 = vpack.c.bf16 %v948, %v947
    %v963 = vpack.c.bf16 %v950, %v949
    %v964 = vpack.c.bf16 %v952, %v951
    %v965 = vpack.c.bf16 %v954, %v953
    %v966 = vpack.c.bf16 %v956, %v955
    %v967 = vld [vmem:[%s19] sm:$0x1]
    %v969 = vlaneseq
    %v970 = vshrl.u32 %v969, 7
    %v971 = vsub.s32 0, %v970
    %v972 = vrot.slane %v967, %v971
    %974 = vmatprep.subr.bf16.mxu0 0
    %975 = vmatpush1.bf16.msra.mxu0 %v966
    %976 = vmatprep.subr.bf16.mxu0 0
    %977 = vmatpush1.bf16.msra.mxu0 %v965
    %978 = vmatprep.subr.bf16.mxu0 0
    %979 = vmatpush1.bf16.msra.mxu0 %v964
    %980 = vmatprep.subr.bf16.mxu0 0
    %981 = vmatpush1.bf16.msra.mxu0 %v963
    %982 = vmatprep.subr.bf16.mxu0 0
    %983 = vmatpush1.bf16.msra.mxu0 %v962
    %984 = vmatprep.subr.bf16.mxu0 0
    %985 = vmatpush1.bf16.msra.mxu0 %v961
    %986 = vmatprep.subr.bf16.mxu0 0
    %987 = vmatpush1.bf16.msra.mxu0 %v960
    %988 = vmatprep.subr.bf16.mxu0 0
    %989 = vmatpush1.bf16.msra.mxu0 %v959
    %990 = vmatprep.subr.bf16.mxu0 0
    %991 = vmatpush2.bf16.msra.mxu0 0
    %992 = vmatprep.subr.bf16.mxu0 0
    %993 = vmatpush2.bf16.msra.mxu0 0
    %994 = vmatprep.subr.bf16.mxu0 0
    %995 = vmatpush2.bf16.msra.mxu0 0
    %996 = vmatprep.subr.bf16.mxu0 0
    %997 = vmatpush2.bf16.msra.mxu0 0
    %998 = vmatprep.subr.bf16.mxu0 0
    %999 = vmatpush2.bf16.msra.mxu0 0
    %1000 = vmatprep.subr.bf16.mxu0 0
    %1001 = vmatpush2.bf16.msra.mxu0 0
    %1002 = vmatprep.subr.bf16.mxu0 0
    %1003 = vmatpush2.bf16.msra.mxu0 0
    %1004 = vmatprep.subr.bf16.mxu0 0
    %1005 = vmatpush2.bf16.msra.mxu0 0
    %1006 = vmatprep.mubr.bf16.mxu0 0
    %1007 = vmatmul.mubr.bf16.gmra.mxu0 %v957
    %v1008 = vpop.f32.mrf.mxu0
    %v1009 = vadd.f32 %v972, %v1008
    %v1010 = vpop.f32.mrf.mxu0
    %v1011 = vpop.f32.mrf.mxu0
    %v1012 = vadd.f32 %v972, %v1011
    %v1013 = vpop.f32.mrf.mxu0
    %1014 = vmatprep.mubr.bf16.mxu0 0
    %1015 = vmatmul.mubr.bf16.gmra.mxu0 %v958
    %v1016 = vpop.f32.mrf.mxu0
    %v1017 = vadd.f32 %v972, %v1016
    %v1018 = vpop.f32.mrf.mxu0
    %v1019 = vpop.f32.mrf.mxu0
    %v1020 = vadd.f32 %v972, %v1019
    %v1021 = vpop.f32.mrf.mxu0
    %1022 = vdwg.mxu0
    %v1023 = vadd.f32 %v863, %v1009
    %v1024 = vadd.f32 %v864, %v1012
    %v1025 = vadd.f32 %v865, %v1017
    %v1026 = vadd.f32 %v866, %v1020
    %v1027 = vld [vmem:[%s20] sm:$0x1]
    %v1028 = vld [vmem:[%s21] sm:$0x1]
    %v1029 = vsel %vm273, %v1023, 0.0
    %1030 = vadd.xlane.f32.xlu0 %v1029
    %v1031 = vpop.xlane.xlu0 %1030
    %v1032 = vsel %vm273, %v1024, 0.0
    %1033 = vadd.xlane.f32.xlu0 %v1032
    %v1034 = vpop.xlane.xlu0 %1033
    %v1035 = vsel %vm273, %v1025, 0.0
    %1036 = vadd.xlane.f32.xlu0 %v1035
    %v1037 = vpop.xlane.xlu0 %1036
    %v1038 = vsel %vm273, %v1026, 0.0
    %1039 = vadd.xlane.f32.xlu0 %v1038
    %v1040 = vpop.xlane.xlu0 %1039
    %v1041 = vmul.f32 %v1031, %v806
    %v1042 = vmul.f32 %v1034, %v806
    %v1043 = vmul.f32 %v1037, %v806
    %v1044 = vmul.f32 %v1040, %v806
    %v1045 = vsub.f32 %v1023, %v1041
    %v1046 = vsub.f32 %v1024, %v1042
    %v1047 = vsub.f32 %v1025, %v1043
    %v1048 = vsub.f32 %v1026, %v1044
    %v1049 = vmul.f32 %v1045, %v1045
    %v1050 = vmul.f32 %v1046, %v1046
    %v1051 = vmul.f32 %v1047, %v1047
    %v1052 = vmul.f32 %v1048, %v1048
    %v1053 = vsel %vm273, %v1049, 0.0
    %1054 = vadd.xlane.f32.xlu0 %v1053
    %v1055 = vpop.xlane.xlu0 %1054
    %v1056 = vsel %vm273, %v1050, 0.0
    %1057 = vadd.xlane.f32.xlu0 %v1056
    %v1058 = vpop.xlane.xlu0 %1057
    %v1059 = vsel %vm273, %v1051, 0.0
    %1060 = vadd.xlane.f32.xlu0 %v1059
    %v1061 = vpop.xlane.xlu0 %1060
    %v1062 = vsel %vm273, %v1052, 0.0
    %1063 = vadd.xlane.f32.xlu0 %v1062
    %v1064 = vpop.xlane.xlu0 %1063
    %v1065 = vmul.f32 %v1055, %v806
    %v1066 = vmul.f32 %v1058, %v806
    %v1067 = vmul.f32 %v1061, %v806
    %v1068 = vmul.f32 %v1064, %v806
    %v1069 = vadd.f32 %v1065, 1e-05
    %v1070 = vadd.f32 %v1066, 1e-05
    %v1071 = vadd.f32 %v1067, 1e-05
    %v1072 = vadd.f32 %v1068, 1e-05
    %v1073 = vrsqrt.pop %v1069
    %v1074 = vrsqrt.pop %v1070
    %v1075 = vrsqrt.pop %v1071
    %v1076 = vrsqrt.pop %v1072
    %v1077 = vmul.f32 %v1045, %v1073
    %v1078 = vmul.f32 %v1046, %v1074
    %v1079 = vmul.f32 %v1047, %v1075
    %v1080 = vmul.f32 %v1048, %v1076
    %v1082 = vlaneseq
    %v1083 = vshrl.u32 %v1082, 7
    %v1084 = vsub.s32 0, %v1083
    %v1085 = vrot.slane %v1027, %v1084
    %v1087 = vmul.f32 %v1077, %v1085
    %v1088 = vmul.f32 %v1078, %v1085
    %v1089 = vmul.f32 %v1079, %v1085
    %v1090 = vmul.f32 %v1080, %v1085
    %v1092 = vlaneseq
    %v1093 = vshrl.u32 %v1092, 7
    %v1094 = vsub.s32 0, %v1093
    %v1095 = vrot.slane %v1028, %v1094
    %v1097 = vadd.f32 %v1087, %v1095
    %v1098 = vadd.f32 %v1088, %v1095
    %v1099 = vadd.f32 %v1089, %v1095
    %v1100 = vadd.f32 %v1090, %v1095
    %s1101 = scalar_lea.vmem %s6, 32
    %v1102 = vld [vmem:[%s1101] sm:$0xff]
    %v1103 = vld [vmem:[%s1101 + $0x8] sm:$0xff]
    %v1104 = vld [vmem:[%s1101 + $0x10] sm:$0xff]
    %v1105 = vld [vmem:[%s1101 + $0x18] sm:$0xff]
    %v1106 = vpack.c.bf16 %v1098, %v1097
    %v1107 = vpack.c.bf16 %v1100, %v1099
    %v1108 = vpack.c.bf16 %v1103, %v1102
    %v1109 = vpack.c.bf16 %v1105, %v1104
    %s1110 = scalar_lea.vmem %s7, 1
    %v1111 = vld [vmem:[%s1110] sm:$0x1]
    %v1113 = vlaneseq
    %v1114 = vshrl.u32 %v1113, 7
    %v1115 = vsub.s32 0, %v1114
    %v1116 = vrot.slane %v1111, %v1115
    %v1119 = vsel %vm273, %v1106, 0
    %v1122 = vsel %vm273, %v1107, 0
    %1124 = vmatprep.subr.bf16.mxu0 0
    %1125 = vmatpush1.bf16.msra.mxu0 0
    %1126 = vmatprep.subr.bf16.mxu0 0
    %1127 = vmatpush1.bf16.msra.mxu0 0
    %1128 = vmatprep.subr.bf16.mxu0 0
    %1129 = vmatpush1.bf16.msra.mxu0 0
    %1130 = vmatprep.subr.bf16.mxu0 0
    %1131 = vmatpush1.bf16.msra.mxu0 0
    %1132 = vmatprep.subr.bf16.mxu0 0
    %1133 = vmatpush1.bf16.msra.mxu0 0
    %1134 = vmatprep.subr.bf16.mxu0 0
    %1135 = vmatpush1.bf16.msra.mxu0 0
    %1136 = vmatprep.subr.bf16.mxu0 0
    %1137 = vmatpush1.bf16.msra.mxu0 %v1109
    %1138 = vmatprep.subr.bf16.mxu0 0
    %1139 = vmatpush1.bf16.msra.mxu0 %v1108
    %1140 = vmatprep.subr.bf16.mxu0 0
    %1141 = vmatpush2.bf16.msra.mxu0 0
    %1142 = vmatprep.subr.bf16.mxu0 0
    %1143 = vmatpush2.bf16.msra.mxu0 0
    %1144 = vmatprep.subr.bf16.mxu0 0
    %1145 = vmatpush2.bf16.msra.mxu0 0
    %1146 = vmatprep.subr.bf16.mxu0 0
    %1147 = vmatpush2.bf16.msra.mxu0 0
    %1148 = vmatprep.subr.bf16.mxu0 0
    %1149 = vmatpush2.bf16.msra.mxu0 0
    %1150 = vmatprep.subr.bf16.mxu0 0
    %1151 = vmatpush2.bf16.msra.mxu0 0
    %1152 = vmatprep.subr.bf16.mxu0 0
    %1153 = vmatpush2.bf16.msra.mxu0 0
    %1154 = vmatprep.subr.bf16.mxu0 0
    %1155 = vmatpush2.bf16.msra.mxu0 0
    %1156 = vmatprep.mubr.bf16.mxu0 0
    %1157 = vmatmul.mubr.bf16.gmra.mxu0 %v1119
    %v1158 = vpop.f32.mrf.mxu0
    %v1159 = vadd.f32 %v1116, %v1158
    %v1160 = vpop.f32.mrf.mxu0
    %v1161 = vpop.f32.mrf.mxu0
    %v1162 = vadd.f32 %v1116, %v1161
    %v1163 = vpop.f32.mrf.mxu0
    %1164 = vmatprep.mubr.bf16.mxu0 0
    %1165 = vmatmul.mubr.bf16.gmra.mxu0 %v1122
    %v1166 = vpop.f32.mrf.mxu0
    %v1167 = vadd.f32 %v1116, %v1166
    %v1168 = vpop.f32.mrf.mxu0
    %v1169 = vpop.f32.mrf.mxu0
    %v1170 = vadd.f32 %v1116, %v1169
    %v1171 = vpop.f32.mrf.mxu0
    %1172 = vdwg.mxu0
    %s1173 = scalar_lea.vmem %s8, 32
    %v1174 = vld [vmem:[%s1173] sm:$0xff]
    %v1175 = vld [vmem:[%s1173 + $0x8] sm:$0xff]
    %v1176 = vld [vmem:[%s1173 + $0x10] sm:$0xff]
    %v1177 = vld [vmem:[%s1173 + $0x18] sm:$0xff]
    %v1178 = vpack.c.bf16 %v1175, %v1174
    %v1179 = vpack.c.bf16 %v1177, %v1176
    %s1180 = scalar_lea.vmem %s9, 1
    %v1181 = vld [vmem:[%s1180] sm:$0x1]
    %v1183 = vlaneseq
    %v1184 = vshrl.u32 %v1183, 7
    %v1185 = vsub.s32 0, %v1184
    %v1186 = vrot.slane %v1181, %v1185
    %1188 = vmatprep.subr.bf16.mxu0 0
    %1189 = vmatpush1.bf16.msra.mxu0 0
    %1190 = vmatprep.subr.bf16.mxu0 0
    %1191 = vmatpush1.bf16.msra.mxu0 0
    %1192 = vmatprep.subr.bf16.mxu0 0
    %1193 = vmatpush1.bf16.msra.mxu0 0
    %1194 = vmatprep.subr.bf16.mxu0 0
    %1195 = vmatpush1.bf16.msra.mxu0 0
    %1196 = vmatprep.subr.bf16.mxu0 0
    %1197 = vmatpush1.bf16.msra.mxu0 0
    %1198 = vmatprep.subr.bf16.mxu0 0
    %1199 = vmatpush1.bf16.msra.mxu0 0
    %1200 = vmatprep.subr.bf16.mxu0 0
    %1201 = vmatpush1.bf16.msra.mxu0 %v1179
    %1202 = vmatprep.subr.bf16.mxu0 0
    %1203 = vmatpush1.bf16.msra.mxu0 %v1178
    %1204 = vmatprep.subr.bf16.mxu0 0
    %1205 = vmatpush2.bf16.msra.mxu0 0
    %1206 = vmatprep.subr.bf16.mxu0 0
    %1207 = vmatpush2.bf16.msra.mxu0 0
    %1208 = vmatprep.subr.bf16.mxu0 0
    %1209 = vmatpush2.bf16.msra.mxu0 0
    %1210 = vmatprep.subr.bf16.mxu0 0
    %1211 = vmatpush2.bf16.msra.mxu0 0
    %1212 = vmatprep.subr.bf16.mxu0 0
    %1213 = vmatpush2.bf16.msra.mxu0 0
    %1214 = vmatprep.subr.bf16.mxu0 0
    %1215 = vmatpush2.bf16.msra.mxu0 0
    %1216 = vmatprep.subr.bf16.mxu0 0
    %1217 = vmatpush2.bf16.msra.mxu0 0
    %1218 = vmatprep.subr.bf16.mxu0 0
    %1219 = vmatpush2.bf16.msra.mxu0 0
    %1220 = vmatprep.mubr.bf16.mxu0 0
    %1221 = vmatmul.mubr.bf16.gmra.mxu0 %v1119
    %v1222 = vpop.f32.mrf.mxu0
    %v1223 = vadd.f32 %v1186, %v1222
    %v1224 = vpop.f32.mrf.mxu0
    %v1225 = vpop.f32.mrf.mxu0
    %v1226 = vadd.f32 %v1186, %v1225
    %v1227 = vpop.f32.mrf.mxu0
    %1228 = vmatprep.mubr.bf16.mxu0 0
    %1229 = vmatmul.mubr.bf16.gmra.mxu0 %v1122
    %v1230 = vpop.f32.mrf.mxu0
    %v1231 = vadd.f32 %v1186, %v1230
    %v1232 = vpop.f32.mrf.mxu0
    %v1233 = vpop.f32.mrf.mxu0
    %v1234 = vadd.f32 %v1186, %v1233
    %v1235 = vpop.f32.mrf.mxu0
    %1236 = vdwg.mxu0
    %s1237 = scalar_lea.vmem %s10, 32
    %v1238 = vld [vmem:[%s1237] sm:$0xff]
    %v1239 = vld [vmem:[%s1237 + $0x8] sm:$0xff]
    %v1240 = vld [vmem:[%s1237 + $0x10] sm:$0xff]
    %v1241 = vld [vmem:[%s1237 + $0x18] sm:$0xff]
    %v1242 = vpack.c.bf16 %v1239, %v1238
    %v1243 = vpack.c.bf16 %v1241, %v1240
    %s1244 = scalar_lea.vmem %s11, 1
    %v1245 = vld [vmem:[%s1244] sm:$0x1]
    %v1247 = vlaneseq
    %v1248 = vshrl.u32 %v1247, 7
    %v1249 = vsub.s32 0, %v1248
    %v1250 = vrot.slane %v1245, %v1249
    %1252 = vmatprep.subr.bf16.mxu0 0
    %1253 = vmatpush1.bf16.msra.mxu0 0
    %1254 = vmatprep.subr.bf16.mxu0 0
    %1255 = vmatpush1.bf16.msra.mxu0 0
    %1256 = vmatprep.subr.bf16.mxu0 0
    %1257 = vmatpush1.bf16.msra.mxu0 0
    %1258 = vmatprep.subr.bf16.mxu0 0
    %1259 = vmatpush1.bf16.msra.mxu0 0
    %1260 = vmatprep.subr.bf16.mxu0 0
    %1261 = vmatpush1.bf16.msra.mxu0 0
    %1262 = vmatprep.subr.bf16.mxu0 0
    %1263 = vmatpush1.bf16.msra.mxu0 0
    %1264 = vmatprep.subr.bf16.mxu0 0
    %1265 = vmatpush1.bf16.msra.mxu0 %v1243
    %1266 = vmatprep.subr.bf16.mxu0 0
    %1267 = vmatpush1.bf16.msra.mxu0 %v1242
    %1268 = vmatprep.subr.bf16.mxu0 0
    %1269 = vmatpush2.bf16.msra.mxu0 0
    %1270 = vmatprep.subr.bf16.mxu0 0
    %1271 = vmatpush2.bf16.msra.mxu0 0
    %1272 = vmatprep.subr.bf16.mxu0 0
    %1273 = vmatpush2.bf16.msra.mxu0 0
    %1274 = vmatprep.subr.bf16.mxu0 0
    %1275 = vmatpush2.bf16.msra.mxu0 0
    %1276 = vmatprep.subr.bf16.mxu0 0
    %1277 = vmatpush2.bf16.msra.mxu0 0
    %1278 = vmatprep.subr.bf16.mxu0 0
    %1279 = vmatpush2.bf16.msra.mxu0 0
    %1280 = vmatprep.subr.bf16.mxu0 0
    %1281 = vmatpush2.bf16.msra.mxu0 0
    %1282 = vmatprep.subr.bf16.mxu0 0
    %1283 = vmatpush2.bf16.msra.mxu0 0
    %1284 = vmatprep.mubr.bf16.mxu0 0
    %1285 = vmatmul.mubr.bf16.gmra.mxu0 %v1119
    %v1286 = vpop.f32.mrf.mxu0
    %v1287 = vadd.f32 %v1250, %v1286
    %v1288 = vpop.f32.mrf.mxu0
    %v1289 = vpop.f32.mrf.mxu0
    %v1290 = vadd.f32 %v1250, %v1289
    %v1291 = vpop.f32.mrf.mxu0
    %1292 = vmatprep.mubr.bf16.mxu0 0
    %1293 = vmatmul.mubr.bf16.gmra.mxu0 %v1122
    %v1294 = vpop.f32.mrf.mxu0
    %v1295 = vadd.f32 %v1250, %v1294
    %v1296 = vpop.f32.mrf.mxu0
    %v1297 = vpop.f32.mrf.mxu0
    %v1298 = vadd.f32 %v1250, %v1297
    %v1299 = vpop.f32.mrf.mxu0
    %1300 = vdwg.mxu0
    %v1301 = vmul.f32 %v1223, %v242
    %v1302 = vmul.f32 %v1226, %v243
    %v1303 = vmul.f32 %v1231, %v244
    %v1304 = vmul.f32 %v1234, %v245
    %v1305 = vmul.f32 %v1223, %v246
    %v1306 = vmul.f32 %v1226, %v247
    %v1307 = vmul.f32 %v1231, %v248
    %v1308 = vmul.f32 %v1234, %v249
    %v1309 = vmul.f32 %v1223, %v250
    %v1310 = vmul.f32 %v1226, %v251
    %v1311 = vmul.f32 %v1231, %v252
    %v1312 = vmul.f32 %v1234, %v253
    %v1313 = vmul.f32 %v1223, %v254
    %v1314 = vmul.f32 %v1226, %v255
    %v1315 = vmul.f32 %v1231, %v256
    %v1316 = vmul.f32 %v1234, %v257
    %v1317 = vmul.f32 %v1287, %v242
    %v1318 = vmul.f32 %v1290, %v243
    %v1319 = vmul.f32 %v1295, %v244
    %v1320 = vmul.f32 %v1298, %v245
    %v1321 = vmul.f32 %v1287, %v246
    %v1322 = vmul.f32 %v1290, %v247
    %v1323 = vmul.f32 %v1295, %v248
    %v1324 = vmul.f32 %v1298, %v249
    %v1325 = vmul.f32 %v1287, %v250
    %v1326 = vmul.f32 %v1290, %v251
    %v1327 = vmul.f32 %v1295, %v252
    %v1328 = vmul.f32 %v1298, %v253
    %v1329 = vmul.f32 %v1287, %v254
    %v1330 = vmul.f32 %v1290, %v255
    %v1331 = vmul.f32 %v1295, %v256
    %v1332 = vmul.f32 %v1298, %v257
    %v1333 = vpack.c.bf16 %v1162, %v1159
    %v1334 = vpack.c.bf16 %v1170, %v1167
    %v1335 = vpack.c.bf16 %v1302, %v1301
    %v1336 = vpack.c.bf16 %v1304, %v1303
    %v1337 = vpack.c.bf16 %v1306, %v1305
    %v1338 = vpack.c.bf16 %v1308, %v1307
    %v1339 = vpack.c.bf16 %v1310, %v1309
    %v1340 = vpack.c.bf16 %v1312, %v1311
    %v1341 = vpack.c.bf16 %v1314, %v1313
    %v1342 = vpack.c.bf16 %v1316, %v1315
    %v1344 = vsel %vm273, %v1333, 0
    %v1347 = vsel %vm273, %v1334, 0
    %v1350 = vsel %vm273, %v1335, 0
    %v1353 = vsel %vm273, %v1336, 0
    %v1356 = vsel %vm273, %v1337, 0
    %v1359 = vsel %vm273, %v1338, 0
    %v1362 = vsel %vm273, %v1339, 0
    %v1365 = vsel %vm273, %v1340, 0
    %v1368 = vsel %vm273, %v1341, 0
    %v1371 = vsel %vm273, %v1342, 0
    %1373 = vmatprep.subr.bf16.mxu0 0
    %1374 = vmatpush1.bf16.xpose.msra.mxu0 %v1371
    %1375 = vmatprep.subr.bf16.mxu0 0
    %1376 = vmatpush1.bf16.xpose.msra.mxu0 %v1368
    %1377 = vmatprep.subr.bf16.mxu0 0
    %1378 = vmatpush1.bf16.xpose.msra.mxu0 %v1365
    %1379 = vmatprep.subr.bf16.mxu0 0
    %1380 = vmatpush1.bf16.xpose.msra.mxu0 %v1362
    %1381 = vmatprep.subr.bf16.mxu0 0
    %1382 = vmatpush1.bf16.xpose.msra.mxu0 %v1359
    %1383 = vmatprep.subr.bf16.mxu0 0
    %1384 = vmatpush1.bf16.xpose.msra.mxu0 %v1356
    %1385 = vmatprep.subr.bf16.mxu0 0
    %1386 = vmatpush1.bf16.xpose.msra.mxu0 %v1353
    %1387 = vmatprep.subr.bf16.mxu0 0
    %1388 = vmatpush1.bf16.xpose.msra.mxu0 %v1350
    %1389 = vmatprep.subr.bf16.mxu0 0
    %1390 = vmatpush2.bf16.xpose.msra.mxu0 0
    %1391 = vmatprep.subr.bf16.mxu0 0
    %1392 = vmatpush2.bf16.xpose.msra.mxu0 0
    %1393 = vmatprep.subr.bf16.mxu0 0
    %1394 = vmatpush2.bf16.xpose.msra.mxu0 0
    %1395 = vmatprep.subr.bf16.mxu0 0
    %1396 = vmatpush2.bf16.xpose.msra.mxu0 0
    %1397 = vmatprep.subr.bf16.mxu0 0
    %1398 = vmatpush2.bf16.xpose.msra.mxu0 0
    %1399 = vmatprep.subr.bf16.mxu0 0
    %1400 = vmatpush2.bf16.xpose.msra.mxu0 0
    %1401 = vmatprep.subr.bf16.mxu0 0
    %1402 = vmatpush2.bf16.xpose.msra.mxu0 0
    %1403 = vmatprep.subr.bf16.mxu0 0
    %1404 = vmatpush2.bf16.xpose.msra.mxu0 0
    %1405 = vmatprep.mubr.bf16.mxu0 0
    %1406 = vmatmul.mubr.bf16.gmra.mxu0 %v1344
    %v1407 = vpop.f32.mrf.mxu0
    %v1408 = vadd.f32 %v238, %v1407
    %v1409 = vpop.f32.mrf.mxu0
    %v1410 = vpop.f32.mrf.mxu0
    %v1411 = vadd.f32 %v239, %v1410
    %v1412 = vpop.f32.mrf.mxu0
    %1413 = vmatprep.mubr.bf16.mxu0 0
    %1414 = vmatmul.mubr.bf16.gmra.mxu0 %v1347
    %v1415 = vpop.f32.mrf.mxu0
    %v1416 = vadd.f32 %v240, %v1415
    %v1417 = vpop.f32.mrf.mxu0
    %v1418 = vpop.f32.mrf.mxu0
    %v1419 = vadd.f32 %v241, %v1418
    %v1420 = vpop.f32.mrf.mxu0
    %1421 = vdwg.mxu0
    %1422 = vmax.xlane.f32.xlu0 %v1408
    %v1423 = vpop.xlane.xlu0 %1422
    %1424 = vmax.xlane.f32.xlu0 %v1411
    %v1425 = vpop.xlane.xlu0 %1424
    %1426 = vmax.xlane.f32.xlu0 %v1416
    %v1427 = vpop.xlane.xlu0 %1426
    %1428 = vmax.xlane.f32.xlu0 %v1419
    %v1429 = vpop.xlane.xlu0 %1428
    %v1430 = vsub.f32 %v1408, %v1423
    %v1431 = vsub.f32 %v1411, %v1425
    %v1432 = vsub.f32 %v1416, %v1427
    %v1433 = vsub.f32 %v1419, %v1429
    %v1434 = vmul.f32 %v1430, 1.442695
    %v1435 = vpow.pop %v1434
    %v1436 = vmul.f32 %v1431, 1.442695
    %v1437 = vpow.pop %v1436
    %v1438 = vmul.f32 %v1432, 1.442695
    %v1439 = vpow.pop %v1438
    %v1440 = vmul.f32 %v1433, 1.442695
    %v1441 = vpow.pop %v1440
    %v1442 = vpack.c.bf16 %v1437, %v1435
    %v1443 = vpack.c.bf16 %v1441, %v1439
    %v1444 = vpack.c.bf16 %v1318, %v1317
    %v1445 = vpack.c.bf16 %v1320, %v1319
    %v1446 = vpack.c.bf16 %v1322, %v1321
    %v1447 = vpack.c.bf16 %v1324, %v1323
    %v1448 = vpack.c.bf16 %v1326, %v1325
    %v1449 = vpack.c.bf16 %v1328, %v1327
    %v1450 = vpack.c.bf16 %v1330, %v1329
    %v1451 = vpack.c.bf16 %v1332, %v1331
    %1452 = vmatprep.subr.bf16.mxu0 0
    %1453 = vmatpush1.bf16.msra.mxu0 %v1451
    %1454 = vmatprep.subr.bf16.mxu0 0
    %1455 = vmatpush1.bf16.msra.mxu0 %v1450
    %1456 = vmatprep.subr.bf16.mxu0 0
    %1457 = vmatpush1.bf16.msra.mxu0 %v1449
    %1458 = vmatprep.subr.bf16.mxu0 0
    %1459 = vmatpush1.bf16.msra.mxu0 %v1448
    %1460 = vmatprep.subr.bf16.mxu0 0
    %1461 = vmatpush1.bf16.msra.mxu0 %v1447
    %1462 = vmatprep.subr.bf16.mxu0 0
    %1463 = vmatpush1.bf16.msra.mxu0 %v1446
    %1464 = vmatprep.subr.bf16.mxu0 0
    %1465 = vmatpush1.bf16.msra.mxu0 %v1445
    %1466 = vmatprep.subr.bf16.mxu0 0
    %1467 = vmatpush1.bf16.msra.mxu0 %v1444
    %1468 = vmatprep.subr.bf16.mxu0 0
    %1469 = vmatpush2.bf16.msra.mxu0 0
    %1470 = vmatprep.subr.bf16.mxu0 0
    %1471 = vmatpush2.bf16.msra.mxu0 0
    %1472 = vmatprep.subr.bf16.mxu0 0
    %1473 = vmatpush2.bf16.msra.mxu0 0
    %1474 = vmatprep.subr.bf16.mxu0 0
    %1475 = vmatpush2.bf16.msra.mxu0 0
    %1476 = vmatprep.subr.bf16.mxu0 0
    %1477 = vmatpush2.bf16.msra.mxu0 0
    %1478 = vmatprep.subr.bf16.mxu0 0
    %1479 = vmatpush2.bf16.msra.mxu0 0
    %1480 = vmatprep.subr.bf16.mxu0 0
    %1481 = vmatpush2.bf16.msra.mxu0 0
    %1482 = vmatprep.subr.bf16.mxu0 0
    %1483 = vmatpush2.bf16.msra.mxu0 0
    %1484 = vmatprep.mubr.bf16.mxu0 0
    %1485 = vmatmul.mubr.bf16.gmra.mxu0 %v1442
    %v1486 = vpop.f32.mrf.mxu0
    %v1487 = vadd.f32 0.0, %v1486
    %v1488 = vpop.f32.mrf.mxu0
    %v1489 = vpop.f32.mrf.mxu0
    %v1490 = vadd.f32 0.0, %v1489
    %v1491 = vpop.f32.mrf.mxu0
    %1492 = vmatprep.mubr.bf16.mxu0 0
    %1493 = vmatmul.mubr.bf16.gmra.mxu0 %v1443
    %v1494 = vpop.f32.mrf.mxu0
    %v1495 = vadd.f32 0.0, %v1494
    %v1496 = vpop.f32.mrf.mxu0
    %v1497 = vpop.f32.mrf.mxu0
    %v1498 = vadd.f32 0.0, %v1497
    %v1499 = vpop.f32.mrf.mxu0
    %1500 = vdwg.mxu0
    %1501 = vmatprep.subr.bf16.mxu0 0
    %1502 = vmatpush1.bf16.msra.mxu0 %v660
    %1503 = vmatprep.subr.bf16.mxu0 0
    %1504 = vmatpush1.bf16.msra.mxu0 %v659
    %1505 = vmatprep.subr.bf16.mxu0 0
    %1506 = vmatpush1.bf16.msra.mxu0 %v658
    %1507 = vmatprep.subr.bf16.mxu0 0
    %1508 = vmatpush1.bf16.msra.mxu0 %v657
    %1509 = vmatprep.subr.bf16.mxu0 0
    %1510 = vmatpush1.bf16.msra.mxu0 %v656
    %1511 = vmatprep.subr.bf16.mxu0 0
    %1512 = vmatpush1.bf16.msra.mxu0 %v655
    %1513 = vmatprep.subr.bf16.mxu0 0
    %1514 = vmatpush1.bf16.msra.mxu0 %v654
    %1515 = vmatprep.subr.bf16.mxu0 0
    %1516 = vmatpush1.bf16.msra.mxu0 %v653
    %1517 = vmatprep.subr.bf16.mxu0 0
    %1518 = vmatpush2.bf16.msra.mxu0 0
    %1519 = vmatprep.subr.bf16.mxu0 0
    %1520 = vmatpush2.bf16.msra.mxu0 0
    %1521 = vmatprep.subr.bf16.mxu0 0
    %1522 = vmatpush2.bf16.msra.mxu0 0
    %1523 = vmatprep.subr.bf16.mxu0 0
    %1524 = vmatpush2.bf16.msra.mxu0 0
    %1525 = vmatprep.subr.bf16.mxu0 0
    %1526 = vmatpush2.bf16.msra.mxu0 0
    %1527 = vmatprep.subr.bf16.mxu0 0
    %1528 = vmatpush2.bf16.msra.mxu0 0
    %1529 = vmatprep.subr.bf16.mxu0 0
    %1530 = vmatpush2.bf16.msra.mxu0 0
    %1531 = vmatprep.subr.bf16.mxu0 0
    %1532 = vmatpush2.bf16.msra.mxu0 0
    %1533 = vmatprep.mubr.bf16.mxu0 0
    %1534 = vmatmul.mubr.bf16.gmra.mxu0 %v1442
    %v1535 = vpop.f32.mrf.mxu0
    %v1536 = vadd.f32 0.0, %v1535
    %v1537 = vpop.f32.mrf.mxu0
    %v1538 = vpop.f32.mrf.mxu0
    %v1539 = vadd.f32 0.0, %v1538
    %v1540 = vpop.f32.mrf.mxu0
    %1541 = vmatprep.mubr.bf16.mxu0 0
    %1542 = vmatmul.mubr.bf16.gmra.mxu0 %v1443
    %v1543 = vpop.f32.mrf.mxu0
    %v1544 = vadd.f32 0.0, %v1543
    %v1545 = vpop.f32.mrf.mxu0
    %v1546 = vpop.f32.mrf.mxu0
    %v1547 = vadd.f32 0.0, %v1546
    %v1548 = vpop.f32.mrf.mxu0
    %1549 = vdwg.mxu0
    %v1550 = vrcp.pop %v1536
    %v1551 = vrcp.pop %v1539
    %v1552 = vrcp.pop %v1544
    %v1553 = vrcp.pop %v1547
    %v1554 = vmul.f32 %v1487, %v1550
    %v1555 = vmul.f32 %v1490, %v1551
    %v1556 = vmul.f32 %v1495, %v1552
    %v1557 = vmul.f32 %v1498, %v1553
    %s1558 = scalar_lea.vmem %s12, 32
    %v1559 = vld [vmem:[%s1558] sm:$0xff]
    %v1560 = vld [vmem:[%s1558 + $0x8] sm:$0xff]
    %v1561 = vld [vmem:[%s1558 + $0x10] sm:$0xff]
    %v1562 = vld [vmem:[%s1558 + $0x18] sm:$0xff]
    %v1563 = vpack.c.bf16 %v1555, %v1554
    %v1564 = vpack.c.bf16 %v1557, %v1556
    %v1565 = vpack.c.bf16 %v1560, %v1559
    %v1566 = vpack.c.bf16 %v1562, %v1561
    %s1567 = scalar_lea.vmem %s13, 1
    %v1568 = vld [vmem:[%s1567] sm:$0x1]
    %v1570 = vlaneseq
    %v1571 = vshrl.u32 %v1570, 7
    %v1572 = vsub.s32 0, %v1571
    %v1573 = vrot.slane %v1568, %v1572
    %v1576 = vsel %vm273, %v1563, 0
    %v1579 = vsel %vm273, %v1564, 0
    %1581 = vmatprep.subr.bf16.mxu0 0
    %1582 = vmatpush1.bf16.msra.mxu0 0
    %1583 = vmatprep.subr.bf16.mxu0 0
    %1584 = vmatpush1.bf16.msra.mxu0 0
    %1585 = vmatprep.subr.bf16.mxu0 0
    %1586 = vmatpush1.bf16.msra.mxu0 0
    %1587 = vmatprep.subr.bf16.mxu0 0
    %1588 = vmatpush1.bf16.msra.mxu0 0
    %1589 = vmatprep.subr.bf16.mxu0 0
    %1590 = vmatpush1.bf16.msra.mxu0 0
    %1591 = vmatprep.subr.bf16.mxu0 0
    %1592 = vmatpush1.bf16.msra.mxu0 0
    %1593 = vmatprep.subr.bf16.mxu0 0
    %1594 = vmatpush1.bf16.msra.mxu0 %v1566
    %1595 = vmatprep.subr.bf16.mxu0 0
    %1596 = vmatpush1.bf16.msra.mxu0 %v1565
    %1597 = vmatprep.subr.bf16.mxu0 0
    %1598 = vmatpush2.bf16.msra.mxu0 0
    %1599 = vmatprep.subr.bf16.mxu0 0
    %1600 = vmatpush2.bf16.msra.mxu0 0
    %1601 = vmatprep.subr.bf16.mxu0 0
    %1602 = vmatpush2.bf16.msra.mxu0 0
    %1603 = vmatprep.subr.bf16.mxu0 0
    %1604 = vmatpush2.bf16.msra.mxu0 0
    %1605 = vmatprep.subr.bf16.mxu0 0
    %1606 = vmatpush2.bf16.msra.mxu0 0
    %1607 = vmatprep.subr.bf16.mxu0 0
    %1608 = vmatpush2.bf16.msra.mxu0 0
    %1609 = vmatprep.subr.bf16.mxu0 0
    %1610 = vmatpush2.bf16.msra.mxu0 0
    %1611 = vmatprep.subr.bf16.mxu0 0
    %1612 = vmatpush2.bf16.msra.mxu0 0
    %1613 = vmatprep.mubr.bf16.mxu0 0
    %1614 = vmatmul.mubr.bf16.gmra.mxu0 %v1576
    %v1615 = vpop.f32.mrf.mxu0
    %v1616 = vadd.f32 %v1573, %v1615
    %v1617 = vpop.f32.mrf.mxu0
    %v1618 = vpop.f32.mrf.mxu0
    %v1619 = vadd.f32 %v1573, %v1618
    %v1620 = vpop.f32.mrf.mxu0
    %1621 = vmatprep.mubr.bf16.mxu0 0
    %1622 = vmatmul.mubr.bf16.gmra.mxu0 %v1579
    %v1623 = vpop.f32.mrf.mxu0
    %v1624 = vadd.f32 %v1573, %v1623
    %v1625 = vpop.f32.mrf.mxu0
    %v1626 = vpop.f32.mrf.mxu0
    %v1627 = vadd.f32 %v1573, %v1626
    %v1628 = vpop.f32.mrf.mxu0
    %1629 = vdwg.mxu0
    %v1630 = vadd.f32 %v1097, %v1616
    %v1631 = vadd.f32 %v1098, %v1619
    %v1632 = vadd.f32 %v1099, %v1624
    %v1633 = vadd.f32 %v1100, %v1627
    %s1634 = scalar_lea.vmem %s14, 1
    %v1635 = vld [vmem:[%s1634] sm:$0x1]
    %s1636 = scalar_lea.vmem %s15, 1
    %v1637 = vld [vmem:[%s1636] sm:$0x1]
    %v1638 = vsel %vm273, %v1630, 0.0
    %1639 = vadd.xlane.f32.xlu0 %v1638
    %v1640 = vpop.xlane.xlu0 %1639
    %v1641 = vsel %vm273, %v1631, 0.0
    %1642 = vadd.xlane.f32.xlu0 %v1641
    %v1643 = vpop.xlane.xlu0 %1642
    %v1644 = vsel %vm273, %v1632, 0.0
    %1645 = vadd.xlane.f32.xlu0 %v1644
    %v1646 = vpop.xlane.xlu0 %1645
    %v1647 = vsel %vm273, %v1633, 0.0
    %1648 = vadd.xlane.f32.xlu0 %v1647
    %v1649 = vpop.xlane.xlu0 %1648
    %v1650 = vmul.f32 %v1640, %v806
    %v1651 = vmul.f32 %v1643, %v806
    %v1652 = vmul.f32 %v1646, %v806
    %v1653 = vmul.f32 %v1649, %v806
    %v1654 = vsub.f32 %v1630, %v1650
    %v1655 = vsub.f32 %v1631, %v1651
    %v1656 = vsub.f32 %v1632, %v1652
    %v1657 = vsub.f32 %v1633, %v1653
    %v1658 = vmul.f32 %v1654, %v1654
    %v1659 = vmul.f32 %v1655, %v1655
    %v1660 = vmul.f32 %v1656, %v1656
    %v1661 = vmul.f32 %v1657, %v1657
    %v1662 = vsel %vm273, %v1658, 0.0
    %1663 = vadd.xlane.f32.xlu0 %v1662
    %v1664 = vpop.xlane.xlu0 %1663
    %v1665 = vsel %vm273, %v1659, 0.0
    %1666 = vadd.xlane.f32.xlu0 %v1665
    %v1667 = vpop.xlane.xlu0 %1666
    %v1668 = vsel %vm273, %v1660, 0.0
    %1669 = vadd.xlane.f32.xlu0 %v1668
    %v1670 = vpop.xlane.xlu0 %1669
    %v1671 = vsel %vm273, %v1661, 0.0
    %1672 = vadd.xlane.f32.xlu0 %v1671
    %v1673 = vpop.xlane.xlu0 %1672
    %v1674 = vmul.f32 %v1664, %v806
    %v1675 = vmul.f32 %v1667, %v806
    %v1676 = vmul.f32 %v1670, %v806
    %v1677 = vmul.f32 %v1673, %v806
    %v1678 = vadd.f32 %v1674, 1e-05
    %v1679 = vadd.f32 %v1675, 1e-05
    %v1680 = vadd.f32 %v1676, 1e-05
    %v1681 = vadd.f32 %v1677, 1e-05
    %v1682 = vrsqrt.pop %v1678
    %v1683 = vrsqrt.pop %v1679
    %v1684 = vrsqrt.pop %v1680
    %v1685 = vrsqrt.pop %v1681
    %v1686 = vmul.f32 %v1654, %v1682
    %v1687 = vmul.f32 %v1655, %v1683
    %v1688 = vmul.f32 %v1656, %v1684
    %v1689 = vmul.f32 %v1657, %v1685
    %v1691 = vlaneseq
    %v1692 = vshrl.u32 %v1691, 7
    %v1693 = vsub.s32 0, %v1692
    %v1694 = vrot.slane %v1635, %v1693
    %v1696 = vmul.f32 %v1686, %v1694
    %v1697 = vmul.f32 %v1687, %v1694
    %v1698 = vmul.f32 %v1688, %v1694
    %v1699 = vmul.f32 %v1689, %v1694
    %v1701 = vlaneseq
    %v1702 = vshrl.u32 %v1701, 7
    %v1703 = vsub.s32 0, %v1702
    %v1704 = vrot.slane %v1637, %v1703
    %v1706 = vadd.f32 %v1696, %v1704
    %v1707 = vadd.f32 %v1697, %v1704
    %v1708 = vadd.f32 %v1698, %v1704
    %v1709 = vadd.f32 %v1699, %v1704
    %s1710 = scalar_lea.vmem %s16, 32
    %v1711 = vld [vmem:[%s1710] sm:$0xff]
    %v1712 = vld [vmem:[%s1710 + $0x8] sm:$0xff]
    %v1713 = vld [vmem:[%s1710 + $0x10] sm:$0xff]
    %v1714 = vld [vmem:[%s1710 + $0x18] sm:$0xff]
    %v1715 = vpack.c.bf16 %v1707, %v1706
    %v1716 = vpack.c.bf16 %v1709, %v1708
    %v1717 = vpack.c.bf16 %v1712, %v1711
    %v1718 = vpack.c.bf16 %v1714, %v1713
    %s1719 = scalar_lea.vmem %s17, 1
    %v1720 = vld [vmem:[%s1719] sm:$0x1]
    %v1722 = vlaneseq
    %v1723 = vshrl.u32 %v1722, 7
    %v1724 = vsub.s32 0, %v1723
    %v1725 = vrot.slane %v1720, %v1724
    %v1728 = vsel %vm273, %v1715, 0
    %v1731 = vsel %vm273, %v1716, 0
    %1733 = vmatprep.subr.bf16.mxu0 0
    %1734 = vmatpush1.bf16.msra.mxu0 0
    %1735 = vmatprep.subr.bf16.mxu0 0
    %1736 = vmatpush1.bf16.msra.mxu0 0
    %1737 = vmatprep.subr.bf16.mxu0 0
    %1738 = vmatpush1.bf16.msra.mxu0 0
    %1739 = vmatprep.subr.bf16.mxu0 0
    %1740 = vmatpush1.bf16.msra.mxu0 0
    %1741 = vmatprep.subr.bf16.mxu0 0
    %1742 = vmatpush1.bf16.msra.mxu0 0
    %1743 = vmatprep.subr.bf16.mxu0 0
    %1744 = vmatpush1.bf16.msra.mxu0 0
    %1745 = vmatprep.subr.bf16.mxu0 0
    %1746 = vmatpush1.bf16.msra.mxu0 %v1718
    %1747 = vmatprep.subr.bf16.mxu0 0
    %1748 = vmatpush1.bf16.msra.mxu0 %v1717
    %1749 = vmatprep.subr.bf16.mxu0 0
    %1750 = vmatpush2.bf16.msra.mxu0 0
    %1751 = vmatprep.subr.bf16.mxu0 0
    %1752 = vmatpush2.bf16.msra.mxu0 0
    %1753 = vmatprep.subr.bf16.mxu0 0
    %1754 = vmatpush2.bf16.msra.mxu0 0
    %1755 = vmatprep.subr.bf16.mxu0 0
    %1756 = vmatpush2.bf16.msra.mxu0 0
    %1757 = vmatprep.subr.bf16.mxu0 0
    %1758 = vmatpush2.bf16.msra.mxu0 0
    %1759 = vmatprep.subr.bf16.mxu0 0
    %1760 = vmatpush2.bf16.msra.mxu0 0
    %1761 = vmatprep.subr.bf16.mxu0 0
    %1762 = vmatpush2.bf16.msra.mxu0 0
    %1763 = vmatprep.subr.bf16.mxu0 0
    %1764 = vmatpush2.bf16.msra.mxu0 0
    %1765 = vmatprep.mubr.bf16.mxu0 0
    %1766 = vmatmul.mubr.bf16.gmra.mxu0 %v1728
    %v1767 = vpop.f32.mrf.mxu0
    %v1768 = vadd.f32 %v1725, %v1767
    %v1769 = vpop.f32.mrf.mxu0
    %v1770 = vpop.f32.mrf.mxu0
    %v1771 = vadd.f32 %v1725, %v1770
    %v1772 = vpop.f32.mrf.mxu0
    %1773 = vmatprep.mubr.bf16.mxu0 0
    %1774 = vmatmul.mubr.bf16.gmra.mxu0 %v1731
    %v1775 = vpop.f32.mrf.mxu0
    %v1776 = vadd.f32 %v1725, %v1775
    %v1777 = vpop.f32.mrf.mxu0
    %v1778 = vpop.f32.mrf.mxu0
    %v1779 = vadd.f32 %v1725, %v1778
    %v1780 = vpop.f32.mrf.mxu0
    %1781 = vdwg.mxu0
    %v1782 = vmax.f32 %v1768, 0.0
    %v1783 = vmax.f32 %v1771, 0.0
    %v1784 = vmax.f32 %v1776, 0.0
    %v1785 = vmax.f32 %v1779, 0.0
    %s1786 = scalar_lea.vmem %s18, 128
    %v1787 = vld [vmem:[%s1786] sm:$0xff]
    %v1788 = vld [vmem:[%s1786 + $0x8] sm:$0xff]
    %v1789 = vld [vmem:[%s1786 + $0x10] sm:$0xff]
    %v1790 = vld [vmem:[%s1786 + $0x18] sm:$0xff]
    %v1791 = vld [vmem:[%s1786 + $0x20] sm:$0xff]
    %v1792 = vld [vmem:[%s1786 + $0x28] sm:$0xff]
    %v1793 = vld [vmem:[%s1786 + $0x30] sm:$0xff]
    %v1794 = vld [vmem:[%s1786 + $0x38] sm:$0xff]
    %v1795 = vld [vmem:[%s1786 + $0x40] sm:$0xff]
    %v1796 = vld [vmem:[%s1786 + $0x48] sm:$0xff]
    %v1797 = vld [vmem:[%s1786 + $0x50] sm:$0xff]
    %v1798 = vld [vmem:[%s1786 + $0x58] sm:$0xff]
    %v1799 = vld [vmem:[%s1786 + $0x60] sm:$0xff]
    %v1800 = vld [vmem:[%s1786 + $0x68] sm:$0xff]
    %v1801 = vld [vmem:[%s1786 + $0x70] sm:$0xff]
    %v1802 = vld [vmem:[%s1786 + $0x78] sm:$0xff]
    %v1803 = vpack.c.bf16 %v1783, %v1782
    %v1804 = vpack.c.bf16 %v1785, %v1784
    %v1805 = vpack.c.bf16 %v1788, %v1787
    %v1806 = vpack.c.bf16 %v1790, %v1789
    %v1807 = vpack.c.bf16 %v1792, %v1791
    %v1808 = vpack.c.bf16 %v1794, %v1793
    %v1809 = vpack.c.bf16 %v1796, %v1795
    %v1810 = vpack.c.bf16 %v1798, %v1797
    %v1811 = vpack.c.bf16 %v1800, %v1799
    %v1812 = vpack.c.bf16 %v1802, %v1801
    %s1813 = scalar_lea.vmem %s19, 1
    %v1814 = vld [vmem:[%s1813] sm:$0x1]
    %v1816 = vlaneseq
    %v1817 = vshrl.u32 %v1816, 7
    %v1818 = vsub.s32 0, %v1817
    %v1819 = vrot.slane %v1814, %v1818
    %1821 = vmatprep.subr.bf16.mxu0 0
    %1822 = vmatpush1.bf16.msra.mxu0 %v1812
    %1823 = vmatprep.subr.bf16.mxu0 0
    %1824 = vmatpush1.bf16.msra.mxu0 %v1811
    %1825 = vmatprep.subr.bf16.mxu0 0
    %1826 = vmatpush1.bf16.msra.mxu0 %v1810
    %1827 = vmatprep.subr.bf16.mxu0 0
    %1828 = vmatpush1.bf16.msra.mxu0 %v1809
    %1829 = vmatprep.subr.bf16.mxu0 0
    %1830 = vmatpush1.bf16.msra.mxu0 %v1808
    %1831 = vmatprep.subr.bf16.mxu0 0
    %1832 = vmatpush1.bf16.msra.mxu0 %v1807
    %1833 = vmatprep.subr.bf16.mxu0 0
    %1834 = vmatpush1.bf16.msra.mxu0 %v1806
    %1835 = vmatprep.subr.bf16.mxu0 0
    %1836 = vmatpush1.bf16.msra.mxu0 %v1805
    %1837 = vmatprep.subr.bf16.mxu0 0
    %1838 = vmatpush2.bf16.msra.mxu0 0
    %1839 = vmatprep.subr.bf16.mxu0 0
    %1840 = vmatpush2.bf16.msra.mxu0 0
    %1841 = vmatprep.subr.bf16.mxu0 0
    %1842 = vmatpush2.bf16.msra.mxu0 0
    %1843 = vmatprep.subr.bf16.mxu0 0
    %1844 = vmatpush2.bf16.msra.mxu0 0
    %1845 = vmatprep.subr.bf16.mxu0 0
    %1846 = vmatpush2.bf16.msra.mxu0 0
    %1847 = vmatprep.subr.bf16.mxu0 0
    %1848 = vmatpush2.bf16.msra.mxu0 0
    %1849 = vmatprep.subr.bf16.mxu0 0
    %1850 = vmatpush2.bf16.msra.mxu0 0
    %1851 = vmatprep.subr.bf16.mxu0 0
    %1852 = vmatpush2.bf16.msra.mxu0 0
    %1853 = vmatprep.mubr.bf16.mxu0 0
    %1854 = vmatmul.mubr.bf16.gmra.mxu0 %v1803
    %v1855 = vpop.f32.mrf.mxu0
    %v1856 = vadd.f32 %v1819, %v1855
    %v1857 = vpop.f32.mrf.mxu0
    %v1858 = vpop.f32.mrf.mxu0
    %v1859 = vadd.f32 %v1819, %v1858
    %v1860 = vpop.f32.mrf.mxu0
    %1861 = vmatprep.mubr.bf16.mxu0 0
    %1862 = vmatmul.mubr.bf16.gmra.mxu0 %v1804
    %v1863 = vpop.f32.mrf.mxu0
    %v1864 = vadd.f32 %v1819, %v1863
    %v1865 = vpop.f32.mrf.mxu0
    %v1866 = vpop.f32.mrf.mxu0
    %v1867 = vadd.f32 %v1819, %v1866
    %v1868 = vpop.f32.mrf.mxu0
    %1869 = vdwg.mxu0
    %v1870 = vadd.f32 %v1706, %v1856
    %v1871 = vadd.f32 %v1707, %v1859
    %v1872 = vadd.f32 %v1708, %v1864
    %v1873 = vadd.f32 %v1709, %v1867
    %s1874 = scalar_lea.vmem %s20, 1
    %v1875 = vld [vmem:[%s1874] sm:$0x1]
    %s1876 = scalar_lea.vmem %s21, 1
    %v1877 = vld [vmem:[%s1876] sm:$0x1]
    %v1878 = vsel %vm273, %v1870, 0.0
    %1879 = vadd.xlane.f32.xlu0 %v1878
    %v1880 = vpop.xlane.xlu0 %1879
    %v1881 = vsel %vm273, %v1871, 0.0
    %1882 = vadd.xlane.f32.xlu0 %v1881
    %v1883 = vpop.xlane.xlu0 %1882
    %v1884 = vsel %vm273, %v1872, 0.0
    %1885 = vadd.xlane.f32.xlu0 %v1884
    %v1886 = vpop.xlane.xlu0 %1885
    %v1887 = vsel %vm273, %v1873, 0.0
    %1888 = vadd.xlane.f32.xlu0 %v1887
    %v1889 = vpop.xlane.xlu0 %1888
    %v1890 = vmul.f32 %v1880, %v806
    %v1891 = vmul.f32 %v1883, %v806
    %v1892 = vmul.f32 %v1886, %v806
    %v1893 = vmul.f32 %v1889, %v806
    %v1894 = vsub.f32 %v1870, %v1890
    %v1895 = vsub.f32 %v1871, %v1891
    %v1896 = vsub.f32 %v1872, %v1892
    %v1897 = vsub.f32 %v1873, %v1893
    %v1898 = vmul.f32 %v1894, %v1894
    %v1899 = vmul.f32 %v1895, %v1895
    %v1900 = vmul.f32 %v1896, %v1896
    %v1901 = vmul.f32 %v1897, %v1897
    %v1902 = vsel %vm273, %v1898, 0.0
    %1903 = vadd.xlane.f32.xlu0 %v1902
    %v1904 = vpop.xlane.xlu0 %1903
    %v1905 = vsel %vm273, %v1899, 0.0
    %1906 = vadd.xlane.f32.xlu0 %v1905
    %v1907 = vpop.xlane.xlu0 %1906
    %v1908 = vsel %vm273, %v1900, 0.0
    %1909 = vadd.xlane.f32.xlu0 %v1908
    %v1910 = vpop.xlane.xlu0 %1909
    %v1911 = vsel %vm273, %v1901, 0.0
    %1912 = vadd.xlane.f32.xlu0 %v1911
    %v1913 = vpop.xlane.xlu0 %1912
    %v1914 = vmul.f32 %v1904, %v806
    %v1915 = vmul.f32 %v1907, %v806
    %v1916 = vmul.f32 %v1910, %v806
    %v1917 = vmul.f32 %v1913, %v806
    %v1918 = vadd.f32 %v1914, 1e-05
    %v1919 = vadd.f32 %v1915, 1e-05
    %v1920 = vadd.f32 %v1916, 1e-05
    %v1921 = vadd.f32 %v1917, 1e-05
    %v1922 = vrsqrt.pop %v1918
    %v1923 = vrsqrt.pop %v1919
    %v1924 = vrsqrt.pop %v1920
    %v1925 = vrsqrt.pop %v1921
    %v1926 = vmul.f32 %v1894, %v1922
    %v1927 = vmul.f32 %v1895, %v1923
    %v1928 = vmul.f32 %v1896, %v1924
    %v1929 = vmul.f32 %v1897, %v1925
    %v1931 = vlaneseq
    %v1932 = vshrl.u32 %v1931, 7
    %v1933 = vsub.s32 0, %v1932
    %v1934 = vrot.slane %v1875, %v1933
    %v1936 = vmul.f32 %v1926, %v1934
    %v1937 = vmul.f32 %v1927, %v1934
    %v1938 = vmul.f32 %v1928, %v1934
    %v1939 = vmul.f32 %v1929, %v1934
    %v1941 = vlaneseq
    %v1942 = vshrl.u32 %v1941, 7
    %v1943 = vsub.s32 0, %v1942
    %v1944 = vrot.slane %v1877, %v1943
    %v1946 = vadd.f32 %v1936, %v1944
    %v1947 = vadd.f32 %v1937, %v1944
    %v1948 = vadd.f32 %v1938, %v1944
    %v1949 = vadd.f32 %v1939, %v1944
    %v1950 = vld [vmem:[%s22] sm:$0x1]
    %v1951 = vld [vmem:[%s23] sm:$0x1]
    %v1952 = vsel %vm273, %v1946, 0.0
    %1953 = vadd.xlane.f32.xlu0 %v1952
    %v1954 = vpop.xlane.xlu0 %1953
    %v1955 = vsel %vm273, %v1947, 0.0
    %1956 = vadd.xlane.f32.xlu0 %v1955
    %v1957 = vpop.xlane.xlu0 %1956
    %v1958 = vsel %vm273, %v1948, 0.0
    %1959 = vadd.xlane.f32.xlu0 %v1958
    %v1960 = vpop.xlane.xlu0 %1959
    %v1961 = vsel %vm273, %v1949, 0.0
    %1962 = vadd.xlane.f32.xlu0 %v1961
    %v1963 = vpop.xlane.xlu0 %1962
    %v1964 = vmul.f32 %v1954, %v806
    %v1965 = vmul.f32 %v1957, %v806
    %v1966 = vmul.f32 %v1960, %v806
    %v1967 = vmul.f32 %v1963, %v806
    %v1968 = vsub.f32 %v1946, %v1964
    %v1969 = vsub.f32 %v1947, %v1965
    %v1970 = vsub.f32 %v1948, %v1966
    %v1971 = vsub.f32 %v1949, %v1967
    %v1972 = vmul.f32 %v1968, %v1968
    %v1973 = vmul.f32 %v1969, %v1969
    %v1974 = vmul.f32 %v1970, %v1970
    %v1975 = vmul.f32 %v1971, %v1971
    %v1976 = vsel %vm273, %v1972, 0.0
    %1977 = vadd.xlane.f32.xlu0 %v1976
    %v1978 = vpop.xlane.xlu0 %1977
    %v1979 = vsel %vm273, %v1973, 0.0
    %1980 = vadd.xlane.f32.xlu0 %v1979
    %v1981 = vpop.xlane.xlu0 %1980
    %v1982 = vsel %vm273, %v1974, 0.0
    %1983 = vadd.xlane.f32.xlu0 %v1982
    %v1984 = vpop.xlane.xlu0 %1983
    %v1985 = vsel %vm273, %v1975, 0.0
    %1986 = vadd.xlane.f32.xlu0 %v1985
    %v1987 = vpop.xlane.xlu0 %1986
    %v1988 = vmul.f32 %v1978, %v806
    %v1989 = vmul.f32 %v1981, %v806
    %v1990 = vmul.f32 %v1984, %v806
    %v1991 = vmul.f32 %v1987, %v806
    %v1992 = vadd.f32 %v1988, 1e-05
    %v1993 = vadd.f32 %v1989, 1e-05
    %v1994 = vadd.f32 %v1990, 1e-05
    %v1995 = vadd.f32 %v1991, 1e-05
    %v1996 = vrsqrt.pop %v1992
    %v1997 = vrsqrt.pop %v1993
    %v1998 = vrsqrt.pop %v1994
    %v1999 = vrsqrt.pop %v1995
    %v2000 = vmul.f32 %v1968, %v1996
    %v2001 = vmul.f32 %v1969, %v1997
    %v2002 = vmul.f32 %v1970, %v1998
    %v2003 = vmul.f32 %v1971, %v1999
    %v2005 = vlaneseq
    %v2006 = vshrl.u32 %v2005, 7
    %v2007 = vsub.s32 0, %v2006
    %v2008 = vrot.slane %v1950, %v2007
    %v2010 = vmul.f32 %v2000, %v2008
    %v2011 = vmul.f32 %v2001, %v2008
    %v2012 = vmul.f32 %v2002, %v2008
    %v2013 = vmul.f32 %v2003, %v2008
    %v2015 = vlaneseq
    %v2016 = vshrl.u32 %v2015, 7
    %v2017 = vsub.s32 0, %v2016
    %v2018 = vrot.slane %v1951, %v2017
    %v2020 = vadd.f32 %v2010, %v2018
    %v2021 = vadd.f32 %v2011, %v2018
    %v2022 = vadd.f32 %v2012, %v2018
    %v2023 = vadd.f32 %v2013, %v2018
    %v2024 = vpack.c.bf16 %v2021, %v2020
    %v2025 = vpack.c.bf16 %v2023, %v2022
    %v2026 = vld [vmem:[%s24] sm:$0x1]
    %v2028 = vlaneseq
    %v2029 = vshrl.u32 %v2028, 7
    %v2030 = vsub.s32 0, %v2029
    %v2031 = vrot.slane %v2026, %v2030
    %v2034 = vsel %vm273, %v2024, 0
    %v2037 = vsel %vm273, %v2025, 0
    %v2040 = vsel %vm273, %v130, 0
    %v2043 = vsel %vm273, %v131, 0
    %v2046 = vsel %vm273, %v132, 0
    %v2049 = vsel %vm273, %v133, 0
    %v2052 = vsel %vm273, %v134, 0
    %v2055 = vsel %vm273, %v135, 0
    %v2058 = vsel %vm273, %v136, 0
    %v2061 = vsel %vm273, %v137, 0
    %2063 = vmatprep.subr.bf16.mxu0 0
    %2064 = vmatpush1.bf16.xpose.msra.mxu0 %v2061
    %2065 = vmatprep.subr.bf16.mxu0 0
    %2066 = vmatpush1.bf16.xpose.msra.mxu0 %v2058
    %2067 = vmatprep.subr.bf16.mxu0 0
    %2068 = vmatpush1.bf16.xpose.msra.mxu0 %v2055
    %2069 = vmatprep.subr.bf16.mxu0 0
    %2070 = vmatpush1.bf16.xpose.msra.mxu0 %v2052
    %2071 = vmatprep.subr.bf16.mxu0 0
    %2072 = vmatpush1.bf16.xpose.msra.mxu0 %v2049
    %2073 = vmatprep.subr.bf16.mxu0 0
    %2074 = vmatpush1.bf16.xpose.msra.mxu0 %v2046
    %2075 = vmatprep.subr.bf16.mxu0 0
    %2076 = vmatpush1.bf16.xpose.msra.mxu0 %v2043
    %2077 = vmatprep.subr.bf16.mxu0 0
    %2078 = vmatpush1.bf16.xpose.msra.mxu0 %v2040
    %2079 = vmatprep.subr.bf16.mxu0 0
    %2080 = vmatpush2.bf16.xpose.msra.mxu0 0
    %2081 = vmatprep.subr.bf16.mxu0 0
    %2082 = vmatpush2.bf16.xpose.msra.mxu0 0
    %2083 = vmatprep.subr.bf16.mxu0 0
    %2084 = vmatpush2.bf16.xpose.msra.mxu0 0
    %2085 = vmatprep.subr.bf16.mxu0 0
    %2086 = vmatpush2.bf16.xpose.msra.mxu0 0
    %2087 = vmatprep.subr.bf16.mxu0 0
    %2088 = vmatpush2.bf16.xpose.msra.mxu0 0
    %2089 = vmatprep.subr.bf16.mxu0 0
    %2090 = vmatpush2.bf16.xpose.msra.mxu0 0
    %2091 = vmatprep.subr.bf16.mxu0 0
    %2092 = vmatpush2.bf16.xpose.msra.mxu0 0
    %2093 = vmatprep.subr.bf16.mxu0 0
    %2094 = vmatpush2.bf16.xpose.msra.mxu0 0
    %2095 = vmatprep.mubr.bf16.mxu0 0
    %2096 = vmatmul.mubr.bf16.gmra.mxu0 %v2034
    %v2097 = vpop.f32.mrf.mxu0
    %v2098 = vadd.f32 %v2031, %v2097
    %v2099 = vpop.f32.mrf.mxu0
    %v2100 = vpop.f32.mrf.mxu0
    %v2101 = vadd.f32 %v2031, %v2100
    %v2102 = vpop.f32.mrf.mxu0
    %2103 = vmatprep.mubr.bf16.mxu0 0
    %2104 = vmatmul.mubr.bf16.gmra.mxu0 %v2037
    %v2105 = vpop.f32.mrf.mxu0
    %v2106 = vadd.f32 %v2031, %v2105
    %v2107 = vpop.f32.mrf.mxu0
    %v2108 = vpop.f32.mrf.mxu0
    %v2109 = vadd.f32 %v2031, %v2108
    %v2110 = vpop.f32.mrf.mxu0
    %2111 = vdwg.mxu0
    %2112 = vst [vmem:[#allocation2] sm:$0xff] %v2098
    %2113 = vst [vmem:[#allocation2 + $0x8] sm:$0xff] %v2101
    %2114 = vst [vmem:[#allocation2 + $0x10] sm:$0xff] %v2106
    %2115 = vst [vmem:[#allocation2 + $0x18] sm:$0xff] %v2109
    // Predicated region
    $region102: #{fast_transformer_forward.1} parent=1 // pred_check
      _
    $region103: #{fast_transformer_forward.1} parent=1 // pred_check_branch
      %2117 = sbr.rel (0) target = $region105
    $region104: #{fast_transformer_forward.1} parent=1 // pred_region
      %s2119 = ssub.s32 512, 512
      %2120 = vsyncadd [#allocation3], %s2119
      %s2121 = sshll.u32 [#allocation2], 4
      %s2122 = int_to_ptr.vmem [resolvable:$true] %s2121
      %2127 = dma.vmem_to_hbm [thread:$0]  %s2122, 512, %s25, [#allocation3], 128, 128, 8
    $region105: #{fast_transformer_forward.1} parent=1 // pred_fallthru
      _
    // Predicated region
    $region106: #{fast_transformer_forward.1} parent=1 // pred_check
      _
    $region107: #{fast_transformer_forward.1} parent=1 // pred_check_branch
      %2129 = sbr.rel (0) target = $region109
    $region108: #{fast_transformer_forward.1} parent=1 // pred_region
      %2130 = dma.done [#allocation3], 512
    $region109: #{fast_transformer_forward.1} parent=1 // pred_fallthru
      _
    %2131 = vsyncpa [#allocation3], 1

</llo_original>
